<compile_context>
chip_gen: v5e
topology: v5e:2x2
jax: 0.10.0
libtpu: 0.0.40
codegen_flags: <defaults>
</compile_context>

<pallas_src>
import math

import jax
import jax.numpy as jnp
from jax.experimental import pallas as pl
from jax.experimental.pallas import tpu as pltpu

NEG_SLOPE = 0.01                  # F.leaky_relu default negative_slope
BN_EPS = 1e-3                     # BatchNorm2d(eps=0.001)
_SMALL_K = 16                     # below this contraction size, use the VPU not the MXU
_NEG_BIG = -1e30                  # bias for padded class lanes (softmax -> exactly 0)
_VMEM_LIMIT = 32 * 1024 * 1024    # explicit scoped-VMEM budget (safe on v5e/v6e/v7x)


def _leaky(z):
    return jnp.where(z >= 0, z, NEG_SLOPE * z)


def dense_wsi_kernel(x_ref, att_ref, w1_ref,
                     wc1_ref, wc2_ref, wc3_ref, wc4_ref, bias_ref,
                     out_ref):
    """One batch block: MILAtten (dl-on-sublanes / N-on-lanes) + BN-folded dense conv
    stack as 4 fused bf16 MXU matmuls + output softmax over a 128-lane padded class dim."""
    x = x_ref[...]                          # (TB, D, N) f32: D on sublanes, N on lanes
    tb, d, n = x.shape
    att = att_ref[...]                      # (dl, D+1): [:, :D] = V.T, [:, D] = W/sqrt(dl)
    dl = att.shape[0]

    # ---------------- MILAtten (use_self=False, eval) ----------------
    if d <= _SMALL_K:
        # tiny contraction dim (module default D=2) -> unrolled VPU multiply-adds
        h_pre = att[:, 0:1] * x[:, 0:1, :]                    # (dl,1)*(TB,1,N) -> (TB,dl,N)
        for k in range(1, d):
            h_pre = h_pre + att[:, k:k + 1] * x[:, k:k + 1, :]
    else:
        # rare large-D fallback (module default in_channels=2 never takes this path)
        h_pre = jnp.einsum("ld,bdn->bln", att[:, :d], x,
                           preferred_element_type=jnp.float32)
    h = jnp.tanh(h_pre)                                       # (TB, dl, N)   EUP

    wa = att[:, d:d + 1]                                      # (dl, 1), 1/sqrt(dl) folded
    dis = jnp.sum(h * wa, axis=1, keepdims=True)              # (TB, 1, N) sublane reduce

    m = jnp.max(dis, axis=2, keepdims=True)                   # softmax over N = lane reduce
    e = jnp.exp(dis - m)
    alpha = e * pl.reciprocal(jnp.sum(e, axis=2, keepdims=True), approx=True)
    vlad = jnp.sum(alpha * x, axis=2)                         # (TB, D)  lane reduce

    # ------------- dense 1x1-conv stack (eval; BN folded into fused weights) -------------
    w1 = w1_ref[...]                                          # (D, 128)
    if d <= _SMALL_K:
        z1 = vlad[:, 0:1] * w1[0:1, :]
        for k in range(1, d):
            z1 = z1 + vlad[:, k:k + 1] * w1[k:k + 1, :]
    else:
        z1 = jnp.dot(vlad, w1, preferred_element_type=jnp.float32)
    a1 = _leaky(z1)                                           # (TB, 128) pre-BN activation

    c_pad = wc4_ref.shape[1]                                  # padded class lanes (k*128)
    hch = wc2_ref.shape[0]                                    # hidden channels (64)
    wdt = wc1_ref.dtype                                       # bf16 MXU path
    bias = bias_ref[...]                                      # (1, c_pad + 3*hch) f32

    # One MXU matmul per activation; output segments are [logits | z_next ...] with the
    # logits segment first so value slices start lane-tile aligned.
    p1 = jnp.dot(a1.astype(wdt), wc1_ref[...],
                 preferred_element_type=jnp.float32) + bias   # (TB, c_pad + 3h)
    a2 = _leaky(p1[:, c_pad:c_pad + hch])
    p2 = jnp.dot(a2.astype(wdt), wc2_ref[...],
                 preferred_element_type=jnp.float32)          # (TB, c_pad + 2h)
    a3 = _leaky(p1[:, c_pad + hch:c_pad + 2 * hch] + p2[:, c_pad:c_pad + hch])
    p3 = jnp.dot(a3.astype(wdt), wc3_ref[...],
                 preferred_element_type=jnp.float32)          # (TB, c_pad + h)
    a4 = _leaky(p1[:, c_pad + 2 * hch:c_pad + 3 * hch]
                + p2[:, c_pad + hch:c_pad + 2 * hch]
                + p3[:, c_pad:c_pad + hch])
    p4 = jnp.dot(a4.astype(wdt), wc4_ref[...],
                 preferred_element_type=jnp.float32)          # (TB, c_pad)

    logits = p1[:, :c_pad] + p2[:, :c_pad] + p3[:, :c_pad] + p4   # padded lanes ~ -1e30

    lm = jnp.max(logits, axis=-1, keepdims=True)
    ez = jnp.exp(logits - lm)                                     # padded lanes -> 0
    out_ref[...] = ez * pl.reciprocal(jnp.sum(ez, axis=-1, keepdims=True), approx=True)


def prepare_params(params):
    """One-time (param-load time) weight prep, hoisted out of the per-call hot path:
      * attention slab (dl, D+1) = [V.T | W/sqrt(dl)]                      (f32, VPU path)
      * BN(eval) folded into consumer weights: c_i @ W == leaky(z_i) @ (s_i.T*W) + t_i@W
      * dense concats realised as per-LHS fused weights [wo_i | w_next...] (bf16, MXU path)
      * all constant shifts (t_i@W, out-conv bias, -1e30 pad-class bias) summed into one
        f32 bias row matching p1's segment layout."""
    v, wa = params["v"], params["wa"]                         # (D, dl), (dl, 1)
    D, dl = v.shape
    class_num = params["wo"].shape[1]
    c_pad = 128 * pl.cdiv(class_num, 128)

    att = jnp.concatenate([v.T, wa / math.sqrt(dl)], axis=1).astype(jnp.float32)  # (dl, D+1)

    w2, w3, w4, wo, bo = params["w2"], params["w3"], params["w4"], params["wo"], params["bo"]
    s1, t1 = params["s1"], params["t1"]
    s2, t2 = params["s2"], params["t2"]
    s3, t3 = params["s3"], params["t3"]
    s4, t4 = params["s4"], params["t4"]

    # split the dense-concat consumers along C_in; pad the output head to c_pad lanes
    w3a, w3b = w3[:128], w3[128:192]
    w4a, w4b, w4c = w4[:128], w4[128:192], w4[192:256]
    wo_p = jnp.zeros((320, c_pad), jnp.float32).at[:, :class_num].set(wo)
    wo1, wo2, wo3, wo4 = wo_p[:128], wo_p[128:192], wo_p[192:256], wo_p[256:320]

    # fused per-LHS weights (logits segment first), producer-BN scale folded into rows
    wc1 = (s1.T * jnp.concatenate([wo1, w2, w3a, w4a], axis=1)).astype(jnp.bfloat16)  # (128, c_pad+192)
    wc2 = (s2.T * jnp.concatenate([wo2, w3b, w4b], axis=1)).astype(jnp.bfloat16)      # (64,  c_pad+128)
    wc3 = (s3.T * jnp.concatenate([wo3, w4c], axis=1)).astype(jnp.bfloat16)           # (64,  c_pad+64)
    wc4 = (s4.T * wo4).astype(jnp.bfloat16)                                            # (64,  c_pad)

    bo_p = jnp.full((1, c_pad), _NEG_BIG, jnp.float32).at[:, :class_num].set(bo)
    bias_logit = bo_p + t1 @ wo1 + t2 @ wo2 + t3 @ wo3 + t4 @ wo4                      # (1, c_pad)
    bias_z2 = t1 @ w2
    bias_z3 = t1 @ w3a + t2 @ w3b
    bias_z4 = t1 @ w4a + t2 @ w4b + t3 @ w4c
    bias_all = jnp.concatenate([bias_logit, bias_z2, bias_z3, bias_z4], axis=1)        # (1, c_pad+192)

    return dict(att=att, w1=params["w1"].astype(jnp.float32),
                wc1=wc1, wc2=wc2, wc3=wc3, wc4=wc4, bias=bias_all.astype(jnp.float32),
                class_num=class_num, c_pad=c_pad, dl=dl)


def _choose_block_b(B, N, D, dl):
    """Rows per grid step: multiple of 8 sublanes, >=2 blocks once B >= 16 (so the single
    'parallel' axis shards across both v7x TensorCores), capped at 256, and shrunk if the
    per-block attention working set would crowd the scoped-VMEM budget."""
    blk = max(8, min(256, 8 * pl.cdiv(B, 16)))
    n_pad = 128 * pl.cdiv(N, 128)
    d_pad = 8 * pl.cdiv(max(D, 1), 8)
    per_row = 4 * n_pad * (2 * d_pad + 3 * dl + 2)   # x tile (2 buffers) + h_pre/h/alpha
    fit = max(8, ((_VMEM_LIMIT // 2) // per_row) // 8 * 8)
    return min(blk, fit)


def dense_wsi_net(x, aux, prepared):
    """x: (B, N, D) float32; aux unused (use_aux=False). Returns (B, class_num) softmax."""
    del aux
    B, N, D = x.shape
    class_num, c_pad, dl = prepared["class_num"], prepared["c_pad"], prepared["dl"]

    block_b = _choose_block_b(B, N, D, dl)
    n_blocks = pl.cdiv(B, block_b)
    b_pad = block_b * n_blocks

    # Layout fix: descriptors on lanes, channels on sublanes.
    x_t = jnp.transpose(x, (0, 2, 1))                         # (B, D, N)
    if b_pad != B:
        x_t = jnp.pad(x_t, ((0, b_pad - B), (0, 0), (0, 0)))

    weights = [prepared["att"], prepared["w1"], prepared["wc1"], prepared["wc2"],
               prepared["wc3"], prepared["wc4"], prepared["bias"]]

    def full_spec(a):
        # grid-invariant weight slab: constant index_map -> fetched once across the grid
        nd = a.ndim
        return pl.BlockSpec(a.shape, lambda i, _nd=nd: (0,) * _nd)

    in_specs = ([pl.BlockSpec((block_b, D, N), lambda i: (i, 0, 0))]
                + [full_spec(a) for a in weights])
    out_spec = pl.BlockSpec((block_b, c_pad), lambda i: (i, 0))

    out = pl.pallas_call(
        dense_wsi_kernel,
        out_shape=jax.ShapeDtypeStruct((b_pad, c_pad), jnp.float32),
        grid=(n_blocks,),
        in_specs=in_specs,
        out_specs=out_spec,
        compiler_params=pltpu.CompilerParams(
            dimension_semantics=("parallel",),
            vmem_limit_bytes=_VMEM_LIMIT),
    )(x_t, *weights)
    return out[:B, :class_num]                                # (B, class_num)


def init_params(key, in_channels=2, class_num=2, dl=64):
    ks = jax.random.split(key, 12)
    # MILAtten params (matches reset_params std's)
    std1 = 1.0 / math.sqrt(dl * in_channels)
    std2 = 1.0 / math.sqrt(dl)
    v = jax.random.uniform(ks[0], (in_channels, dl), jnp.float32, -std1, std1)
    wa = jax.random.uniform(ks[1], (dl, 1), jnp.float32, -std2, std2)

    def conv_w(k, cin, cout):                 # torch conv weight[:, :, 0, 0].T -> (C_in, C_out)
        bound = 1.0 / math.sqrt(cin)
        return jax.random.uniform(k, (cin, cout), jnp.float32, -bound, bound)

    w1 = conv_w(ks[2], in_channels, 128)
    w2 = conv_w(ks[3], 128, 64)
    w3 = conv_w(ks[4], 192, 64)
    w4 = conv_w(ks[5], 256, 64)
    wo = conv_w(ks[6], 320, class_num)
    bbound = 1.0 / math.sqrt(320)
    bo = jax.random.uniform(ks[7], (1, class_num), jnp.float32, -bbound, bbound)

    def bn(k, c):
        # PyTorch default init is an identity-ish BN (gamma=1, beta=0, mean=0, var=1);
        # randomize the running stats here so the test genuinely exercises the BN fold.
        kg, kb, km, kv2 = jax.random.split(k, 4)
        gamma = jax.random.uniform(kg, (1, c), jnp.float32, 0.5, 1.5)
        beta = 0.1 * jax.random.normal(kb, (1, c), jnp.float32)
        rm = 0.1 * jax.random.normal(km, (1, c), jnp.float32)
        rv = jax.random.uniform(kv2, (1, c), jnp.float32, 0.5, 1.5)
        scale = gamma / jnp.sqrt(rv + BN_EPS)
        shift = beta - rm * scale
        return scale, shift

    s1, t1 = bn(ks[8], 128)
    s2, t2 = bn(ks[9], 64)
    s3, t3 = bn(ks[10], 64)
    s4, t4 = bn(ks[11], 64)
    return dict(v=v, wa=wa, w1=w1, s1=s1, t1=t1, w2=w2, s2=s2, t2=t2,
                w3=w3, s3=s3, t3=t3, w4=w4, s4=s4, t4=t4, wo=wo, bo=bo)


def reference(x, params):
    """Pure-JAX f32 replica of the eval forward pass for correctness checking."""
    h = jnp.tanh(x @ params["v"])
    dis = (h @ params["wa"])[..., 0] / math.sqrt(params["wa"].shape[0])
    alpha = jax.nn.softmax(dis, axis=1)
    vlad = jnp.sum(alpha[..., None] * x, axis=1)

    def cb(z, s, t):
        return _leaky(z) * s + t

    c1 = cb(vlad @ params["w1"], params["s1"], params["t1"])
    c2 = cb(c1 @ params["w2"], params["s2"], params["t2"])
    c3 = cb(jnp.concatenate([c1, c2], -1) @ params["w3"], params["s3"], params["t3"])
    c4 = cb(jnp.concatenate([c1, c2, c3], -1) @ params["w4"], params["s4"], params["t4"])
    logits = jnp.concatenate([c1, c2, c3, c4], -1) @ params["wo"] + params["bo"]
    return jax.nn.softmax(logits, axis=-1)


if __name__ == "__main__":
    key = jax.random.PRNGKey(0)
    kx1, kx2, kp = jax.random.split(key, 3)

    D, class_num = 2, 2                       # module defaults: in_channels=2, class_num=2
    params = init_params(kp, in_channels=D, class_num=class_num, dl=64)
    prepared = prepare_params(params)         # one-time weight prep (not in the hot path)

    # Second case exercises batch padding plus a 2-block grid (v7x megacore sharding).
    for kx, (B, N) in [(kx1, (8, 8)), (kx2, (18, 16))]:
        x = jax.random.normal(kx, (B, N, D), dtype=jnp.float32)
        aux = jnp.zeros((B, 1, 1, 1), jnp.float32)            # unused (use_aux=False)
        out = jax.block_until_ready(dense_wsi_net(x, aux, prepared))
        ref = reference(x, params)
        assert out.shape == (B, class_num), out.shape
        # bf16 MXU weights + approx reciprocals -> compare at 2e-2
        if not jnp.allclose(out, ref, atol=2e-2, rtol=2e-2):
            raise AssertionError(f"mismatch at B={B}, N={N}:\n{out}\nvs\n{ref}")
    print("KERNEL_OK")
</pallas_src>

<mosaic_0001>
module attributes {stable_mosaic.version = 11 : i64} {
  func.func @dense_wsi_kernel(%arg0: i32, %arg1: memref<8x2x8xf32, #tpu.memory_space<vmem>>, %arg2: memref<64x3xf32, #tpu.memory_space<vmem>>, %arg3: memref<2x128xf32, #tpu.memory_space<vmem>>, %arg4: memref<128x320xbf16, #tpu.memory_space<vmem>>, %arg5: memref<64x256xbf16, #tpu.memory_space<vmem>>, %arg6: memref<64x192xbf16, #tpu.memory_space<vmem>>, %arg7: memref<64x128xbf16, #tpu.memory_space<vmem>>, %arg8: memref<1x320xf32, #tpu.memory_space<vmem>>, %arg9: memref<8x128xf32, #tpu.memory_space<vmem>>) attributes {dimension_semantics = [#tpu.dimension_semantics<parallel>], iteration_bounds = array<i64: 1>, scalar_prefetch = 0 : i64, scratch_operands = 0 : i64, tpu.core_type = #tpu.core_type<tc>, window_params = [{transform_indices = @transform_0, window_bounds = array<i64: 8, 2, 8>}, {pipeline_mode = #tpu.pipeline_mode<synchronous>, transform_indices = @transform_1, window_bounds = array<i64: 64, 3>}, {pipeline_mode = #tpu.pipeline_mode<synchronous>, transform_indices = @transform_2, window_bounds = array<i64: 2, 128>}, {pipeline_mode = #tpu.pipeline_mode<synchronous>, transform_indices = @transform_3, window_bounds = array<i64: 128, 320>}, {pipeline_mode = #tpu.pipeline_mode<synchronous>, transform_indices = @transform_4, window_bounds = array<i64: 64, 256>}, {pipeline_mode = #tpu.pipeline_mode<synchronous>, transform_indices = @transform_5, window_bounds = array<i64: 64, 192>}, {pipeline_mode = #tpu.pipeline_mode<synchronous>, transform_indices = @transform_6, window_bounds = array<i64: 64, 128>}, {pipeline_mode = #tpu.pipeline_mode<synchronous>, transform_indices = @transform_7, window_bounds = array<i64: 1, 320>}, {transform_indices = @transform_8, window_bounds = array<i64: 8, 128>}]} {
    %c0 = arith.constant 0 : index
    %c0_0 = arith.constant 0 : index
    %c0_1 = arith.constant 0 : index
    %0 = vector.load %arg1[%c0, %c0_0, %c0_1] : memref<8x2x8xf32, #tpu.memory_space<vmem>>, vector<8x2x8xf32>
    %c0_2 = arith.constant 0 : index
    %c0_3 = arith.constant 0 : index
    %1 = vector.load %arg2[%c0_2, %c0_3] : memref<64x3xf32, #tpu.memory_space<vmem>>, vector<64x3xf32>
    %2 = vector.extract_strided_slice %1 {offsets = [0, 0], sizes = [64, 1], strides = [1, 1]} : vector<64x3xf32> to vector<64x1xf32>
    %3 = vector.extract_strided_slice %0 {offsets = [0, 0, 0], sizes = [8, 1, 8], strides = [1, 1, 1]} : vector<8x2x8xf32> to vector<8x1x8xf32>
    %4 = vector.shape_cast %2 : vector<64x1xf32> to vector<1x64x1xf32>
    %5 = vector.broadcast %4 : vector<1x64x1xf32> to vector<8x64x8xf32>
    %6 = vector.broadcast %3 : vector<8x1x8xf32> to vector<8x64x8xf32>
    %7 = arith.mulf %5, %6 : vector<8x64x8xf32>
    %8 = vector.extract_strided_slice %1 {offsets = [0, 1], sizes = [64, 1], strides = [1, 1]} : vector<64x3xf32> to vector<64x1xf32>
    %9 = vector.extract_strided_slice %0 {offsets = [0, 1, 0], sizes = [8, 1, 8], strides = [1, 1, 1]} : vector<8x2x8xf32> to vector<8x1x8xf32>
    %10 = vector.shape_cast %8 : vector<64x1xf32> to vector<1x64x1xf32>
    %11 = vector.broadcast %10 : vector<1x64x1xf32> to vector<8x64x8xf32>
    %12 = vector.broadcast %9 : vector<8x1x8xf32> to vector<8x64x8xf32>
    %13 = arith.mulf %11, %12 : vector<8x64x8xf32>
    %14 = arith.addf %7, %13 : vector<8x64x8xf32>
    %15 = math.tanh %14 : vector<8x64x8xf32>
    %16 = vector.extract_strided_slice %1 {offsets = [0, 2], sizes = [64, 1], strides = [1, 1]} : vector<64x3xf32> to vector<64x1xf32>
    %17 = vector.shape_cast %16 : vector<64x1xf32> to vector<1x64x1xf32>
    %18 = vector.broadcast %17 : vector<1x64x1xf32> to vector<8x64x8xf32>
    %19 = arith.mulf %15, %18 : vector<8x64x8xf32>
    %cst = arith.constant dense<0.000000e+00> : vector<8x8xf32>
    %20 = vector.multi_reduction <add>, %19, %cst [1] : vector<8x64x8xf32> to vector<8x8xf32>
    %21 = vector.shape_cast %20 : vector<8x8xf32> to vector<8x1x8xf32>
    %cst_4 = arith.constant dense<0xFF800000> : vector<8x1xf32>
    %22 = vector.multi_reduction <maximumf>, %21, %cst_4 [2] : vector<8x1x8xf32> to vector<8x1xf32>
    %23 = vector.shape_cast %22 : vector<8x1xf32> to vector<8x1x1xf32>
    %24 = vector.broadcast %23 : vector<8x1x1xf32> to vector<8x1x8xf32>
    %25 = arith.subf %21, %24 : vector<8x1x8xf32>
    %26 = math.exp %25 : vector<8x1x8xf32>
    %cst_5 = arith.constant dense<0.000000e+00> : vector<8x1xf32>
    %27 = vector.multi_reduction <add>, %26, %cst_5 [2] : vector<8x1x8xf32> to vector<8x1xf32>
    %28 = vector.shape_cast %27 : vector<8x1xf32> to vector<8x1x1xf32>
    %29 = tpu.reciprocal %28 {approx = true} : vector<8x1x1xf32> -> vector<8x1x1xf32>
    %30 = vector.broadcast %29 : vector<8x1x1xf32> to vector<8x1x8xf32>
    %31 = arith.mulf %26, %30 : vector<8x1x8xf32>
    %32 = vector.broadcast %31 : vector<8x1x8xf32> to vector<8x2x8xf32>
    %33 = arith.mulf %32, %0 : vector<8x2x8xf32>
    %cst_6 = arith.constant dense<0.000000e+00> : vector<8x2xf32>
    %34 = vector.multi_reduction <add>, %33, %cst_6 [2] : vector<8x2x8xf32> to vector<8x2xf32>
    %c0_7 = arith.constant 0 : index
    %c0_8 = arith.constant 0 : index
    %35 = vector.load %arg3[%c0_7, %c0_8] : memref<2x128xf32, #tpu.memory_space<vmem>>, vector<2x128xf32>
    %36 = vector.extract_strided_slice %34 {offsets = [0, 0], sizes = [8, 1], strides = [1, 1]} : vector<8x2xf32> to vector<8x1xf32>
    %37 = vector.extract_strided_slice %35 {offsets = [0, 0], sizes = [1, 128], strides = [1, 1]} : vector<2x128xf32> to vector<1x128xf32>
    %38 = vector.broadcast %36 : vector<8x1xf32> to vector<8x128xf32>
    %39 = vector.broadcast %37 : vector<1x128xf32> to vector<8x128xf32>
    %40 = arith.mulf %38, %39 : vector<8x128xf32>
    %41 = vector.extract_strided_slice %34 {offsets = [0, 1], sizes = [8, 1], strides = [1, 1]} : vector<8x2xf32> to vector<8x1xf32>
    %42 = vector.extract_strided_slice %35 {offsets = [1, 0], sizes = [1, 128], strides = [1, 1]} : vector<2x128xf32> to vector<1x128xf32>
    %43 = vector.broadcast %41 : vector<8x1xf32> to vector<8x128xf32>
    %44 = vector.broadcast %42 : vector<1x128xf32> to vector<8x128xf32>
    %45 = arith.mulf %43, %44 : vector<8x128xf32>
    %46 = arith.addf %40, %45 : vector<8x128xf32>
    %cst_9 = arith.constant 0.000000e+00 : f32
    %47 = vector.broadcast %cst_9 : f32 to vector<8x128xf32>
    %48 = arith.cmpf oge, %46, %47 : vector<8x128xf32>
    %cst_10 = arith.constant 0.00999999977 : f32
    %49 = vector.broadcast %cst_10 : f32 to vector<8x128xf32>
    %50 = arith.mulf %49, %46 : vector<8x128xf32>
    %51 = arith.select %48, %46, %50 : vector<8x128xi1>, vector<8x128xf32>
    %c0_11 = arith.constant 0 : index
    %c0_12 = arith.constant 0 : index
    %52 = vector.load %arg8[%c0_11, %c0_12] : memref<1x320xf32, #tpu.memory_space<vmem>>, vector<1x320xf32>
    %53 = arith.truncf %51 : vector<8x128xf32> to vector<8x128xbf16>
    %c0_13 = arith.constant 0 : index
    %c0_14 = arith.constant 0 : index
    %54 = vector.load %arg4[%c0_13, %c0_14] : memref<128x320xbf16, #tpu.memory_space<vmem>>, vector<128x320xbf16>
    %cst_15 = arith.constant dense<0.000000e+00> : vector<8x320xf32>
    %55 = tpu.matmul %53, %54, %cst_15 {dimension_numbers = #tpu.dot_dimension_numbers<[1], [0], [0], [1], [0, 0, 1, 1], [], []>} : vector<8x128xbf16>, vector<128x320xbf16>, vector<8x320xf32> -> vector<8x320xf32>
    %56 = vector.broadcast %52 : vector<1x320xf32> to vector<8x320xf32>
    %57 = arith.addf %55, %56 : vector<8x320xf32>
    %58 = vector.extract_strided_slice %57 {offsets = [0, 128], sizes = [8, 64], strides = [1, 1]} : vector<8x320xf32> to vector<8x64xf32>
    %cst_16 = arith.constant 0.000000e+00 : f32
    %59 = vector.broadcast %cst_16 : f32 to vector<8x64xf32>
    %60 = arith.cmpf oge, %58, %59 : vector<8x64xf32>
    %cst_17 = arith.constant 0.00999999977 : f32
    %61 = vector.broadcast %cst_17 : f32 to vector<8x64xf32>
    %62 = arith.mulf %61, %58 : vector<8x64xf32>
    %63 = arith.select %60, %58, %62 : vector<8x64xi1>, vector<8x64xf32>
    %64 = arith.truncf %63 : vector<8x64xf32> to vector<8x64xbf16>
    %c0_18 = arith.constant 0 : index
    %c0_19 = arith.constant 0 : index
    %65 = vector.load %arg5[%c0_18, %c0_19] : memref<64x256xbf16, #tpu.memory_space<vmem>>, vector<64x256xbf16>
    %cst_20 = arith.constant dense<0.000000e+00> : vector<8x256xf32>
    %66 = tpu.matmul %64, %65, %cst_20 {dimension_numbers = #tpu.dot_dimension_numbers<[1], [0], [0], [1], [0, 0, 1, 1], [], []>} : vector<8x64xbf16>, vector<64x256xbf16>, vector<8x256xf32> -> vector<8x256xf32>
    %67 = vector.extract_strided_slice %57 {offsets = [0, 192], sizes = [8, 64], strides = [1, 1]} : vector<8x320xf32> to vector<8x64xf32>
    %68 = vector.extract_strided_slice %66 {offsets = [0, 128], sizes = [8, 64], strides = [1, 1]} : vector<8x256xf32> to vector<8x64xf32>
    %69 = arith.addf %67, %68 : vector<8x64xf32>
    %cst_21 = arith.constant 0.000000e+00 : f32
    %70 = vector.broadcast %cst_21 : f32 to vector<8x64xf32>
    %71 = arith.cmpf oge, %69, %70 : vector<8x64xf32>
    %cst_22 = arith.constant 0.00999999977 : f32
    %72 = vector.broadcast %cst_22 : f32 to vector<8x64xf32>
    %73 = arith.mulf %72, %69 : vector<8x64xf32>
    %74 = arith.select %71, %69, %73 : vector<8x64xi1>, vector<8x64xf32>
    %75 = arith.truncf %74 : vector<8x64xf32> to vector<8x64xbf16>
    %c0_23 = arith.constant 0 : index
    %c0_24 = arith.constant 0 : index
    %76 = vector.load %arg6[%c0_23, %c0_24] : memref<64x192xbf16, #tpu.memory_space<vmem>>, vector<64x192xbf16>
    %cst_25 = arith.constant dense<0.000000e+00> : vector<8x192xf32>
    %77 = tpu.matmul %75, %76, %cst_25 {dimension_numbers = #tpu.dot_dimension_numbers<[1], [0], [0], [1], [0, 0, 1, 1], [], []>} : vector<8x64xbf16>, vector<64x192xbf16>, vector<8x192xf32> -> vector<8x192xf32>
    %78 = vector.extract_strided_slice %57 {offsets = [0, 256], sizes = [8, 64], strides = [1, 1]} : vector<8x320xf32> to vector<8x64xf32>
    %79 = vector.extract_strided_slice %66 {offsets = [0, 192], sizes = [8, 64], strides = [1, 1]} : vector<8x256xf32> to vector<8x64xf32>
    %80 = arith.addf %78, %79 : vector<8x64xf32>
    %81 = vector.extract_strided_slice %77 {offsets = [0, 128], sizes = [8, 64], strides = [1, 1]} : vector<8x192xf32> to vector<8x64xf32>
    %82 = arith.addf %80, %81 : vector<8x64xf32>
    %cst_26 = arith.constant 0.000000e+00 : f32
    %83 = vector.broadcast %cst_26 : f32 to vector<8x64xf32>
    %84 = arith.cmpf oge, %82, %83 : vector<8x64xf32>
    %cst_27 = arith.constant 0.00999999977 : f32
    %85 = vector.broadcast %cst_27 : f32 to vector<8x64xf32>
    %86 = arith.mulf %85, %82 : vector<8x64xf32>
    %87 = arith.select %84, %82, %86 : vector<8x64xi1>, vector<8x64xf32>
    %88 = arith.truncf %87 : vector<8x64xf32> to vector<8x64xbf16>
    %c0_28 = arith.constant 0 : index
    %c0_29 = arith.constant 0 : index
    %89 = vector.load %arg7[%c0_28, %c0_29] : memref<64x128xbf16, #tpu.memory_space<vmem>>, vector<64x128xbf16>
    %cst_30 = arith.constant dense<0.000000e+00> : vector<8x128xf32>
    %90 = tpu.matmul %88, %89, %cst_30 {dimension_numbers = #tpu.dot_dimension_numbers<[1], [0], [0], [1], [0, 0, 1, 1], [], []>} : vector<8x64xbf16>, vector<64x128xbf16>, vector<8x128xf32> -> vector<8x128xf32>
    %91 = vector.extract_strided_slice %57 {offsets = [0, 0], sizes = [8, 128], strides = [1, 1]} : vector<8x320xf32> to vector<8x128xf32>
    %92 = vector.extract_strided_slice %66 {offsets = [0, 0], sizes = [8, 128], strides = [1, 1]} : vector<8x256xf32> to vector<8x128xf32>
    %93 = arith.addf %91, %92 : vector<8x128xf32>
    %94 = vector.extract_strided_slice %77 {offsets = [0, 0], sizes = [8, 128], strides = [1, 1]} : vector<8x192xf32> to vector<8x128xf32>
    %95 = arith.addf %93, %94 : vector<8x128xf32>
    %96 = arith.addf %95, %90 : vector<8x128xf32>
    %cst_31 = arith.constant dense<0xFF800000> : vector<8xf32>
    %97 = vector.multi_reduction <maximumf>, %96, %cst_31 [1] : vector<8x128xf32> to vector<8xf32>
    %98 = vector.shape_cast %97 : vector<8xf32> to vector<8x1xf32>
    %99 = vector.broadcast %98 : vector<8x1xf32> to vector<8x128xf32>
    %100 = arith.subf %96, %99 : vector<8x128xf32>
    %101 = math.exp %100 : vector<8x128xf32>
    %cst_32 = arith.constant dense<0.000000e+00> : vector<8xf32>
    %102 = vector.multi_reduction <add>, %101, %cst_32 [1] : vector<8x128xf32> to vector<8xf32>
    %103 = vector.shape_cast %102 : vector<8xf32> to vector<8x1xf32>
    %104 = tpu.reciprocal %103 {approx = true} : vector<8x1xf32> -> vector<8x1xf32>
    %105 = vector.broadcast %104 : vector<8x1xf32> to vector<8x128xf32>
    %106 = arith.mulf %101, %105 : vector<8x128xf32>
    %c0_33 = arith.constant 0 : index
    %c0_34 = arith.constant 0 : index
    %107 = vector.load %arg9[%c0_33, %c0_34] : memref<8x128xf32, #tpu.memory_space<vmem>>, vector<8x128xf32>
    tpu.vector_store %arg9[%c0_33, %c0_34], %106 {strides = array<i32>} : memref<8x128xf32, #tpu.memory_space<vmem>>, vector<8x128xf32>,
    return
  }
  func.func @transform_0(%arg0: i32) -> (i32, i32, i32) {
    %c0_i32 = arith.constant 0 : i32
    %c0_i32_0 = arith.constant 0 : i32
    %c0_i32_1 = arith.constant 0 : i32
    return %arg0, %c0_i32, %c0_i32_0 : i32, i32, i32
  }
  func.func @transform_1(%arg0: i32) -> (i32, i32) {
    %c0_i32 = arith.constant 0 : i32
    %c0_i32_0 = arith.constant 0 : i32
    %c0_i32_1 = arith.constant 0 : i32
    return %c0_i32, %c0_i32_0 : i32, i32
  }
  func.func @transform_2(%arg0: i32) -> (i32, i32) {
    %c0_i32 = arith.constant 0 : i32
    %c0_i32_0 = arith.constant 0 : i32
    %c0_i32_1 = arith.constant 0 : i32
    return %c0_i32, %c0_i32_0 : i32, i32
  }
  func.func @transform_3(%arg0: i32) -> (i32, i32) {
    %c0_i32 = arith.constant 0 : i32
    %c0_i32_0 = arith.constant 0 : i32
    %c0_i32_1 = arith.constant 0 : i32
    return %c0_i32, %c0_i32_0 : i32, i32
  }
  func.func @transform_4(%arg0: i32) -> (i32, i32) {
    %c0_i32 = arith.constant 0 : i32
    %c0_i32_0 = arith.constant 0 : i32
    %c0_i32_1 = arith.constant 0 : i32
    return %c0_i32, %c0_i32_0 : i32, i32
  }
  func.func @transform_5(%arg0: i32) -> (i32, i32) {
    %c0_i32 = arith.constant 0 : i32
    %c0_i32_0 = arith.constant 0 : i32
    %c0_i32_1 = arith.constant 0 : i32
    return %c0_i32, %c0_i32_0 : i32, i32
  }
  func.func @transform_6(%arg0: i32) -> (i32, i32) {
    %c0_i32 = arith.constant 0 : i32
    %c0_i32_0 = arith.constant 0 : i32
    %c0_i32_1 = arith.constant 0 : i32
    return %c0_i32, %c0_i32_0 : i32, i32
  }
  func.func @transform_7(%arg0: i32) -> (i32, i32) {
    %c0_i32 = arith.constant 0 : i32
    %c0_i32_0 = arith.constant 0 : i32
    %c0_i32_1 = arith.constant 0 : i32
    return %c0_i32, %c0_i32_0 : i32, i32
  }
  func.func @transform_8(%arg0: i32) -> (i32, i32) {
    %c0_i32 = arith.constant 0 : i32
    %c0_i32_0 = arith.constant 0 : i32
    return %arg0, %c0_i32 : i32, i32
  }
}

</mosaic_0001>

<llo_original>
// kernel: tpu_custom_call.1
$region0: #{tpu_custom_call.1}
  #allocation0 [shape = 'u32[]', space=smem, size = 0x4, offset = 0x4, fixed_abs, tag = 'smem constant byte address 0x4 - core index']
  #allocation1 [shape = 'u32[72,128]{1,0:T(1,128)}', space=vmem, size = 0x9000, scoped, tag = 'internal scratch']
  %s0 = inlined_call_operand.vmem [shape: f32[8,2,8], index: 0, kind: input, shape index: {}]
  %s1 = inlined_call_operand.vmem [shape: f32[64,3], index: 1, kind: input, shape index: {}]
  %s2 = inlined_call_operand.vmem [shape: f32[2,128], index: 2, kind: input, shape index: {}]
  %s3 = inlined_call_operand.vmem [shape: bf16[128,320], index: 3, kind: input, shape index: {}]
  %s4 = inlined_call_operand.vmem [shape: bf16[64,256], index: 4, kind: input, shape index: {}]
  %s5 = inlined_call_operand.vmem [shape: bf16[64,192], index: 5, kind: input, shape index: {}]
  %s6 = inlined_call_operand.vmem [shape: bf16[64,128], index: 6, kind: input, shape index: {}]
  %s7 = inlined_call_operand.vmem [shape: f32[1,320], index: 7, kind: input, shape index: {}]
  %s8 = inlined_call_operand.hbm [shape: f32[8,128], index: 8, kind: output, shape index: {}]
  %s9 = sld [smem:[#allocation0]]
  $region42: #{tpu_custom_call.1} parent=0
    _
  %s11 = ssub.s32 1, %s9
  %s12 = scalar_select 0, %s11, %s9
  $region1: #{tpu_custom_call.1} parent=0
    #allocation2 [shape = 'u8[4096]{0}', space=vmem, size = 0x1000, scoped, tag = 'output window, operand 0, single buffered']
    #allocation3 [shape = 's32[1]{0}', space=sflag, size = 0x4, scoped, tag = 'scoped memory for tpu_custom_call.1']
    %13 = vsyncpa [#allocation3], 0
    // Predicated region
    $region2: #{tpu_custom_call.1} parent=1 // pred_check
      _
    $region3: #{tpu_custom_call.1} parent=1 // pred_check_branch
      %15 = sbr.rel (0) target = $region5
    $region4: #{tpu_custom_call.1} parent=1 // pred_region
      _
    $region5: #{tpu_custom_call.1} parent=1 // pred_fallthru
      _
    // Predicated region
    $region6: #{tpu_custom_call.1} parent=1 // pred_check
      _
    $region7: #{tpu_custom_call.1} parent=1 // pred_check_branch
      %17 = sbr.rel (0) target = $region9
    $region8: #{tpu_custom_call.1} parent=1 // pred_region
      _
    $region9: #{tpu_custom_call.1} parent=1 // pred_fallthru
      _
    // Predicated region
    $region10: #{tpu_custom_call.1} parent=1 // pred_check
      _
    $region11: #{tpu_custom_call.1} parent=1 // pred_check_branch
      %19 = sbr.rel (0) target = $region13
    $region12: #{tpu_custom_call.1} parent=1 // pred_region
      _
    $region13: #{tpu_custom_call.1} parent=1 // pred_fallthru
      _
    // Predicated region
    $region14: #{tpu_custom_call.1} parent=1 // pred_check
      _
    $region15: #{tpu_custom_call.1} parent=1 // pred_check_branch
      %21 = sbr.rel (0) target = $region17
    $region16: #{tpu_custom_call.1} parent=1 // pred_region
      _
    $region17: #{tpu_custom_call.1} parent=1 // pred_fallthru
      _
    // Predicated region
    $region18: #{tpu_custom_call.1} parent=1 // pred_check
      _
    $region19: #{tpu_custom_call.1} parent=1 // pred_check_branch
      %23 = sbr.rel (0) target = $region21
    $region20: #{tpu_custom_call.1} parent=1 // pred_region
      _
    $region21: #{tpu_custom_call.1} parent=1 // pred_fallthru
      _
    // Predicated region
    $region22: #{tpu_custom_call.1} parent=1 // pred_check
      _
    $region23: #{tpu_custom_call.1} parent=1 // pred_check_branch
      %25 = sbr.rel (0) target = $region25
    $region24: #{tpu_custom_call.1} parent=1 // pred_region
      _
    $region25: #{tpu_custom_call.1} parent=1 // pred_fallthru
      _
    // Predicated region
    $region26: #{tpu_custom_call.1} parent=1 // pred_check
      _
    $region27: #{tpu_custom_call.1} parent=1 // pred_check_branch
      %27 = sbr.rel (0) target = $region29
    $region28: #{tpu_custom_call.1} parent=1 // pred_region
      _
    $region29: #{tpu_custom_call.1} parent=1 // pred_fallthru
      _
    // Predicated region
    $region30: #{tpu_custom_call.1} parent=1 // pred_check
      _
    $region31: #{tpu_custom_call.1} parent=1 // pred_check_branch
      %29 = sbr.rel (0) target = $region33
    $region32: #{tpu_custom_call.1} parent=1 // pred_region
      _
    $region33: #{tpu_custom_call.1} parent=1 // pred_fallthru
      _
    %v31 = vld [vmem:[%s0] sm:$0x3]
    %v32 = vld [vmem:[%s0 + $0x2] sm:$0x3]
    %v33 = vld [vmem:[%s0 + $0x4] sm:$0x3]
    %v34 = vld [vmem:[%s0 + $0x6] sm:$0x3]
    %v35 = vld [vmem:[%s0 + $0x8] sm:$0x3]
    %v36 = vld [vmem:[%s0 + $0xa] sm:$0x3]
    %v37 = vld [vmem:[%s0 + $0xc] sm:$0x3]
    %v38 = vld [vmem:[%s0 + $0xe] sm:$0x3]
    %v39 = vld [vmem:[%s1] sm:$0xff]
    %v40 = vld [vmem:[%s1 + $0x8] sm:$0xff]
    %v41 = vld [vmem:[%s1 + $0x10] sm:$0xff]
    %v42 = vld [vmem:[%s1 + $0x18] sm:$0xff]
    %v43 = vld [vmem:[%s1 + $0x20] sm:$0xff]
    %v44 = vld [vmem:[%s1 + $0x28] sm:$0xff]
    %v45 = vld [vmem:[%s1 + $0x30] sm:$0xff]
    %v46 = vld [vmem:[%s1 + $0x38] sm:$0xff]
    %48 = vset.pattern.permute.xlu0 0
    %49 = vperm.xlu0 %48, %v39
    %v50 = vpop.permute.xlu0 %49
    %53 = vset.pattern.permute.xlu0 0
    %54 = vperm.xlu0 %53, %v40
    %v55 = vpop.permute.xlu0 %54
    %58 = vset.pattern.permute.xlu0 0
    %59 = vperm.xlu0 %58, %v41
    %v60 = vpop.permute.xlu0 %59
    %63 = vset.pattern.permute.xlu0 0
    %64 = vperm.xlu0 %63, %v42
    %v65 = vpop.permute.xlu0 %64
    %68 = vset.pattern.permute.xlu0 0
    %69 = vperm.xlu0 %68, %v43
    %v70 = vpop.permute.xlu0 %69
    %73 = vset.pattern.permute.xlu0 0
    %74 = vperm.xlu0 %73, %v44
    %v75 = vpop.permute.xlu0 %74
    %78 = vset.pattern.permute.xlu0 0
    %79 = vperm.xlu0 %78, %v45
    %v80 = vpop.permute.xlu0 %79
    %83 = vset.pattern.permute.xlu0 0
    %84 = vperm.xlu0 %83, %v46
    %v85 = vpop.permute.xlu0 %84
    %v87 = vperm.slane %v31, 0
    %v88 = vperm.slane %v32, 0
    %v89 = vperm.slane %v33, 0
    %v90 = vperm.slane %v34, 0
    %v91 = vperm.slane %v35, 0
    %v92 = vperm.slane %v36, 0
    %v93 = vperm.slane %v37, 0
    %v94 = vperm.slane %v38, 0
    %v95 = vmul.f32 %v50, %v87
    %v96 = vmul.f32 %v55, %v87
    %v97 = vmul.f32 %v60, %v87
    %v98 = vmul.f32 %v65, %v87
    %v99 = vmul.f32 %v70, %v87
    %v100 = vmul.f32 %v75, %v87
    %v101 = vmul.f32 %v80, %v87
    %v102 = vmul.f32 %v85, %v87
    %v103 = vmul.f32 %v50, %v88
    %v104 = vmul.f32 %v55, %v88
    %v105 = vmul.f32 %v60, %v88
    %v106 = vmul.f32 %v65, %v88
    %v107 = vmul.f32 %v70, %v88
    %v108 = vmul.f32 %v75, %v88
    %v109 = vmul.f32 %v80, %v88
    %v110 = vmul.f32 %v85, %v88
    %v111 = vmul.f32 %v50, %v89
    %v112 = vmul.f32 %v55, %v89
    %v113 = vmul.f32 %v60, %v89
    %v114 = vmul.f32 %v65, %v89
    %v115 = vmul.f32 %v70, %v89
    %v116 = vmul.f32 %v75, %v89
    %v117 = vmul.f32 %v80, %v89
    %v118 = vmul.f32 %v85, %v89
    %v119 = vmul.f32 %v50, %v90
    %v120 = vmul.f32 %v55, %v90
    %v121 = vmul.f32 %v60, %v90
    %v122 = vmul.f32 %v65, %v90
    %v123 = vmul.f32 %v70, %v90
    %v124 = vmul.f32 %v75, %v90
    %v125 = vmul.f32 %v80, %v90
    %v126 = vmul.f32 %v85, %v90
    %v127 = vmul.f32 %v50, %v91
    %v128 = vmul.f32 %v55, %v91
    %v129 = vmul.f32 %v60, %v91
    %v130 = vmul.f32 %v65, %v91
    %v131 = vmul.f32 %v70, %v91
    %v132 = vmul.f32 %v75, %v91
    %v133 = vmul.f32 %v80, %v91
    %v134 = vmul.f32 %v85, %v91
    %v135 = vmul.f32 %v50, %v92
    %v136 = vmul.f32 %v55, %v92
    %v137 = vmul.f32 %v60, %v92
    %v138 = vmul.f32 %v65, %v92
    %v139 = vmul.f32 %v70, %v92
    %v140 = vmul.f32 %v75, %v92
    %v141 = vmul.f32 %v80, %v92
    %v142 = vmul.f32 %v85, %v92
    %v143 = vmul.f32 %v50, %v93
    %v144 = vmul.f32 %v55, %v93
    %v145 = vmul.f32 %v60, %v93
    %v146 = vmul.f32 %v65, %v93
    %v147 = vmul.f32 %v70, %v93
    %v148 = vmul.f32 %v75, %v93
    %v149 = vmul.f32 %v80, %v93
    %v150 = vmul.f32 %v85, %v93
    %v151 = vmul.f32 %v50, %v94
    %v152 = vmul.f32 %v55, %v94
    %v153 = vmul.f32 %v60, %v94
    %v154 = vmul.f32 %v65, %v94
    %v155 = vmul.f32 %v70, %v94
    %v156 = vmul.f32 %v75, %v94
    %v157 = vmul.f32 %v80, %v94
    %v158 = vmul.f32 %v85, %v94
    %159 = vset.pattern.permute.xlu0 1
    %160 = vperm.xlu0 %159, %v39
    %v161 = vpop.permute.xlu0 %160
    %163 = vset.pattern.permute.xlu0 1
    %164 = vperm.xlu0 %163, %v40
    %v165 = vpop.permute.xlu0 %164
    %167 = vset.pattern.permute.xlu0 1
    %168 = vperm.xlu0 %167, %v41
    %v169 = vpop.permute.xlu0 %168
    %171 = vset.pattern.permute.xlu0 1
    %172 = vperm.xlu0 %171, %v42
    %v173 = vpop.permute.xlu0 %172
    %175 = vset.pattern.permute.xlu0 1
    %176 = vperm.xlu0 %175, %v43
    %v177 = vpop.permute.xlu0 %176
    %179 = vset.pattern.permute.xlu0 1
    %180 = vperm.xlu0 %179, %v44
    %v181 = vpop.permute.xlu0 %180
    %183 = vset.pattern.permute.xlu0 1
    %184 = vperm.xlu0 %183, %v45
    %v185 = vpop.permute.xlu0 %184
    %187 = vset.pattern.permute.xlu0 1
    %188 = vperm.xlu0 %187, %v46
    %v189 = vpop.permute.xlu0 %188
    %v191 = vperm.slane %v31, 1
    %v192 = vperm.slane %v32, 1
    %v193 = vperm.slane %v33, 1
    %v194 = vperm.slane %v34, 1
    %v195 = vperm.slane %v35, 1
    %v196 = vperm.slane %v36, 1
    %v197 = vperm.slane %v37, 1
    %v198 = vperm.slane %v38, 1
    %v199 = vmul.f32 %v161, %v191
    %v200 = vmul.f32 %v165, %v191
    %v201 = vmul.f32 %v169, %v191
    %v202 = vmul.f32 %v173, %v191
    %v203 = vmul.f32 %v177, %v191
    %v204 = vmul.f32 %v181, %v191
    %v205 = vmul.f32 %v185, %v191
    %v206 = vmul.f32 %v189, %v191
    %v207 = vmul.f32 %v161, %v192
    %v208 = vmul.f32 %v165, %v192
    %v209 = vmul.f32 %v169, %v192
    %v210 = vmul.f32 %v173, %v192
    %v211 = vmul.f32 %v177, %v192
    %v212 = vmul.f32 %v181, %v192
    %v213 = vmul.f32 %v185, %v192
    %v214 = vmul.f32 %v189, %v192
    %v215 = vmul.f32 %v161, %v193
    %v216 = vmul.f32 %v165, %v193
    %v217 = vmul.f32 %v169, %v193
    %v218 = vmul.f32 %v173, %v193
    %v219 = vmul.f32 %v177, %v193
    %v220 = vmul.f32 %v181, %v193
    %v221 = vmul.f32 %v185, %v193
    %v222 = vmul.f32 %v189, %v193
    %v223 = vmul.f32 %v161, %v194
    %v224 = vmul.f32 %v165, %v194
    %v225 = vmul.f32 %v169, %v194
    %v226 = vmul.f32 %v173, %v194
    %v227 = vmul.f32 %v177, %v194
    %v228 = vmul.f32 %v181, %v194
    %v229 = vmul.f32 %v185, %v194
    %v230 = vmul.f32 %v189, %v194
    %v231 = vmul.f32 %v161, %v195
    %v232 = vmul.f32 %v165, %v195
    %v233 = vmul.f32 %v169, %v195
    %v234 = vmul.f32 %v173, %v195
    %v235 = vmul.f32 %v177, %v195
    %v236 = vmul.f32 %v181, %v195
    %v237 = vmul.f32 %v185, %v195
    %v238 = vmul.f32 %v189, %v195
    %v239 = vmul.f32 %v161, %v196
    %v240 = vmul.f32 %v165, %v196
    %v241 = vmul.f32 %v169, %v196
    %v242 = vmul.f32 %v173, %v196
    %v243 = vmul.f32 %v177, %v196
    %v244 = vmul.f32 %v181, %v196
    %v245 = vmul.f32 %v185, %v196
    %v246 = vmul.f32 %v189, %v196
    %v247 = vmul.f32 %v161, %v197
    %v248 = vmul.f32 %v165, %v197
    %v249 = vmul.f32 %v169, %v197
    %v250 = vmul.f32 %v173, %v197
    %v251 = vmul.f32 %v177, %v197
    %v252 = vmul.f32 %v181, %v197
    %v253 = vmul.f32 %v185, %v197
    %v254 = vmul.f32 %v189, %v197
    %v255 = vmul.f32 %v161, %v198
    %v256 = vmul.f32 %v165, %v198
    %v257 = vmul.f32 %v169, %v198
    %v258 = vmul.f32 %v173, %v198
    %v259 = vmul.f32 %v177, %v198
    %v260 = vmul.f32 %v181, %v198
    %v261 = vmul.f32 %v185, %v198
    %v262 = vmul.f32 %v189, %v198
    %v263 = vadd.f32 %v95, %v199
    %v264 = vadd.f32 %v96, %v200
    %v265 = vadd.f32 %v97, %v201
    %v266 = vadd.f32 %v98, %v202
    %v267 = vadd.f32 %v99, %v203
    %v268 = vadd.f32 %v100, %v204
    %v269 = vadd.f32 %v101, %v205
    %v270 = vadd.f32 %v102, %v206
    %v271 = vadd.f32 %v103, %v207
    %v272 = vadd.f32 %v104, %v208
    %v273 = vadd.f32 %v105, %v209
    %v274 = vadd.f32 %v106, %v210
    %v275 = vadd.f32 %v107, %v211
    %v276 = vadd.f32 %v108, %v212
    %v277 = vadd.f32 %v109, %v213
    %v278 = vadd.f32 %v110, %v214
    %v279 = vadd.f32 %v111, %v215
    %v280 = vadd.f32 %v112, %v216
    %v281 = vadd.f32 %v113, %v217
    %v282 = vadd.f32 %v114, %v218
    %v283 = vadd.f32 %v115, %v219
    %v284 = vadd.f32 %v116, %v220
    %v285 = vadd.f32 %v117, %v221
    %v286 = vadd.f32 %v118, %v222
    %v287 = vadd.f32 %v119, %v223
    %v288 = vadd.f32 %v120, %v224
    %v289 = vadd.f32 %v121, %v225
    %v290 = vadd.f32 %v122, %v226
    %v291 = vadd.f32 %v123, %v227
    %v292 = vadd.f32 %v124, %v228
    %v293 = vadd.f32 %v125, %v229
    %v294 = vadd.f32 %v126, %v230
    %v295 = vadd.f32 %v127, %v231
    %v296 = vadd.f32 %v128, %v232
    %v297 = vadd.f32 %v129, %v233
    %v298 = vadd.f32 %v130, %v234
    %v299 = vadd.f32 %v131, %v235
    %v300 = vadd.f32 %v132, %v236
    %v301 = vadd.f32 %v133, %v237
    %v302 = vadd.f32 %v134, %v238
    %v303 = vadd.f32 %v135, %v239
    %v304 = vadd.f32 %v136, %v240
    %v305 = vadd.f32 %v137, %v241
    %v306 = vadd.f32 %v138, %v242
    %v307 = vadd.f32 %v139, %v243
    %v308 = vadd.f32 %v140, %v244
    %v309 = vadd.f32 %v141, %v245
    %v310 = vadd.f32 %v142, %v246
    %v311 = vadd.f32 %v143, %v247
    %v312 = vadd.f32 %v144, %v248
    %v313 = vadd.f32 %v145, %v249
    %v314 = vadd.f32 %v146, %v250
    %v315 = vadd.f32 %v147, %v251
    %v316 = vadd.f32 %v148, %v252
    %v317 = vadd.f32 %v149, %v253
    %v318 = vadd.f32 %v150, %v254
    %v319 = vadd.f32 %v151, %v255
    %v320 = vadd.f32 %v152, %v256
    %v321 = vadd.f32 %v153, %v257
    %v322 = vadd.f32 %v154, %v258
    %v323 = vadd.f32 %v155, %v259
    %v324 = vadd.f32 %v156, %v260
    %v325 = vadd.f32 %v157, %v261
    %v326 = vadd.f32 %v158, %v262
    %v327 = vtanh.pop %v263
    %v328 = vtanh.pop %v264
    %v329 = vtanh.pop %v265
    %v330 = vtanh.pop %v266
    %v331 = vtanh.pop %v267
    %v332 = vtanh.pop %v268
    %v333 = vtanh.pop %v269
    %v334 = vtanh.pop %v270
    %v335 = vtanh.pop %v271
    %v336 = vtanh.pop %v272
    %v337 = vtanh.pop %v273
    %v338 = vtanh.pop %v274
    %v339 = vtanh.pop %v275
    %v340 = vtanh.pop %v276
    %v341 = vtanh.pop %v277
    %v342 = vtanh.pop %v278
    %v343 = vtanh.pop %v279
    %v344 = vtanh.pop %v280
    %v345 = vtanh.pop %v281
    %v346 = vtanh.pop %v282
    %v347 = vtanh.pop %v283
    %v348 = vtanh.pop %v284
    %v349 = vtanh.pop %v285
    %v350 = vtanh.pop %v286
    %v351 = vtanh.pop %v287
    %v352 = vtanh.pop %v288
    %v353 = vtanh.pop %v289
    %v354 = vtanh.pop %v290
    %v355 = vtanh.pop %v291
    %v356 = vtanh.pop %v292
    %v357 = vtanh.pop %v293
    %v358 = vtanh.pop %v294
    %v359 = vtanh.pop %v295
    %v360 = vtanh.pop %v296
    %v361 = vtanh.pop %v297
    %v362 = vtanh.pop %v298
    %v363 = vtanh.pop %v299
    %v364 = vtanh.pop %v300
    %v365 = vtanh.pop %v301
    %v366 = vtanh.pop %v302
    %v367 = vtanh.pop %v303
    %v368 = vtanh.pop %v304
    %v369 = vtanh.pop %v305
    %v370 = vtanh.pop %v306
    %v371 = vtanh.pop %v307
    %v372 = vtanh.pop %v308
    %v373 = vtanh.pop %v309
    %v374 = vtanh.pop %v310
    %v375 = vtanh.pop %v311
    %v376 = vtanh.pop %v312
    %v377 = vtanh.pop %v313
    %v378 = vtanh.pop %v314
    %v379 = vtanh.pop %v315
    %v380 = vtanh.pop %v316
    %v381 = vtanh.pop %v317
    %v382 = vtanh.pop %v318
    %v383 = vtanh.pop %v319
    %v384 = vtanh.pop %v320
    %v385 = vtanh.pop %v321
    %v386 = vtanh.pop %v322
    %v387 = vtanh.pop %v323
    %v388 = vtanh.pop %v324
    %v389 = vtanh.pop %v325
    %v390 = vtanh.pop %v326
    %391 = vset.pattern.permute.xlu0 2
    %392 = vperm.xlu0 %391, %v39
    %v393 = vpop.permute.xlu0 %392
    %395 = vset.pattern.permute.xlu0 2
    %396 = vperm.xlu0 %395, %v40
    %v397 = vpop.permute.xlu0 %396
    %399 = vset.pattern.permute.xlu0 2
    %400 = vperm.xlu0 %399, %v41
    %v401 = vpop.permute.xlu0 %400
    %403 = vset.pattern.permute.xlu0 2
    %404 = vperm.xlu0 %403, %v42
    %v405 = vpop.permute.xlu0 %404
    %407 = vset.pattern.permute.xlu0 2
    %408 = vperm.xlu0 %407, %v43
    %v409 = vpop.permute.xlu0 %408
    %411 = vset.pattern.permute.xlu0 2
    %412 = vperm.xlu0 %411, %v44
    %v413 = vpop.permute.xlu0 %412
    %415 = vset.pattern.permute.xlu0 2
    %416 = vperm.xlu0 %415, %v45
    %v417 = vpop.permute.xlu0 %416
    %419 = vset.pattern.permute.xlu0 2
    %420 = vperm.xlu0 %419, %v46
    %v421 = vpop.permute.xlu0 %420
    %v423 = vmul.f32 %v327, %v393
    %v424 = vmul.f32 %v328, %v397
    %v425 = vmul.f32 %v329, %v401
    %v426 = vmul.f32 %v330, %v405
    %v427 = vmul.f32 %v331, %v409
    %v428 = vmul.f32 %v332, %v413
    %v429 = vmul.f32 %v333, %v417
    %v430 = vmul.f32 %v334, %v421
    %v431 = vmul.f32 %v335, %v393
    %v432 = vmul.f32 %v336, %v397
    %v433 = vmul.f32 %v337, %v401
    %v434 = vmul.f32 %v338, %v405
    %v435 = vmul.f32 %v339, %v409
    %v436 = vmul.f32 %v340, %v413
    %v437 = vmul.f32 %v341, %v417
    %v438 = vmul.f32 %v342, %v421
    %v439 = vmul.f32 %v343, %v393
    %v440 = vmul.f32 %v344, %v397
    %v441 = vmul.f32 %v345, %v401
    %v442 = vmul.f32 %v346, %v405
    %v443 = vmul.f32 %v347, %v409
    %v444 = vmul.f32 %v348, %v413
    %v445 = vmul.f32 %v349, %v417
    %v446 = vmul.f32 %v350, %v421
    %v447 = vmul.f32 %v351, %v393
    %v448 = vmul.f32 %v352, %v397
    %v449 = vmul.f32 %v353, %v401
    %v450 = vmul.f32 %v354, %v405
    %v451 = vmul.f32 %v355, %v409
    %v452 = vmul.f32 %v356, %v413
    %v453 = vmul.f32 %v357, %v417
    %v454 = vmul.f32 %v358, %v421
    %v455 = vmul.f32 %v359, %v393
    %v456 = vmul.f32 %v360, %v397
    %v457 = vmul.f32 %v361, %v401
    %v458 = vmul.f32 %v362, %v405
    %v459 = vmul.f32 %v363, %v409
    %v460 = vmul.f32 %v364, %v413
    %v461 = vmul.f32 %v365, %v417
    %v462 = vmul.f32 %v366, %v421
    %v463 = vmul.f32 %v367, %v393
    %v464 = vmul.f32 %v368, %v397
    %v465 = vmul.f32 %v369, %v401
    %v466 = vmul.f32 %v370, %v405
    %v467 = vmul.f32 %v371, %v409
    %v468 = vmul.f32 %v372, %v413
    %v469 = vmul.f32 %v373, %v417
    %v470 = vmul.f32 %v374, %v421
    %v471 = vmul.f32 %v375, %v393
    %v472 = vmul.f32 %v376, %v397
    %v473 = vmul.f32 %v377, %v401
    %v474 = vmul.f32 %v378, %v405
    %v475 = vmul.f32 %v379, %v409
    %v476 = vmul.f32 %v380, %v413
    %v477 = vmul.f32 %v381, %v417
    %v478 = vmul.f32 %v382, %v421
    %v479 = vmul.f32 %v383, %v393
    %v480 = vmul.f32 %v384, %v397
    %v481 = vmul.f32 %v385, %v401
    %v482 = vmul.f32 %v386, %v405
    %v483 = vmul.f32 %v387, %v409
    %v484 = vmul.f32 %v388, %v413
    %v485 = vmul.f32 %v389, %v417
    %v486 = vmul.f32 %v390, %v421
    %vm487 = vcmask 64512
    %v488 = vsel %vm487, %v423, 0.0
    %v489 = vsel %vm487, %v424, 0.0
    %v490 = vadd.f32 %v488, %v489
    %v491 = vsel %vm487, %v425, 0.0
    %v492 = vadd.f32 %v490, %v491
    %v493 = vsel %vm487, %v426, 0.0
    %v494 = vadd.f32 %v492, %v493
    %v495 = vsel %vm487, %v427, 0.0
    %v496 = vadd.f32 %v494, %v495
    %v497 = vsel %vm487, %v428, 0.0
    %v498 = vadd.f32 %v496, %v497
    %v499 = vsel %vm487, %v429, 0.0
    %v500 = vadd.f32 %v498, %v499
    %v501 = vsel %vm487, %v430, 0.0
    %v502 = vadd.f32 %v500, %v501
    %v503 = vrot.slane %v502, 4
    %v504 = vadd.f32 %v502, %v503
    %v505 = vrot.slane %v504, 2
    %v506 = vadd.f32 %v504, %v505
    %v507 = vrot.slane %v506, 1
    %v508 = vadd.f32 %v506, %v507
    %v509 = vsel %vm487, %v431, 0.0
    %v510 = vsel %vm487, %v432, 0.0
    %v511 = vadd.f32 %v509, %v510
    %v512 = vsel %vm487, %v433, 0.0
    %v513 = vadd.f32 %v511, %v512
    %v514 = vsel %vm487, %v434, 0.0
    %v515 = vadd.f32 %v513, %v514
    %v516 = vsel %vm487, %v435, 0.0
    %v517 = vadd.f32 %v515, %v516
    %v518 = vsel %vm487, %v436, 0.0
    %v519 = vadd.f32 %v517, %v518
    %v520 = vsel %vm487, %v437, 0.0
    %v521 = vadd.f32 %v519, %v520
    %v522 = vsel %vm487, %v438, 0.0
    %v523 = vadd.f32 %v521, %v522
    %v524 = vrot.slane %v523, 4
    %v525 = vadd.f32 %v523, %v524
    %v526 = vrot.slane %v525, 2
    %v527 = vadd.f32 %v525, %v526
    %v528 = vrot.slane %v527, 1
    %v529 = vadd.f32 %v527, %v528
    %v530 = vsel %vm487, %v439, 0.0
    %v531 = vsel %vm487, %v440, 0.0
    %v532 = vadd.f32 %v530, %v531
    %v533 = vsel %vm487, %v441, 0.0
    %v534 = vadd.f32 %v532, %v533
    %v535 = vsel %vm487, %v442, 0.0
    %v536 = vadd.f32 %v534, %v535
    %v537 = vsel %vm487, %v443, 0.0
    %v538 = vadd.f32 %v536, %v537
    %v539 = vsel %vm487, %v444, 0.0
    %v540 = vadd.f32 %v538, %v539
    %v541 = vsel %vm487, %v445, 0.0
    %v542 = vadd.f32 %v540, %v541
    %v543 = vsel %vm487, %v446, 0.0
    %v544 = vadd.f32 %v542, %v543
    %v545 = vrot.slane %v544, 4
    %v546 = vadd.f32 %v544, %v545
    %v547 = vrot.slane %v546, 2
    %v548 = vadd.f32 %v546, %v547
    %v549 = vrot.slane %v548, 1
    %v550 = vadd.f32 %v548, %v549
    %v551 = vsel %vm487, %v447, 0.0
    %v552 = vsel %vm487, %v448, 0.0
    %v553 = vadd.f32 %v551, %v552
    %v554 = vsel %vm487, %v449, 0.0
    %v555 = vadd.f32 %v553, %v554
    %v556 = vsel %vm487, %v450, 0.0
    %v557 = vadd.f32 %v555, %v556
    %v558 = vsel %vm487, %v451, 0.0
    %v559 = vadd.f32 %v557, %v558
    %v560 = vsel %vm487, %v452, 0.0
    %v561 = vadd.f32 %v559, %v560
    %v562 = vsel %vm487, %v453, 0.0
    %v563 = vadd.f32 %v561, %v562
    %v564 = vsel %vm487, %v454, 0.0
    %v565 = vadd.f32 %v563, %v564
    %v566 = vrot.slane %v565, 4
    %v567 = vadd.f32 %v565, %v566
    %v568 = vrot.slane %v567, 2
    %v569 = vadd.f32 %v567, %v568
    %v570 = vrot.slane %v569, 1
    %v571 = vadd.f32 %v569, %v570
    %v572 = vsel %vm487, %v455, 0.0
    %v573 = vsel %vm487, %v456, 0.0
    %v574 = vadd.f32 %v572, %v573
    %v575 = vsel %vm487, %v457, 0.0
    %v576 = vadd.f32 %v574, %v575
    %v577 = vsel %vm487, %v458, 0.0
    %v578 = vadd.f32 %v576, %v577
    %v579 = vsel %vm487, %v459, 0.0
    %v580 = vadd.f32 %v578, %v579
    %v581 = vsel %vm487, %v460, 0.0
    %v582 = vadd.f32 %v580, %v581
    %v583 = vsel %vm487, %v461, 0.0
    %v584 = vadd.f32 %v582, %v583
    %v585 = vsel %vm487, %v462, 0.0
    %v586 = vadd.f32 %v584, %v585
    %v587 = vrot.slane %v586, 4
    %v588 = vadd.f32 %v586, %v587
    %v589 = vrot.slane %v588, 2
    %v590 = vadd.f32 %v588, %v589
    %v591 = vrot.slane %v590, 1
    %v592 = vadd.f32 %v590, %v591
    %v593 = vsel %vm487, %v463, 0.0
    %v594 = vsel %vm487, %v464, 0.0
    %v595 = vadd.f32 %v593, %v594
    %v596 = vsel %vm487, %v465, 0.0
    %v597 = vadd.f32 %v595, %v596
    %v598 = vsel %vm487, %v466, 0.0
    %v599 = vadd.f32 %v597, %v598
    %v600 = vsel %vm487, %v467, 0.0
    %v601 = vadd.f32 %v599, %v600
    %v602 = vsel %vm487, %v468, 0.0
    %v603 = vadd.f32 %v601, %v602
    %v604 = vsel %vm487, %v469, 0.0
    %v605 = vadd.f32 %v603, %v604
    %v606 = vsel %vm487, %v470, 0.0
    %v607 = vadd.f32 %v605, %v606
    %v608 = vrot.slane %v607, 4
    %v609 = vadd.f32 %v607, %v608
    %v610 = vrot.slane %v609, 2
    %v611 = vadd.f32 %v609, %v610
    %v612 = vrot.slane %v611, 1
    %v613 = vadd.f32 %v611, %v612
    %v614 = vsel %vm487, %v471, 0.0
    %v615 = vsel %vm487, %v472, 0.0
    %v616 = vadd.f32 %v614, %v615
    %v617 = vsel %vm487, %v473, 0.0
    %v618 = vadd.f32 %v616, %v617
    %v619 = vsel %vm487, %v474, 0.0
    %v620 = vadd.f32 %v618, %v619
    %v621 = vsel %vm487, %v475, 0.0
    %v622 = vadd.f32 %v620, %v621
    %v623 = vsel %vm487, %v476, 0.0
    %v624 = vadd.f32 %v622, %v623
    %v625 = vsel %vm487, %v477, 0.0
    %v626 = vadd.f32 %v624, %v625
    %v627 = vsel %vm487, %v478, 0.0
    %v628 = vadd.f32 %v626, %v627
    %v629 = vrot.slane %v628, 4
    %v630 = vadd.f32 %v628, %v629
    %v631 = vrot.slane %v630, 2
    %v632 = vadd.f32 %v630, %v631
    %v633 = vrot.slane %v632, 1
    %v634 = vadd.f32 %v632, %v633
    %v635 = vsel %vm487, %v479, 0.0
    %v636 = vsel %vm487, %v480, 0.0
    %v637 = vadd.f32 %v635, %v636
    %v638 = vsel %vm487, %v481, 0.0
    %v639 = vadd.f32 %v637, %v638
    %v640 = vsel %vm487, %v482, 0.0
    %v641 = vadd.f32 %v639, %v640
    %v642 = vsel %vm487, %v483, 0.0
    %v643 = vadd.f32 %v641, %v642
    %v644 = vsel %vm487, %v484, 0.0
    %v645 = vadd.f32 %v643, %v644
    %v646 = vsel %vm487, %v485, 0.0
    %v647 = vadd.f32 %v645, %v646
    %v648 = vsel %vm487, %v486, 0.0
    %v649 = vadd.f32 %v647, %v648
    %v650 = vrot.slane %v649, 4
    %v651 = vadd.f32 %v649, %v650
    %v652 = vrot.slane %v651, 2
    %v653 = vadd.f32 %v651, %v652
    %v654 = vrot.slane %v653, 1
    %v655 = vadd.f32 %v653, %v654
    %v656 = vsel %vm487, %v508, -inf
    %657 = vmax.xlane.f32.xlu0 %v656
    %v658 = vpop.xlane.xlu0 %657
    %v659 = vsel %vm487, %v529, -inf
    %660 = vmax.xlane.f32.xlu0 %v659
    %v661 = vpop.xlane.xlu0 %660
    %v662 = vsel %vm487, %v550, -inf
    %663 = vmax.xlane.f32.xlu0 %v662
    %v664 = vpop.xlane.xlu0 %663
    %v665 = vsel %vm487, %v571, -inf
    %666 = vmax.xlane.f32.xlu0 %v665
    %v667 = vpop.xlane.xlu0 %666
    %v668 = vsel %vm487, %v592, -inf
    %669 = vmax.xlane.f32.xlu0 %v668
    %v670 = vpop.xlane.xlu0 %669
    %v671 = vsel %vm487, %v613, -inf
    %672 = vmax.xlane.f32.xlu0 %v671
    %v673 = vpop.xlane.xlu0 %672
    %v674 = vsel %vm487, %v634, -inf
    %675 = vmax.xlane.f32.xlu0 %v674
    %v676 = vpop.xlane.xlu0 %675
    %v677 = vsel %vm487, %v655, -inf
    %678 = vmax.xlane.f32.xlu0 %v677
    %v679 = vpop.xlane.xlu0 %678
    %v680 = vsub.f32 %v508, %v658
    %v681 = vsub.f32 %v529, %v661
    %v682 = vsub.f32 %v550, %v664
    %v683 = vsub.f32 %v571, %v667
    %v684 = vsub.f32 %v592, %v670
    %v685 = vsub.f32 %v613, %v673
    %v686 = vsub.f32 %v634, %v676
    %v687 = vsub.f32 %v655, %v679
    %v688 = vmul.f32 %v680, 1.442695
    %v689 = vpow.pop %v688
    %v690 = vmul.f32 %v681, 1.442695
    %v691 = vpow.pop %v690
    %v692 = vmul.f32 %v682, 1.442695
    %v693 = vpow.pop %v692
    %v694 = vmul.f32 %v683, 1.442695
    %v695 = vpow.pop %v694
    %v696 = vmul.f32 %v684, 1.442695
    %v697 = vpow.pop %v696
    %v698 = vmul.f32 %v685, 1.442695
    %v699 = vpow.pop %v698
    %v700 = vmul.f32 %v686, 1.442695
    %v701 = vpow.pop %v700
    %v702 = vmul.f32 %v687, 1.442695
    %v703 = vpow.pop %v702
    %v704 = vsel %vm487, %v689, 0.0
    %705 = vadd.xlane.f32.xlu0 %v704
    %v706 = vpop.xlane.xlu0 %705
    %v707 = vsel %vm487, %v691, 0.0
    %708 = vadd.xlane.f32.xlu0 %v707
    %v709 = vpop.xlane.xlu0 %708
    %v710 = vsel %vm487, %v693, 0.0
    %711 = vadd.xlane.f32.xlu0 %v710
    %v712 = vpop.xlane.xlu0 %711
    %v713 = vsel %vm487, %v695, 0.0
    %714 = vadd.xlane.f32.xlu0 %v713
    %v715 = vpop.xlane.xlu0 %714
    %v716 = vsel %vm487, %v697, 0.0
    %717 = vadd.xlane.f32.xlu0 %v716
    %v718 = vpop.xlane.xlu0 %717
    %v719 = vsel %vm487, %v699, 0.0
    %720 = vadd.xlane.f32.xlu0 %v719
    %v721 = vpop.xlane.xlu0 %720
    %v722 = vsel %vm487, %v701, 0.0
    %723 = vadd.xlane.f32.xlu0 %v722
    %v724 = vpop.xlane.xlu0 %723
    %v725 = vsel %vm487, %v703, 0.0
    %726 = vadd.xlane.f32.xlu0 %v725
    %v727 = vpop.xlane.xlu0 %726
    %v728 = vrcp.pop %v706
    %v729 = vrcp.pop %v709
    %v730 = vrcp.pop %v712
    %v731 = vrcp.pop %v715
    %v732 = vrcp.pop %v718
    %v733 = vrcp.pop %v721
    %v734 = vrcp.pop %v724
    %v735 = vrcp.pop %v727
    %v736 = vmul.f32 %v689, %v728
    %v737 = vmul.f32 %v691, %v729
    %v738 = vmul.f32 %v693, %v730
    %v739 = vmul.f32 %v695, %v731
    %v740 = vmul.f32 %v697, %v732
    %v741 = vmul.f32 %v699, %v733
    %v742 = vmul.f32 %v701, %v734
    %v743 = vmul.f32 %v703, %v735
    %v744 = vmul.f32 %v736, %v31
    %v745 = vmul.f32 %v737, %v32
    %v746 = vmul.f32 %v738, %v33
    %v747 = vmul.f32 %v739, %v34
    %v748 = vmul.f32 %v740, %v35
    %v749 = vmul.f32 %v741, %v36
    %v750 = vmul.f32 %v742, %v37
    %v751 = vmul.f32 %v743, %v38
    %vm752 = vcmask 58368
    %v753 = vsel %vm752, %v744, 0.0
    %754 = vadd.xlane.f32.xlu0 %v753
    %v755 = vpop.xlane.xlu0 %754
    %v756 = vsel %vm752, %v745, 0.0
    %757 = vadd.xlane.f32.xlu0 %v756
    %v758 = vpop.xlane.xlu0 %757
    %v759 = vsel %vm752, %v746, 0.0
    %760 = vadd.xlane.f32.xlu0 %v759
    %v761 = vpop.xlane.xlu0 %760
    %v762 = vsel %vm752, %v747, 0.0
    %763 = vadd.xlane.f32.xlu0 %v762
    %v764 = vpop.xlane.xlu0 %763
    %v765 = vsel %vm752, %v748, 0.0
    %766 = vadd.xlane.f32.xlu0 %v765
    %v767 = vpop.xlane.xlu0 %766
    %v768 = vsel %vm752, %v749, 0.0
    %769 = vadd.xlane.f32.xlu0 %v768
    %v770 = vpop.xlane.xlu0 %769
    %v771 = vsel %vm752, %v750, 0.0
    %772 = vadd.xlane.f32.xlu0 %v771
    %v773 = vpop.xlane.xlu0 %772
    %v774 = vsel %vm752, %v751, 0.0
    %775 = vadd.xlane.f32.xlu0 %v774
    %v776 = vpop.xlane.xlu0 %775
    %v777 = vld [vmem:[%s2] sm:$0x3]
    %v778 = vperm.slane %v755, 0
    %v779 = vperm.slane %v758, 0
    %v780 = vperm.slane %v761, 0
    %v781 = vperm.slane %v764, 0
    %v782 = vperm.slane %v767, 0
    %v783 = vperm.slane %v770, 0
    %v784 = vperm.slane %v773, 0
    %v785 = vperm.slane %v776, 0
    %v786 = vperm.slane %v777, 0
    %v788 = vlaneseq
    %v789 = vshrl.u32 %v788, 7
    %791 = vset.pattern.permute.xlu0 %v789
    %792 = vperm.xlu0 %791, %v786
    %v793 = vpop.permute.xlu0 %792
    %v794 = vlaneseq
    %v795 = vshrl.u32 %v794, 7
    %v796 = vadd.s32 %v795, 8
    %797 = vset.pattern.permute.xlu0 %v796
    %798 = vperm.xlu0 %797, %v786
    %v799 = vpop.permute.xlu0 %798
    %v800 = vlaneseq
    %v801 = vshrl.u32 %v800, 7
    %v802 = vadd.s32 %v801, 16
    %803 = vset.pattern.permute.xlu0 %v802
    %804 = vperm.xlu0 %803, %v786
    %v805 = vpop.permute.xlu0 %804
    %v806 = vlaneseq
    %v807 = vshrl.u32 %v806, 7
    %v808 = vadd.s32 %v807, 24
    %809 = vset.pattern.permute.xlu0 %v808
    %810 = vperm.xlu0 %809, %v786
    %v811 = vpop.permute.xlu0 %810
    %v812 = vlaneseq
    %v813 = vshrl.u32 %v812, 7
    %v814 = vadd.s32 %v813, 32
    %815 = vset.pattern.permute.xlu0 %v814
    %816 = vperm.xlu0 %815, %v786
    %v817 = vpop.permute.xlu0 %816
    %v818 = vlaneseq
    %v819 = vshrl.u32 %v818, 7
    %v820 = vadd.s32 %v819, 40
    %821 = vset.pattern.permute.xlu0 %v820
    %822 = vperm.xlu0 %821, %v786
    %v823 = vpop.permute.xlu0 %822
    %v824 = vlaneseq
    %v825 = vshrl.u32 %v824, 7
    %v826 = vadd.s32 %v825, 48
    %827 = vset.pattern.permute.xlu0 %v826
    %828 = vperm.xlu0 %827, %v786
    %v829 = vpop.permute.xlu0 %828
    %v830 = vlaneseq
    %v831 = vshrl.u32 %v830, 7
    %v832 = vadd.s32 %v831, 56
    %833 = vset.pattern.permute.xlu0 %v832
    %834 = vperm.xlu0 %833, %v786
    %v835 = vpop.permute.xlu0 %834
    %v836 = vlaneseq
    %v837 = vshrl.u32 %v836, 7
    %v838 = vadd.s32 %v837, 64
    %839 = vset.pattern.permute.xlu0 %v838
    %840 = vperm.xlu0 %839, %v786
    %v841 = vpop.permute.xlu0 %840
    %v842 = vlaneseq
    %v843 = vshrl.u32 %v842, 7
    %v844 = vadd.s32 %v843, 72
    %845 = vset.pattern.permute.xlu0 %v844
    %846 = vperm.xlu0 %845, %v786
    %v847 = vpop.permute.xlu0 %846
    %v848 = vlaneseq
    %v849 = vshrl.u32 %v848, 7
    %v850 = vadd.s32 %v849, 80
    %851 = vset.pattern.permute.xlu0 %v850
    %852 = vperm.xlu0 %851, %v786
    %v853 = vpop.permute.xlu0 %852
    %v854 = vlaneseq
    %v855 = vshrl.u32 %v854, 7
    %v856 = vadd.s32 %v855, 88
    %857 = vset.pattern.permute.xlu0 %v856
    %858 = vperm.xlu0 %857, %v786
    %v859 = vpop.permute.xlu0 %858
    %v860 = vlaneseq
    %v861 = vshrl.u32 %v860, 7
    %v862 = vadd.s32 %v861, 96
    %863 = vset.pattern.permute.xlu0 %v862
    %864 = vperm.xlu0 %863, %v786
    %v865 = vpop.permute.xlu0 %864
    %v866 = vlaneseq
    %v867 = vshrl.u32 %v866, 7
    %v868 = vadd.s32 %v867, 104
    %869 = vset.pattern.permute.xlu0 %v868
    %870 = vperm.xlu0 %869, %v786
    %v871 = vpop.permute.xlu0 %870
    %v872 = vlaneseq
    %v873 = vshrl.u32 %v872, 7
    %v874 = vadd.s32 %v873, 112
    %875 = vset.pattern.permute.xlu0 %v874
    %876 = vperm.xlu0 %875, %v786
    %v877 = vpop.permute.xlu0 %876
    %v878 = vlaneseq
    %v879 = vshrl.u32 %v878, 7
    %v880 = vadd.s32 %v879, 120
    %881 = vset.pattern.permute.xlu0 %v880
    %882 = vperm.xlu0 %881, %v786
    %v883 = vpop.permute.xlu0 %882
    %v900 = vmul.f32 %v778, %v793
    %v901 = vmul.f32 %v778, %v799
    %v902 = vmul.f32 %v778, %v805
    %v903 = vmul.f32 %v778, %v811
    %v904 = vmul.f32 %v778, %v817
    %v905 = vmul.f32 %v778, %v823
    %v906 = vmul.f32 %v778, %v829
    %v907 = vmul.f32 %v778, %v835
    %v908 = vmul.f32 %v778, %v841
    %v909 = vmul.f32 %v778, %v847
    %v910 = vmul.f32 %v778, %v853
    %v911 = vmul.f32 %v778, %v859
    %v912 = vmul.f32 %v778, %v865
    %v913 = vmul.f32 %v778, %v871
    %v914 = vmul.f32 %v778, %v877
    %v915 = vmul.f32 %v778, %v883
    %v916 = vmul.f32 %v779, %v793
    %v917 = vmul.f32 %v779, %v799
    %v918 = vmul.f32 %v779, %v805
    %v919 = vmul.f32 %v779, %v811
    %v920 = vmul.f32 %v779, %v817
    %v921 = vmul.f32 %v779, %v823
    %v922 = vmul.f32 %v779, %v829
    %v923 = vmul.f32 %v779, %v835
    %v924 = vmul.f32 %v779, %v841
    %v925 = vmul.f32 %v779, %v847
    %v926 = vmul.f32 %v779, %v853
    %v927 = vmul.f32 %v779, %v859
    %v928 = vmul.f32 %v779, %v865
    %v929 = vmul.f32 %v779, %v871
    %v930 = vmul.f32 %v779, %v877
    %v931 = vmul.f32 %v779, %v883
    %v932 = vmul.f32 %v780, %v793
    %v933 = vmul.f32 %v780, %v799
    %v934 = vmul.f32 %v780, %v805
    %v935 = vmul.f32 %v780, %v811
    %v936 = vmul.f32 %v780, %v817
    %v937 = vmul.f32 %v780, %v823
    %v938 = vmul.f32 %v780, %v829
    %v939 = vmul.f32 %v780, %v835
    %v940 = vmul.f32 %v780, %v841
    %v941 = vmul.f32 %v780, %v847
    %v942 = vmul.f32 %v780, %v853
    %v943 = vmul.f32 %v780, %v859
    %v944 = vmul.f32 %v780, %v865
    %v945 = vmul.f32 %v780, %v871
    %v946 = vmul.f32 %v780, %v877
    %v947 = vmul.f32 %v780, %v883
    %v948 = vmul.f32 %v781, %v793
    %v949 = vmul.f32 %v781, %v799
    %v950 = vmul.f32 %v781, %v805
    %v951 = vmul.f32 %v781, %v811
    %v952 = vmul.f32 %v781, %v817
    %v953 = vmul.f32 %v781, %v823
    %v954 = vmul.f32 %v781, %v829
    %v955 = vmul.f32 %v781, %v835
    %v956 = vmul.f32 %v781, %v841
    %v957 = vmul.f32 %v781, %v847
    %v958 = vmul.f32 %v781, %v853
    %v959 = vmul.f32 %v781, %v859
    %v960 = vmul.f32 %v781, %v865
    %v961 = vmul.f32 %v781, %v871
    %v962 = vmul.f32 %v781, %v877
    %v963 = vmul.f32 %v781, %v883
    %v964 = vmul.f32 %v782, %v793
    %v965 = vmul.f32 %v782, %v799
    %v966 = vmul.f32 %v782, %v805
    %v967 = vmul.f32 %v782, %v811
    %v968 = vmul.f32 %v782, %v817
    %v969 = vmul.f32 %v782, %v823
    %v970 = vmul.f32 %v782, %v829
    %v971 = vmul.f32 %v782, %v835
    %v972 = vmul.f32 %v782, %v841
    %v973 = vmul.f32 %v782, %v847
    %v974 = vmul.f32 %v782, %v853
    %v975 = vmul.f32 %v782, %v859
    %v976 = vmul.f32 %v782, %v865
    %v977 = vmul.f32 %v782, %v871
    %v978 = vmul.f32 %v782, %v877
    %v979 = vmul.f32 %v782, %v883
    %v980 = vmul.f32 %v783, %v793
    %v981 = vmul.f32 %v783, %v799
    %v982 = vmul.f32 %v783, %v805
    %v983 = vmul.f32 %v783, %v811
    %v984 = vmul.f32 %v783, %v817
    %v985 = vmul.f32 %v783, %v823
    %v986 = vmul.f32 %v783, %v829
    %v987 = vmul.f32 %v783, %v835
    %v988 = vmul.f32 %v783, %v841
    %v989 = vmul.f32 %v783, %v847
    %v990 = vmul.f32 %v783, %v853
    %v991 = vmul.f32 %v783, %v859
    %v992 = vmul.f32 %v783, %v865
    %v993 = vmul.f32 %v783, %v871
    %v994 = vmul.f32 %v783, %v877
    %v995 = vmul.f32 %v783, %v883
    %v996 = vmul.f32 %v784, %v793
    %v997 = vmul.f32 %v784, %v799
    %v998 = vmul.f32 %v784, %v805
    %v999 = vmul.f32 %v784, %v811
    %v1000 = vmul.f32 %v784, %v817
    %v1001 = vmul.f32 %v784, %v823
    %v1002 = vmul.f32 %v784, %v829
    %v1003 = vmul.f32 %v784, %v835
    %v1004 = vmul.f32 %v784, %v841
    %v1005 = vmul.f32 %v784, %v847
    %v1006 = vmul.f32 %v784, %v853
    %v1007 = vmul.f32 %v784, %v859
    %v1008 = vmul.f32 %v784, %v865
    %v1009 = vmul.f32 %v784, %v871
    %v1010 = vmul.f32 %v784, %v877
    %v1011 = vmul.f32 %v784, %v883
    %v1012 = vmul.f32 %v785, %v793
    %v1013 = vmul.f32 %v785, %v799
    %v1014 = vmul.f32 %v785, %v805
    %v1015 = vmul.f32 %v785, %v811
    %v1016 = vmul.f32 %v785, %v817
    %v1017 = vmul.f32 %v785, %v823
    %v1018 = vmul.f32 %v785, %v829
    %v1019 = vmul.f32 %v785, %v835
    %v1020 = vmul.f32 %v785, %v841
    %v1021 = vmul.f32 %v785, %v847
    %v1022 = vmul.f32 %v785, %v853
    %v1023 = vmul.f32 %v785, %v859
    %v1024 = vmul.f32 %v785, %v865
    %v1025 = vmul.f32 %v785, %v871
    %v1026 = vmul.f32 %v785, %v877
    %v1027 = vmul.f32 %v785, %v883
    %v1028 = vperm.slane %v755, 1
    %v1029 = vperm.slane %v758, 1
    %v1030 = vperm.slane %v761, 1
    %v1031 = vperm.slane %v764, 1
    %v1032 = vperm.slane %v767, 1
    %v1033 = vperm.slane %v770, 1
    %v1034 = vperm.slane %v773, 1
    %v1035 = vperm.slane %v776, 1
    %v1036 = vperm.slane %v777, 1
    %v1038 = vlaneseq
    %v1039 = vshrl.u32 %v1038, 7
    %1041 = vset.pattern.permute.xlu0 %v1039
    %1042 = vperm.xlu0 %1041, %v1036
    %v1043 = vpop.permute.xlu0 %1042
    %v1044 = vlaneseq
    %v1045 = vshrl.u32 %v1044, 7
    %v1046 = vadd.s32 %v1045, 8
    %1047 = vset.pattern.permute.xlu0 %v1046
    %1048 = vperm.xlu0 %1047, %v1036
    %v1049 = vpop.permute.xlu0 %1048
    %v1050 = vlaneseq
    %v1051 = vshrl.u32 %v1050, 7
    %v1052 = vadd.s32 %v1051, 16
    %1053 = vset.pattern.permute.xlu0 %v1052
    %1054 = vperm.xlu0 %1053, %v1036
    %v1055 = vpop.permute.xlu0 %1054
    %v1056 = vlaneseq
    %v1057 = vshrl.u32 %v1056, 7
    %v1058 = vadd.s32 %v1057, 24
    %1059 = vset.pattern.permute.xlu0 %v1058
    %1060 = vperm.xlu0 %1059, %v1036
    %v1061 = vpop.permute.xlu0 %1060
    %v1062 = vlaneseq
    %v1063 = vshrl.u32 %v1062, 7
    %v1064 = vadd.s32 %v1063, 32
    %1065 = vset.pattern.permute.xlu0 %v1064
    %1066 = vperm.xlu0 %1065, %v1036
    %v1067 = vpop.permute.xlu0 %1066
    %v1068 = vlaneseq
    %v1069 = vshrl.u32 %v1068, 7
    %v1070 = vadd.s32 %v1069, 40
    %1071 = vset.pattern.permute.xlu0 %v1070
    %1072 = vperm.xlu0 %1071, %v1036
    %v1073 = vpop.permute.xlu0 %1072
    %v1074 = vlaneseq
    %v1075 = vshrl.u32 %v1074, 7
    %v1076 = vadd.s32 %v1075, 48
    %1077 = vset.pattern.permute.xlu0 %v1076
    %1078 = vperm.xlu0 %1077, %v1036
    %v1079 = vpop.permute.xlu0 %1078
    %v1080 = vlaneseq
    %v1081 = vshrl.u32 %v1080, 7
    %v1082 = vadd.s32 %v1081, 56
    %1083 = vset.pattern.permute.xlu0 %v1082
    %1084 = vperm.xlu0 %1083, %v1036
    %v1085 = vpop.permute.xlu0 %1084
    %v1086 = vlaneseq
    %v1087 = vshrl.u32 %v1086, 7
    %v1088 = vadd.s32 %v1087, 64
    %1089 = vset.pattern.permute.xlu0 %v1088
    %1090 = vperm.xlu0 %1089, %v1036
    %v1091 = vpop.permute.xlu0 %1090
    %v1092 = vlaneseq
    %v1093 = vshrl.u32 %v1092, 7
    %v1094 = vadd.s32 %v1093, 72
    %1095 = vset.pattern.permute.xlu0 %v1094
    %1096 = vperm.xlu0 %1095, %v1036
    %v1097 = vpop.permute.xlu0 %1096
    %v1098 = vlaneseq
    %v1099 = vshrl.u32 %v1098, 7
    %v1100 = vadd.s32 %v1099, 80
    %1101 = vset.pattern.permute.xlu0 %v1100
    %1102 = vperm.xlu0 %1101, %v1036
    %v1103 = vpop.permute.xlu0 %1102
    %v1104 = vlaneseq
    %v1105 = vshrl.u32 %v1104, 7
    %v1106 = vadd.s32 %v1105, 88
    %1107 = vset.pattern.permute.xlu0 %v1106
    %1108 = vperm.xlu0 %1107, %v1036
    %v1109 = vpop.permute.xlu0 %1108
    %v1110 = vlaneseq
    %v1111 = vshrl.u32 %v1110, 7
    %v1112 = vadd.s32 %v1111, 96
    %1113 = vset.pattern.permute.xlu0 %v1112
    %1114 = vperm.xlu0 %1113, %v1036
    %v1115 = vpop.permute.xlu0 %1114
    %v1116 = vlaneseq
    %v1117 = vshrl.u32 %v1116, 7
    %v1118 = vadd.s32 %v1117, 104
    %1119 = vset.pattern.permute.xlu0 %v1118
    %1120 = vperm.xlu0 %1119, %v1036
    %v1121 = vpop.permute.xlu0 %1120
    %v1122 = vlaneseq
    %v1123 = vshrl.u32 %v1122, 7
    %v1124 = vadd.s32 %v1123, 112
    %1125 = vset.pattern.permute.xlu0 %v1124
    %1126 = vperm.xlu0 %1125, %v1036
    %v1127 = vpop.permute.xlu0 %1126
    %v1128 = vlaneseq
    %v1129 = vshrl.u32 %v1128, 7
    %v1130 = vadd.s32 %v1129, 120
    %1131 = vset.pattern.permute.xlu0 %v1130
    %1132 = vperm.xlu0 %1131, %v1036
    %v1133 = vpop.permute.xlu0 %1132
    %v1150 = vmul.f32 %v1028, %v1043
    %v1151 = vmul.f32 %v1028, %v1049
    %v1152 = vmul.f32 %v1028, %v1055
    %v1153 = vmul.f32 %v1028, %v1061
    %v1154 = vmul.f32 %v1028, %v1067
    %v1155 = vmul.f32 %v1028, %v1073
    %v1156 = vmul.f32 %v1028, %v1079
    %v1157 = vmul.f32 %v1028, %v1085
    %v1158 = vmul.f32 %v1028, %v1091
    %v1159 = vmul.f32 %v1028, %v1097
    %v1160 = vmul.f32 %v1028, %v1103
    %v1161 = vmul.f32 %v1028, %v1109
    %v1162 = vmul.f32 %v1028, %v1115
    %v1163 = vmul.f32 %v1028, %v1121
    %v1164 = vmul.f32 %v1028, %v1127
    %v1165 = vmul.f32 %v1028, %v1133
    %v1166 = vmul.f32 %v1029, %v1043
    %v1167 = vmul.f32 %v1029, %v1049
    %v1168 = vmul.f32 %v1029, %v1055
    %v1169 = vmul.f32 %v1029, %v1061
    %v1170 = vmul.f32 %v1029, %v1067
    %v1171 = vmul.f32 %v1029, %v1073
    %v1172 = vmul.f32 %v1029, %v1079
    %v1173 = vmul.f32 %v1029, %v1085
    %v1174 = vmul.f32 %v1029, %v1091
    %v1175 = vmul.f32 %v1029, %v1097
    %v1176 = vmul.f32 %v1029, %v1103
    %v1177 = vmul.f32 %v1029, %v1109
    %v1178 = vmul.f32 %v1029, %v1115
    %v1179 = vmul.f32 %v1029, %v1121
    %v1180 = vmul.f32 %v1029, %v1127
    %v1181 = vmul.f32 %v1029, %v1133
    %v1182 = vmul.f32 %v1030, %v1043
    %v1183 = vmul.f32 %v1030, %v1049
    %v1184 = vmul.f32 %v1030, %v1055
    %v1185 = vmul.f32 %v1030, %v1061
    %v1186 = vmul.f32 %v1030, %v1067
    %v1187 = vmul.f32 %v1030, %v1073
    %v1188 = vmul.f32 %v1030, %v1079
    %v1189 = vmul.f32 %v1030, %v1085
    %v1190 = vmul.f32 %v1030, %v1091
    %v1191 = vmul.f32 %v1030, %v1097
    %v1192 = vmul.f32 %v1030, %v1103
    %v1193 = vmul.f32 %v1030, %v1109
    %v1194 = vmul.f32 %v1030, %v1115
    %v1195 = vmul.f32 %v1030, %v1121
    %v1196 = vmul.f32 %v1030, %v1127
    %v1197 = vmul.f32 %v1030, %v1133
    %v1198 = vmul.f32 %v1031, %v1043
    %v1199 = vmul.f32 %v1031, %v1049
    %v1200 = vmul.f32 %v1031, %v1055
    %v1201 = vmul.f32 %v1031, %v1061
    %v1202 = vmul.f32 %v1031, %v1067
    %v1203 = vmul.f32 %v1031, %v1073
    %v1204 = vmul.f32 %v1031, %v1079
    %v1205 = vmul.f32 %v1031, %v1085
    %v1206 = vmul.f32 %v1031, %v1091
    %v1207 = vmul.f32 %v1031, %v1097
    %v1208 = vmul.f32 %v1031, %v1103
    %v1209 = vmul.f32 %v1031, %v1109
    %v1210 = vmul.f32 %v1031, %v1115
    %v1211 = vmul.f32 %v1031, %v1121
    %v1212 = vmul.f32 %v1031, %v1127
    %v1213 = vmul.f32 %v1031, %v1133
    %v1214 = vmul.f32 %v1032, %v1043
    %v1215 = vmul.f32 %v1032, %v1049
    %v1216 = vmul.f32 %v1032, %v1055
    %v1217 = vmul.f32 %v1032, %v1061
    %v1218 = vmul.f32 %v1032, %v1067
    %v1219 = vmul.f32 %v1032, %v1073
    %v1220 = vmul.f32 %v1032, %v1079
    %v1221 = vmul.f32 %v1032, %v1085
    %v1222 = vmul.f32 %v1032, %v1091
    %v1223 = vmul.f32 %v1032, %v1097
    %v1224 = vmul.f32 %v1032, %v1103
    %v1225 = vmul.f32 %v1032, %v1109
    %v1226 = vmul.f32 %v1032, %v1115
    %v1227 = vmul.f32 %v1032, %v1121
    %v1228 = vmul.f32 %v1032, %v1127
    %v1229 = vmul.f32 %v1032, %v1133
    %v1230 = vmul.f32 %v1033, %v1043
    %v1231 = vmul.f32 %v1033, %v1049
    %v1232 = vmul.f32 %v1033, %v1055
    %v1233 = vmul.f32 %v1033, %v1061
    %v1234 = vmul.f32 %v1033, %v1067
    %v1235 = vmul.f32 %v1033, %v1073
    %v1236 = vmul.f32 %v1033, %v1079
    %v1237 = vmul.f32 %v1033, %v1085
    %v1238 = vmul.f32 %v1033, %v1091
    %v1239 = vmul.f32 %v1033, %v1097
    %v1240 = vmul.f32 %v1033, %v1103
    %v1241 = vmul.f32 %v1033, %v1109
    %v1242 = vmul.f32 %v1033, %v1115
    %v1243 = vmul.f32 %v1033, %v1121
    %v1244 = vmul.f32 %v1033, %v1127
    %v1245 = vmul.f32 %v1033, %v1133
    %v1246 = vmul.f32 %v1034, %v1043
    %v1247 = vmul.f32 %v1034, %v1049
    %v1248 = vmul.f32 %v1034, %v1055
    %v1249 = vmul.f32 %v1034, %v1061
    %v1250 = vmul.f32 %v1034, %v1067
    %v1251 = vmul.f32 %v1034, %v1073
    %v1252 = vmul.f32 %v1034, %v1079
    %v1253 = vmul.f32 %v1034, %v1085
    %v1254 = vmul.f32 %v1034, %v1091
    %v1255 = vmul.f32 %v1034, %v1097
    %v1256 = vmul.f32 %v1034, %v1103
    %v1257 = vmul.f32 %v1034, %v1109
    %v1258 = vmul.f32 %v1034, %v1115
    %v1259 = vmul.f32 %v1034, %v1121
    %v1260 = vmul.f32 %v1034, %v1127
    %v1261 = vmul.f32 %v1034, %v1133
    %v1262 = vmul.f32 %v1035, %v1043
    %v1263 = vmul.f32 %v1035, %v1049
    %v1264 = vmul.f32 %v1035, %v1055
    %v1265 = vmul.f32 %v1035, %v1061
    %v1266 = vmul.f32 %v1035, %v1067
    %v1267 = vmul.f32 %v1035, %v1073
    %v1268 = vmul.f32 %v1035, %v1079
    %v1269 = vmul.f32 %v1035, %v1085
    %v1270 = vmul.f32 %v1035, %v1091
    %v1271 = vmul.f32 %v1035, %v1097
    %v1272 = vmul.f32 %v1035, %v1103
    %v1273 = vmul.f32 %v1035, %v1109
    %v1274 = vmul.f32 %v1035, %v1115
    %v1275 = vmul.f32 %v1035, %v1121
    %v1276 = vmul.f32 %v1035, %v1127
    %v1277 = vmul.f32 %v1035, %v1133
    %v1278 = vadd.f32 %v900, %v1150
    %v1279 = vadd.f32 %v901, %v1151
    %v1280 = vadd.f32 %v902, %v1152
    %v1281 = vadd.f32 %v903, %v1153
    %v1282 = vadd.f32 %v904, %v1154
    %v1283 = vadd.f32 %v905, %v1155
    %v1284 = vadd.f32 %v906, %v1156
    %v1285 = vadd.f32 %v907, %v1157
    %v1286 = vadd.f32 %v908, %v1158
    %v1287 = vadd.f32 %v909, %v1159
    %v1288 = vadd.f32 %v910, %v1160
    %v1289 = vadd.f32 %v911, %v1161
    %v1290 = vadd.f32 %v912, %v1162
    %v1291 = vadd.f32 %v913, %v1163
    %v1292 = vadd.f32 %v914, %v1164
    %v1293 = vadd.f32 %v915, %v1165
    %v1294 = vadd.f32 %v916, %v1166
    %v1295 = vadd.f32 %v917, %v1167
    %v1296 = vadd.f32 %v918, %v1168
    %v1297 = vadd.f32 %v919, %v1169
    %v1298 = vadd.f32 %v920, %v1170
    %v1299 = vadd.f32 %v921, %v1171
    %v1300 = vadd.f32 %v922, %v1172
    %v1301 = vadd.f32 %v923, %v1173
    %v1302 = vadd.f32 %v924, %v1174
    %v1303 = vadd.f32 %v925, %v1175
    %v1304 = vadd.f32 %v926, %v1176
    %v1305 = vadd.f32 %v927, %v1177
    %v1306 = vadd.f32 %v928, %v1178
    %v1307 = vadd.f32 %v929, %v1179
    %v1308 = vadd.f32 %v930, %v1180
    %v1309 = vadd.f32 %v931, %v1181
    %v1310 = vadd.f32 %v932, %v1182
    %v1311 = vadd.f32 %v933, %v1183
    %v1312 = vadd.f32 %v934, %v1184
    %v1313 = vadd.f32 %v935, %v1185
    %v1314 = vadd.f32 %v936, %v1186
    %v1315 = vadd.f32 %v937, %v1187
    %v1316 = vadd.f32 %v938, %v1188
    %v1317 = vadd.f32 %v939, %v1189
    %v1318 = vadd.f32 %v940, %v1190
    %v1319 = vadd.f32 %v941, %v1191
    %v1320 = vadd.f32 %v942, %v1192
    %v1321 = vadd.f32 %v943, %v1193
    %v1322 = vadd.f32 %v944, %v1194
    %v1323 = vadd.f32 %v945, %v1195
    %v1324 = vadd.f32 %v946, %v1196
    %v1325 = vadd.f32 %v947, %v1197
    %v1326 = vadd.f32 %v948, %v1198
    %v1327 = vadd.f32 %v949, %v1199
    %v1328 = vadd.f32 %v950, %v1200
    %v1329 = vadd.f32 %v951, %v1201
    %v1330 = vadd.f32 %v952, %v1202
    %v1331 = vadd.f32 %v953, %v1203
    %v1332 = vadd.f32 %v954, %v1204
    %v1333 = vadd.f32 %v955, %v1205
    %v1334 = vadd.f32 %v956, %v1206
    %v1335 = vadd.f32 %v957, %v1207
    %v1336 = vadd.f32 %v958, %v1208
    %v1337 = vadd.f32 %v959, %v1209
    %v1338 = vadd.f32 %v960, %v1210
    %v1339 = vadd.f32 %v961, %v1211
    %v1340 = vadd.f32 %v962, %v1212
    %v1341 = vadd.f32 %v963, %v1213
    %v1342 = vadd.f32 %v964, %v1214
    %v1343 = vadd.f32 %v965, %v1215
    %v1344 = vadd.f32 %v966, %v1216
    %v1345 = vadd.f32 %v967, %v1217
    %v1346 = vadd.f32 %v968, %v1218
    %v1347 = vadd.f32 %v969, %v1219
    %v1348 = vadd.f32 %v970, %v1220
    %v1349 = vadd.f32 %v971, %v1221
    %v1350 = vadd.f32 %v972, %v1222
    %v1351 = vadd.f32 %v973, %v1223
    %v1352 = vadd.f32 %v974, %v1224
    %v1353 = vadd.f32 %v975, %v1225
    %v1354 = vadd.f32 %v976, %v1226
    %v1355 = vadd.f32 %v977, %v1227
    %v1356 = vadd.f32 %v978, %v1228
    %v1357 = vadd.f32 %v979, %v1229
    %v1358 = vadd.f32 %v980, %v1230
    %v1359 = vadd.f32 %v981, %v1231
    %v1360 = vadd.f32 %v982, %v1232
    %v1361 = vadd.f32 %v983, %v1233
    %v1362 = vadd.f32 %v984, %v1234
    %v1363 = vadd.f32 %v985, %v1235
    %v1364 = vadd.f32 %v986, %v1236
    %v1365 = vadd.f32 %v987, %v1237
    %v1366 = vadd.f32 %v988, %v1238
    %v1367 = vadd.f32 %v989, %v1239
    %v1368 = vadd.f32 %v990, %v1240
    %v1369 = vadd.f32 %v991, %v1241
    %v1370 = vadd.f32 %v992, %v1242
    %v1371 = vadd.f32 %v993, %v1243
    %v1372 = vadd.f32 %v994, %v1244
    %v1373 = vadd.f32 %v995, %v1245
    %v1374 = vadd.f32 %v996, %v1246
    %v1375 = vadd.f32 %v997, %v1247
    %v1376 = vadd.f32 %v998, %v1248
    %v1377 = vadd.f32 %v999, %v1249
    %v1378 = vadd.f32 %v1000, %v1250
    %v1379 = vadd.f32 %v1001, %v1251
    %v1380 = vadd.f32 %v1002, %v1252
    %v1381 = vadd.f32 %v1003, %v1253
    %v1382 = vadd.f32 %v1004, %v1254
    %v1383 = vadd.f32 %v1005, %v1255
    %v1384 = vadd.f32 %v1006, %v1256
    %v1385 = vadd.f32 %v1007, %v1257
    %v1386 = vadd.f32 %v1008, %v1258
    %v1387 = vadd.f32 %v1009, %v1259
    %v1388 = vadd.f32 %v1010, %v1260
    %v1389 = vadd.f32 %v1011, %v1261
    %v1390 = vadd.f32 %v1012, %v1262
    %v1391 = vadd.f32 %v1013, %v1263
    %v1392 = vadd.f32 %v1014, %v1264
    %v1393 = vadd.f32 %v1015, %v1265
    %v1394 = vadd.f32 %v1016, %v1266
    %v1395 = vadd.f32 %v1017, %v1267
    %v1396 = vadd.f32 %v1018, %v1268
    %v1397 = vadd.f32 %v1019, %v1269
    %v1398 = vadd.f32 %v1020, %v1270
    %v1399 = vadd.f32 %v1021, %v1271
    %v1400 = vadd.f32 %v1022, %v1272
    %v1401 = vadd.f32 %v1023, %v1273
    %v1402 = vadd.f32 %v1024, %v1274
    %v1403 = vadd.f32 %v1025, %v1275
    %v1404 = vadd.f32 %v1026, %v1276
    %v1405 = vadd.f32 %v1027, %v1277
    %vm1406 = vcmp.ge.f32.partialorder %v1278, 0.0
    %vm1407 = vcmp.ge.f32.partialorder %v1279, 0.0
    %vm1408 = vcmp.ge.f32.partialorder %v1280, 0.0
    %vm1409 = vcmp.ge.f32.partialorder %v1281, 0.0
    %vm1410 = vcmp.ge.f32.partialorder %v1282, 0.0
    %vm1411 = vcmp.ge.f32.partialorder %v1283, 0.0
    %vm1412 = vcmp.ge.f32.partialorder %v1284, 0.0
    %vm1413 = vcmp.ge.f32.partialorder %v1285, 0.0
    %vm1414 = vcmp.ge.f32.partialorder %v1286, 0.0
    %vm1415 = vcmp.ge.f32.partialorder %v1287, 0.0
    %vm1416 = vcmp.ge.f32.partialorder %v1288, 0.0
    %vm1417 = vcmp.ge.f32.partialorder %v1289, 0.0
    %vm1418 = vcmp.ge.f32.partialorder %v1290, 0.0
    %vm1419 = vcmp.ge.f32.partialorder %v1291, 0.0
    %vm1420 = vcmp.ge.f32.partialorder %v1292, 0.0
    %vm1421 = vcmp.ge.f32.partialorder %v1293, 0.0
    %vm1422 = vcmp.ge.f32.partialorder %v1294, 0.0
    %vm1423 = vcmp.ge.f32.partialorder %v1295, 0.0
    %vm1424 = vcmp.ge.f32.partialorder %v1296, 0.0
    %vm1425 = vcmp.ge.f32.partialorder %v1297, 0.0
    %vm1426 = vcmp.ge.f32.partialorder %v1298, 0.0
    %vm1427 = vcmp.ge.f32.partialorder %v1299, 0.0
    %vm1428 = vcmp.ge.f32.partialorder %v1300, 0.0
    %vm1429 = vcmp.ge.f32.partialorder %v1301, 0.0
    %vm1430 = vcmp.ge.f32.partialorder %v1302, 0.0
    %vm1431 = vcmp.ge.f32.partialorder %v1303, 0.0
    %vm1432 = vcmp.ge.f32.partialorder %v1304, 0.0
    %vm1433 = vcmp.ge.f32.partialorder %v1305, 0.0
    %vm1434 = vcmp.ge.f32.partialorder %v1306, 0.0
    %vm1435 = vcmp.ge.f32.partialorder %v1307, 0.0
    %vm1436 = vcmp.ge.f32.partialorder %v1308, 0.0
    %vm1437 = vcmp.ge.f32.partialorder %v1309, 0.0
    %vm1438 = vcmp.ge.f32.partialorder %v1310, 0.0
    %vm1439 = vcmp.ge.f32.partialorder %v1311, 0.0
    %vm1440 = vcmp.ge.f32.partialorder %v1312, 0.0
    %vm1441 = vcmp.ge.f32.partialorder %v1313, 0.0
    %vm1442 = vcmp.ge.f32.partialorder %v1314, 0.0
    %vm1443 = vcmp.ge.f32.partialorder %v1315, 0.0
    %vm1444 = vcmp.ge.f32.partialorder %v1316, 0.0
    %vm1445 = vcmp.ge.f32.partialorder %v1317, 0.0
    %vm1446 = vcmp.ge.f32.partialorder %v1318, 0.0
    %vm1447 = vcmp.ge.f32.partialorder %v1319, 0.0
    %vm1448 = vcmp.ge.f32.partialorder %v1320, 0.0
    %vm1449 = vcmp.ge.f32.partialorder %v1321, 0.0
    %vm1450 = vcmp.ge.f32.partialorder %v1322, 0.0
    %vm1451 = vcmp.ge.f32.partialorder %v1323, 0.0
    %vm1452 = vcmp.ge.f32.partialorder %v1324, 0.0
    %vm1453 = vcmp.ge.f32.partialorder %v1325, 0.0
    %vm1454 = vcmp.ge.f32.partialorder %v1326, 0.0
    %vm1455 = vcmp.ge.f32.partialorder %v1327, 0.0
    %vm1456 = vcmp.ge.f32.partialorder %v1328, 0.0
    %vm1457 = vcmp.ge.f32.partialorder %v1329, 0.0
    %vm1458 = vcmp.ge.f32.partialorder %v1330, 0.0
    %vm1459 = vcmp.ge.f32.partialorder %v1331, 0.0
    %vm1460 = vcmp.ge.f32.partialorder %v1332, 0.0
    %vm1461 = vcmp.ge.f32.partialorder %v1333, 0.0
    %vm1462 = vcmp.ge.f32.partialorder %v1334, 0.0
    %vm1463 = vcmp.ge.f32.partialorder %v1335, 0.0
    %vm1464 = vcmp.ge.f32.partialorder %v1336, 0.0
    %vm1465 = vcmp.ge.f32.partialorder %v1337, 0.0
    %vm1466 = vcmp.ge.f32.partialorder %v1338, 0.0
    %vm1467 = vcmp.ge.f32.partialorder %v1339, 0.0
    %vm1468 = vcmp.ge.f32.partialorder %v1340, 0.0
    %vm1469 = vcmp.ge.f32.partialorder %v1341, 0.0
    %vm1470 = vcmp.ge.f32.partialorder %v1342, 0.0
    %vm1471 = vcmp.ge.f32.partialorder %v1343, 0.0
    %vm1472 = vcmp.ge.f32.partialorder %v1344, 0.0
    %vm1473 = vcmp.ge.f32.partialorder %v1345, 0.0
    %vm1474 = vcmp.ge.f32.partialorder %v1346, 0.0
    %vm1475 = vcmp.ge.f32.partialorder %v1347, 0.0
    %vm1476 = vcmp.ge.f32.partialorder %v1348, 0.0
    %vm1477 = vcmp.ge.f32.partialorder %v1349, 0.0
    %vm1478 = vcmp.ge.f32.partialorder %v1350, 0.0
    %vm1479 = vcmp.ge.f32.partialorder %v1351, 0.0
    %vm1480 = vcmp.ge.f32.partialorder %v1352, 0.0
    %vm1481 = vcmp.ge.f32.partialorder %v1353, 0.0
    %vm1482 = vcmp.ge.f32.partialorder %v1354, 0.0
    %vm1483 = vcmp.ge.f32.partialorder %v1355, 0.0
    %vm1484 = vcmp.ge.f32.partialorder %v1356, 0.0
    %vm1485 = vcmp.ge.f32.partialorder %v1357, 0.0
    %vm1486 = vcmp.ge.f32.partialorder %v1358, 0.0
    %vm1487 = vcmp.ge.f32.partialorder %v1359, 0.0
    %vm1488 = vcmp.ge.f32.partialorder %v1360, 0.0
    %vm1489 = vcmp.ge.f32.partialorder %v1361, 0.0
    %vm1490 = vcmp.ge.f32.partialorder %v1362, 0.0
    %vm1491 = vcmp.ge.f32.partialorder %v1363, 0.0
    %vm1492 = vcmp.ge.f32.partialorder %v1364, 0.0
    %vm1493 = vcmp.ge.f32.partialorder %v1365, 0.0
    %vm1494 = vcmp.ge.f32.partialorder %v1366, 0.0
    %vm1495 = vcmp.ge.f32.partialorder %v1367, 0.0
    %vm1496 = vcmp.ge.f32.partialorder %v1368, 0.0
    %vm1497 = vcmp.ge.f32.partialorder %v1369, 0.0
    %vm1498 = vcmp.ge.f32.partialorder %v1370, 0.0
    %vm1499 = vcmp.ge.f32.partialorder %v1371, 0.0
    %vm1500 = vcmp.ge.f32.partialorder %v1372, 0.0
    %vm1501 = vcmp.ge.f32.partialorder %v1373, 0.0
    %vm1502 = vcmp.ge.f32.partialorder %v1374, 0.0
    %vm1503 = vcmp.ge.f32.partialorder %v1375, 0.0
    %vm1504 = vcmp.ge.f32.partialorder %v1376, 0.0
    %vm1505 = vcmp.ge.f32.partialorder %v1377, 0.0
    %vm1506 = vcmp.ge.f32.partialorder %v1378, 0.0
    %vm1507 = vcmp.ge.f32.partialorder %v1379, 0.0
    %vm1508 = vcmp.ge.f32.partialorder %v1380, 0.0
    %vm1509 = vcmp.ge.f32.partialorder %v1381, 0.0
    %vm1510 = vcmp.ge.f32.partialorder %v1382, 0.0
    %vm1511 = vcmp.ge.f32.partialorder %v1383, 0.0
    %vm1512 = vcmp.ge.f32.partialorder %v1384, 0.0
    %vm1513 = vcmp.ge.f32.partialorder %v1385, 0.0
    %vm1514 = vcmp.ge.f32.partialorder %v1386, 0.0
    %vm1515 = vcmp.ge.f32.partialorder %v1387, 0.0
    %vm1516 = vcmp.ge.f32.partialorder %v1388, 0.0
    %vm1517 = vcmp.ge.f32.partialorder %v1389, 0.0
    %vm1518 = vcmp.ge.f32.partialorder %v1390, 0.0
    %vm1519 = vcmp.ge.f32.partialorder %v1391, 0.0
    %vm1520 = vcmp.ge.f32.partialorder %v1392, 0.0
    %vm1521 = vcmp.ge.f32.partialorder %v1393, 0.0
    %vm1522 = vcmp.ge.f32.partialorder %v1394, 0.0
    %vm1523 = vcmp.ge.f32.partialorder %v1395, 0.0
    %vm1524 = vcmp.ge.f32.partialorder %v1396, 0.0
    %vm1525 = vcmp.ge.f32.partialorder %v1397, 0.0
    %vm1526 = vcmp.ge.f32.partialorder %v1398, 0.0
    %vm1527 = vcmp.ge.f32.partialorder %v1399, 0.0
    %vm1528 = vcmp.ge.f32.partialorder %v1400, 0.0
    %vm1529 = vcmp.ge.f32.partialorder %v1401, 0.0
    %vm1530 = vcmp.ge.f32.partialorder %v1402, 0.0
    %vm1531 = vcmp.ge.f32.partialorder %v1403, 0.0
    %vm1532 = vcmp.ge.f32.partialorder %v1404, 0.0
    %vm1533 = vcmp.ge.f32.partialorder %v1405, 0.0
    %v1534 = vmul.f32 %v1278, 0.01
    %v1535 = vmul.f32 %v1279, 0.01
    %v1536 = vmul.f32 %v1280, 0.01
    %v1537 = vmul.f32 %v1281, 0.01
    %v1538 = vmul.f32 %v1282, 0.01
    %v1539 = vmul.f32 %v1283, 0.01
    %v1540 = vmul.f32 %v1284, 0.01
    %v1541 = vmul.f32 %v1285, 0.01
    %v1542 = vmul.f32 %v1286, 0.01
    %v1543 = vmul.f32 %v1287, 0.01
    %v1544 = vmul.f32 %v1288, 0.01
    %v1545 = vmul.f32 %v1289, 0.01
    %v1546 = vmul.f32 %v1290, 0.01
    %v1547 = vmul.f32 %v1291, 0.01
    %v1548 = vmul.f32 %v1292, 0.01
    %v1549 = vmul.f32 %v1293, 0.01
    %v1550 = vmul.f32 %v1294, 0.01
    %v1551 = vmul.f32 %v1295, 0.01
    %v1552 = vmul.f32 %v1296, 0.01
    %v1553 = vmul.f32 %v1297, 0.01
    %v1554 = vmul.f32 %v1298, 0.01
    %v1555 = vmul.f32 %v1299, 0.01
    %v1556 = vmul.f32 %v1300, 0.01
    %v1557 = vmul.f32 %v1301, 0.01
    %v1558 = vmul.f32 %v1302, 0.01
    %v1559 = vmul.f32 %v1303, 0.01
    %v1560 = vmul.f32 %v1304, 0.01
    %v1561 = vmul.f32 %v1305, 0.01
    %v1562 = vmul.f32 %v1306, 0.01
    %v1563 = vmul.f32 %v1307, 0.01
    %v1564 = vmul.f32 %v1308, 0.01
    %v1565 = vmul.f32 %v1309, 0.01
    %v1566 = vmul.f32 %v1310, 0.01
    %v1567 = vmul.f32 %v1311, 0.01
    %v1568 = vmul.f32 %v1312, 0.01
    %v1569 = vmul.f32 %v1313, 0.01
    %v1570 = vmul.f32 %v1314, 0.01
    %v1571 = vmul.f32 %v1315, 0.01
    %v1572 = vmul.f32 %v1316, 0.01
    %v1573 = vmul.f32 %v1317, 0.01
    %v1574 = vmul.f32 %v1318, 0.01
    %v1575 = vmul.f32 %v1319, 0.01
    %v1576 = vmul.f32 %v1320, 0.01
    %v1577 = vmul.f32 %v1321, 0.01
    %v1578 = vmul.f32 %v1322, 0.01
    %v1579 = vmul.f32 %v1323, 0.01
    %v1580 = vmul.f32 %v1324, 0.01
    %v1581 = vmul.f32 %v1325, 0.01
    %v1582 = vmul.f32 %v1326, 0.01
    %v1583 = vmul.f32 %v1327, 0.01
    %v1584 = vmul.f32 %v1328, 0.01
    %v1585 = vmul.f32 %v1329, 0.01
    %v1586 = vmul.f32 %v1330, 0.01
    %v1587 = vmul.f32 %v1331, 0.01
    %v1588 = vmul.f32 %v1332, 0.01
    %v1589 = vmul.f32 %v1333, 0.01
    %v1590 = vmul.f32 %v1334, 0.01
    %v1591 = vmul.f32 %v1335, 0.01
    %v1592 = vmul.f32 %v1336, 0.01
    %v1593 = vmul.f32 %v1337, 0.01
    %v1594 = vmul.f32 %v1338, 0.01
    %v1595 = vmul.f32 %v1339, 0.01
    %v1596 = vmul.f32 %v1340, 0.01
    %v1597 = vmul.f32 %v1341, 0.01
    %v1598 = vmul.f32 %v1342, 0.01
    %v1599 = vmul.f32 %v1343, 0.01
    %v1600 = vmul.f32 %v1344, 0.01
    %v1601 = vmul.f32 %v1345, 0.01
    %v1602 = vmul.f32 %v1346, 0.01
    %v1603 = vmul.f32 %v1347, 0.01
    %v1604 = vmul.f32 %v1348, 0.01
    %v1605 = vmul.f32 %v1349, 0.01
    %v1606 = vmul.f32 %v1350, 0.01
    %v1607 = vmul.f32 %v1351, 0.01
    %v1608 = vmul.f32 %v1352, 0.01
    %v1609 = vmul.f32 %v1353, 0.01
    %v1610 = vmul.f32 %v1354, 0.01
    %v1611 = vmul.f32 %v1355, 0.01
    %v1612 = vmul.f32 %v1356, 0.01
    %v1613 = vmul.f32 %v1357, 0.01
    %v1614 = vmul.f32 %v1358, 0.01
    %v1615 = vmul.f32 %v1359, 0.01
    %v1616 = vmul.f32 %v1360, 0.01
    %v1617 = vmul.f32 %v1361, 0.01
    %v1618 = vmul.f32 %v1362, 0.01
    %v1619 = vmul.f32 %v1363, 0.01
    %v1620 = vmul.f32 %v1364, 0.01
    %v1621 = vmul.f32 %v1365, 0.01
    %v1622 = vmul.f32 %v1366, 0.01
    %v1623 = vmul.f32 %v1367, 0.01
    %v1624 = vmul.f32 %v1368, 0.01
    %v1625 = vmul.f32 %v1369, 0.01
    %v1626 = vmul.f32 %v1370, 0.01
    %v1627 = vmul.f32 %v1371, 0.01
    %v1628 = vmul.f32 %v1372, 0.01
    %v1629 = vmul.f32 %v1373, 0.01
    %v1630 = vmul.f32 %v1374, 0.01
    %v1631 = vmul.f32 %v1375, 0.01
    %v1632 = vmul.f32 %v1376, 0.01
    %v1633 = vmul.f32 %v1377, 0.01
    %v1634 = vmul.f32 %v1378, 0.01
    %v1635 = vmul.f32 %v1379, 0.01
    %v1636 = vmul.f32 %v1380, 0.01
    %v1637 = vmul.f32 %v1381, 0.01
    %v1638 = vmul.f32 %v1382, 0.01
    %v1639 = vmul.f32 %v1383, 0.01
    %v1640 = vmul.f32 %v1384, 0.01
    %v1641 = vmul.f32 %v1385, 0.01
    %v1642 = vmul.f32 %v1386, 0.01
    %v1643 = vmul.f32 %v1387, 0.01
    %v1644 = vmul.f32 %v1388, 0.01
    %v1645 = vmul.f32 %v1389, 0.01
    %v1646 = vmul.f32 %v1390, 0.01
    %v1647 = vmul.f32 %v1391, 0.01
    %v1648 = vmul.f32 %v1392, 0.01
    %v1649 = vmul.f32 %v1393, 0.01
    %v1650 = vmul.f32 %v1394, 0.01
    %v1651 = vmul.f32 %v1395, 0.01
    %v1652 = vmul.f32 %v1396, 0.01
    %v1653 = vmul.f32 %v1397, 0.01
    %v1654 = vmul.f32 %v1398, 0.01
    %v1655 = vmul.f32 %v1399, 0.01
    %v1656 = vmul.f32 %v1400, 0.01
    %v1657 = vmul.f32 %v1401, 0.01
    %v1658 = vmul.f32 %v1402, 0.01
    %v1659 = vmul.f32 %v1403, 0.01
    %v1660 = vmul.f32 %v1404, 0.01
    %v1661 = vmul.f32 %v1405, 0.01
    %v1662 = vsel %vm1406, %v1278, %v1534
    %v1663 = vsel %vm1407, %v1279, %v1535
    %v1664 = vsel %vm1408, %v1280, %v1536
    %v1665 = vsel %vm1409, %v1281, %v1537
    %v1666 = vsel %vm1410, %v1282, %v1538
    %v1667 = vsel %vm1411, %v1283, %v1539
    %v1668 = vsel %vm1412, %v1284, %v1540
    %v1669 = vsel %vm1413, %v1285, %v1541
    %v1670 = vsel %vm1414, %v1286, %v1542
    %v1671 = vsel %vm1415, %v1287, %v1543
    %v1672 = vsel %vm1416, %v1288, %v1544
    %v1673 = vsel %vm1417, %v1289, %v1545
    %v1674 = vsel %vm1418, %v1290, %v1546
    %v1675 = vsel %vm1419, %v1291, %v1547
    %v1676 = vsel %vm1420, %v1292, %v1548
    %v1677 = vsel %vm1421, %v1293, %v1549
    %v1678 = vsel %vm1422, %v1294, %v1550
    %v1679 = vsel %vm1423, %v1295, %v1551
    %v1680 = vsel %vm1424, %v1296, %v1552
    %v1681 = vsel %vm1425, %v1297, %v1553
    %v1682 = vsel %vm1426, %v1298, %v1554
    %v1683 = vsel %vm1427, %v1299, %v1555
    %v1684 = vsel %vm1428, %v1300, %v1556
    %v1685 = vsel %vm1429, %v1301, %v1557
    %v1686 = vsel %vm1430, %v1302, %v1558
    %v1687 = vsel %vm1431, %v1303, %v1559
    %v1688 = vsel %vm1432, %v1304, %v1560
    %v1689 = vsel %vm1433, %v1305, %v1561
    %v1690 = vsel %vm1434, %v1306, %v1562
    %v1691 = vsel %vm1435, %v1307, %v1563
    %v1692 = vsel %vm1436, %v1308, %v1564
    %v1693 = vsel %vm1437, %v1309, %v1565
    %v1694 = vsel %vm1438, %v1310, %v1566
    %v1695 = vsel %vm1439, %v1311, %v1567
    %v1696 = vsel %vm1440, %v1312, %v1568
    %v1697 = vsel %vm1441, %v1313, %v1569
    %v1698 = vsel %vm1442, %v1314, %v1570
    %v1699 = vsel %vm1443, %v1315, %v1571
    %v1700 = vsel %vm1444, %v1316, %v1572
    %v1701 = vsel %vm1445, %v1317, %v1573
    %v1702 = vsel %vm1446, %v1318, %v1574
    %v1703 = vsel %vm1447, %v1319, %v1575
    %v1704 = vsel %vm1448, %v1320, %v1576
    %v1705 = vsel %vm1449, %v1321, %v1577
    %v1706 = vsel %vm1450, %v1322, %v1578
    %v1707 = vsel %vm1451, %v1323, %v1579
    %v1708 = vsel %vm1452, %v1324, %v1580
    %v1709 = vsel %vm1453, %v1325, %v1581
    %v1710 = vsel %vm1454, %v1326, %v1582
    %v1711 = vsel %vm1455, %v1327, %v1583
    %v1712 = vsel %vm1456, %v1328, %v1584
    %v1713 = vsel %vm1457, %v1329, %v1585
    %v1714 = vsel %vm1458, %v1330, %v1586
    %v1715 = vsel %vm1459, %v1331, %v1587
    %v1716 = vsel %vm1460, %v1332, %v1588
    %v1717 = vsel %vm1461, %v1333, %v1589
    %v1718 = vsel %vm1462, %v1334, %v1590
    %v1719 = vsel %vm1463, %v1335, %v1591
    %v1720 = vsel %vm1464, %v1336, %v1592
    %v1721 = vsel %vm1465, %v1337, %v1593
    %v1722 = vsel %vm1466, %v1338, %v1594
    %v1723 = vsel %vm1467, %v1339, %v1595
    %v1724 = vsel %vm1468, %v1340, %v1596
    %v1725 = vsel %vm1469, %v1341, %v1597
    %v1726 = vsel %vm1470, %v1342, %v1598
    %v1727 = vsel %vm1471, %v1343, %v1599
    %v1728 = vsel %vm1472, %v1344, %v1600
    %v1729 = vsel %vm1473, %v1345, %v1601
    %v1730 = vsel %vm1474, %v1346, %v1602
    %v1731 = vsel %vm1475, %v1347, %v1603
    %v1732 = vsel %vm1476, %v1348, %v1604
    %v1733 = vsel %vm1477, %v1349, %v1605
    %v1734 = vsel %vm1478, %v1350, %v1606
    %v1735 = vsel %vm1479, %v1351, %v1607
    %v1736 = vsel %vm1480, %v1352, %v1608
    %v1737 = vsel %vm1481, %v1353, %v1609
    %v1738 = vsel %vm1482, %v1354, %v1610
    %v1739 = vsel %vm1483, %v1355, %v1611
    %v1740 = vsel %vm1484, %v1356, %v1612
    %v1741 = vsel %vm1485, %v1357, %v1613
    %v1742 = vsel %vm1486, %v1358, %v1614
    %v1743 = vsel %vm1487, %v1359, %v1615
    %v1744 = vsel %vm1488, %v1360, %v1616
    %v1745 = vsel %vm1489, %v1361, %v1617
    %v1746 = vsel %vm1490, %v1362, %v1618
    %v1747 = vsel %vm1491, %v1363, %v1619
    %v1748 = vsel %vm1492, %v1364, %v1620
    %v1749 = vsel %vm1493, %v1365, %v1621
    %v1750 = vsel %vm1494, %v1366, %v1622
    %v1751 = vsel %vm1495, %v1367, %v1623
    %v1752 = vsel %vm1496, %v1368, %v1624
    %v1753 = vsel %vm1497, %v1369, %v1625
    %v1754 = vsel %vm1498, %v1370, %v1626
    %v1755 = vsel %vm1499, %v1371, %v1627
    %v1756 = vsel %vm1500, %v1372, %v1628
    %v1757 = vsel %vm1501, %v1373, %v1629
    %v1758 = vsel %vm1502, %v1374, %v1630
    %v1759 = vsel %vm1503, %v1375, %v1631
    %v1760 = vsel %vm1504, %v1376, %v1632
    %v1761 = vsel %vm1505, %v1377, %v1633
    %v1762 = vsel %vm1506, %v1378, %v1634
    %v1763 = vsel %vm1507, %v1379, %v1635
    %v1764 = vsel %vm1508, %v1380, %v1636
    %v1765 = vsel %vm1509, %v1381, %v1637
    %v1766 = vsel %vm1510, %v1382, %v1638
    %v1767 = vsel %vm1511, %v1383, %v1639
    %v1768 = vsel %vm1512, %v1384, %v1640
    %v1769 = vsel %vm1513, %v1385, %v1641
    %v1770 = vsel %vm1514, %v1386, %v1642
    %v1771 = vsel %vm1515, %v1387, %v1643
    %v1772 = vsel %vm1516, %v1388, %v1644
    %v1773 = vsel %vm1517, %v1389, %v1645
    %v1774 = vsel %vm1518, %v1390, %v1646
    %v1775 = vsel %vm1519, %v1391, %v1647
    %v1776 = vsel %vm1520, %v1392, %v1648
    %v1777 = vsel %vm1521, %v1393, %v1649
    %v1778 = vsel %vm1522, %v1394, %v1650
    %v1779 = vsel %vm1523, %v1395, %v1651
    %v1780 = vsel %vm1524, %v1396, %v1652
    %v1781 = vsel %vm1525, %v1397, %v1653
    %v1782 = vsel %vm1526, %v1398, %v1654
    %v1783 = vsel %vm1527, %v1399, %v1655
    %v1784 = vsel %vm1528, %v1400, %v1656
    %v1785 = vsel %vm1529, %v1401, %v1657
    %v1786 = vsel %vm1530, %v1402, %v1658
    %v1787 = vsel %vm1531, %v1403, %v1659
    %v1788 = vsel %vm1532, %v1404, %v1660
    %v1789 = vsel %vm1533, %v1405, %v1661
    %v1790 = vld [vmem:[%s7] sm:$0x7]
    %v1791 = vpack.c.bf16 %v1663, %v1662
    %v1792 = vpack.c.bf16 %v1665, %v1664
    %v1793 = vpack.c.bf16 %v1667, %v1666
    %v1794 = vpack.c.bf16 %v1669, %v1668
    %v1795 = vpack.c.bf16 %v1671, %v1670
    %v1796 = vpack.c.bf16 %v1673, %v1672
    %v1797 = vpack.c.bf16 %v1675, %v1674
    %v1798 = vpack.c.bf16 %v1677, %v1676
    %v1799 = vpack.c.bf16 %v1679, %v1678
    %v1800 = vpack.c.bf16 %v1681, %v1680
    %v1801 = vpack.c.bf16 %v1683, %v1682
    %v1802 = vpack.c.bf16 %v1685, %v1684
    %v1803 = vpack.c.bf16 %v1687, %v1686
    %v1804 = vpack.c.bf16 %v1689, %v1688
    %v1805 = vpack.c.bf16 %v1691, %v1690
    %v1806 = vpack.c.bf16 %v1693, %v1692
    %v1807 = vpack.c.bf16 %v1695, %v1694
    %v1808 = vpack.c.bf16 %v1697, %v1696
    %v1809 = vpack.c.bf16 %v1699, %v1698
    %v1810 = vpack.c.bf16 %v1701, %v1700
    %v1811 = vpack.c.bf16 %v1703, %v1702
    %v1812 = vpack.c.bf16 %v1705, %v1704
    %v1813 = vpack.c.bf16 %v1707, %v1706
    %v1814 = vpack.c.bf16 %v1709, %v1708
    %v1815 = vpack.c.bf16 %v1711, %v1710
    %v1816 = vpack.c.bf16 %v1713, %v1712
    %v1817 = vpack.c.bf16 %v1715, %v1714
    %v1818 = vpack.c.bf16 %v1717, %v1716
    %v1819 = vpack.c.bf16 %v1719, %v1718
    %v1820 = vpack.c.bf16 %v1721, %v1720
    %v1821 = vpack.c.bf16 %v1723, %v1722
    %v1822 = vpack.c.bf16 %v1725, %v1724
    %v1823 = vpack.c.bf16 %v1727, %v1726
    %v1824 = vpack.c.bf16 %v1729, %v1728
    %v1825 = vpack.c.bf16 %v1731, %v1730
    %v1826 = vpack.c.bf16 %v1733, %v1732
    %v1827 = vpack.c.bf16 %v1735, %v1734
    %v1828 = vpack.c.bf16 %v1737, %v1736
    %v1829 = vpack.c.bf16 %v1739, %v1738
    %v1830 = vpack.c.bf16 %v1741, %v1740
    %v1831 = vpack.c.bf16 %v1743, %v1742
    %v1832 = vpack.c.bf16 %v1745, %v1744
    %v1833 = vpack.c.bf16 %v1747, %v1746
    %v1834 = vpack.c.bf16 %v1749, %v1748
    %v1835 = vpack.c.bf16 %v1751, %v1750
    %v1836 = vpack.c.bf16 %v1753, %v1752
    %v1837 = vpack.c.bf16 %v1755, %v1754
    %v1838 = vpack.c.bf16 %v1757, %v1756
    %v1839 = vpack.c.bf16 %v1759, %v1758
    %v1840 = vpack.c.bf16 %v1761, %v1760
    %v1841 = vpack.c.bf16 %v1763, %v1762
    %v1842 = vpack.c.bf16 %v1765, %v1764
    %v1843 = vpack.c.bf16 %v1767, %v1766
    %v1844 = vpack.c.bf16 %v1769, %v1768
    %v1845 = vpack.c.bf16 %v1771, %v1770
    %v1846 = vpack.c.bf16 %v1773, %v1772
    %v1847 = vpack.c.bf16 %v1775, %v1774
    %v1848 = vpack.c.bf16 %v1777, %v1776
    %v1849 = vpack.c.bf16 %v1779, %v1778
    %v1850 = vpack.c.bf16 %v1781, %v1780
    %v1851 = vpack.c.bf16 %v1783, %v1782
    %v1852 = vpack.c.bf16 %v1785, %v1784
    %v1853 = vpack.c.bf16 %v1787, %v1786
    %v1854 = vpack.c.bf16 %v1789, %v1788
    %v1855 = vld [vmem:[%s3] sm:$0xff]
    %v1856 = vld [vmem:[%s3 + $0x8] sm:$0xf]
    %v1857 = vld [vmem:[%s3 + $0xc] sm:$0xff]
    %v1858 = vld [vmem:[%s3 + $0x14] sm:$0xf]
    %v1859 = vld [vmem:[%s3 + $0x18] sm:$0xff]
    %v1860 = vld [vmem:[%s3 + $0x20] sm:$0xf]
    %v1861 = vld [vmem:[%s3 + $0x24] sm:$0xff]
    %v1862 = vld [vmem:[%s3 + $0x2c] sm:$0xf]
    %v1863 = vld [vmem:[%s3 + $0x30] sm:$0xff]
    %v1864 = vld [vmem:[%s3 + $0x38] sm:$0xf]
    %v1865 = vld [vmem:[%s3 + $0x3c] sm:$0xff]
    %v1866 = vld [vmem:[%s3 + $0x44] sm:$0xf]
    %v1867 = vld [vmem:[%s3 + $0x48] sm:$0xff]
    %v1868 = vld [vmem:[%s3 + $0x50] sm:$0xf]
    %v1869 = vld [vmem:[%s3 + $0x54] sm:$0xff]
    %v1870 = vld [vmem:[%s3 + $0x5c] sm:$0xf]
    %v1871 = vld [vmem:[%s3 + $0x60] sm:$0xff]
    %v1872 = vld [vmem:[%s3 + $0x68] sm:$0xf]
    %v1873 = vld [vmem:[%s3 + $0x6c] sm:$0xff]
    %v1874 = vld [vmem:[%s3 + $0x74] sm:$0xf]
    %v1875 = vld [vmem:[%s3 + $0x78] sm:$0xff]
    %v1876 = vld [vmem:[%s3 + $0x80] sm:$0xf]
    %v1877 = vld [vmem:[%s3 + $0x84] sm:$0xff]
    %v1878 = vld [vmem:[%s3 + $0x8c] sm:$0xf]
    %v1879 = vld [vmem:[%s3 + $0x90] sm:$0xff]
    %v1880 = vld [vmem:[%s3 + $0x98] sm:$0xf]
    %v1881 = vld [vmem:[%s3 + $0x9c] sm:$0xff]
    %v1882 = vld [vmem:[%s3 + $0xa4] sm:$0xf]
    %v1883 = vld [vmem:[%s3 + $0xa8] sm:$0xff]
    %v1884 = vld [vmem:[%s3 + $0xb0] sm:$0xf]
    %v1885 = vld [vmem:[%s3 + $0xb4] sm:$0xff]
    %v1886 = vld [vmem:[%s3 + $0xbc] sm:$0xf]
    %v1888 = vperm.slane %v1790, 0
    %v1889 = vperm.slane %v1790, 1
    %v1890 = vperm.slane %v1790, 2
    %v1958 = vunpack.c.l.b16 %v1791
    %v1959 = vunpack.c.h.b16 %v1791
    %v1960 = vunpack.c.l.b16 %v1792
    %v1961 = vunpack.c.h.b16 %v1792
    %v1962 = vunpack.c.l.b16 %v1793
    %v1963 = vunpack.c.h.b16 %v1793
    %v1964 = vunpack.c.l.b16 %v1794
    %v1965 = vunpack.c.h.b16 %v1794
    %v1966 = vunpack.c.l.b16 %v1795
    %v1967 = vunpack.c.h.b16 %v1795
    %v1968 = vunpack.c.l.b16 %v1796
    %v1969 = vunpack.c.h.b16 %v1796
    %v1970 = vunpack.c.l.b16 %v1797
    %v1971 = vunpack.c.h.b16 %v1797
    %v1972 = vunpack.c.l.b16 %v1798
    %v1973 = vunpack.c.h.b16 %v1798
    %v1974 = vunpack.c.l.b16 %v1799
    %v1975 = vunpack.c.h.b16 %v1799
    %v1976 = vunpack.c.l.b16 %v1800
    %v1977 = vunpack.c.h.b16 %v1800
    %v1978 = vunpack.c.l.b16 %v1801
    %v1979 = vunpack.c.h.b16 %v1801
    %v1980 = vunpack.c.l.b16 %v1802
    %v1981 = vunpack.c.h.b16 %v1802
    %v1982 = vunpack.c.l.b16 %v1803
    %v1983 = vunpack.c.h.b16 %v1803
    %v1984 = vunpack.c.l.b16 %v1804
    %v1985 = vunpack.c.h.b16 %v1804
    %v1986 = vunpack.c.l.b16 %v1805
    %v1987 = vunpack.c.h.b16 %v1805
    %v1988 = vunpack.c.l.b16 %v1806
    %v1989 = vunpack.c.h.b16 %v1806
    %v1990 = vunpack.c.l.b16 %v1807
    %v1991 = vunpack.c.h.b16 %v1807
    %v1992 = vunpack.c.l.b16 %v1808
    %v1993 = vunpack.c.h.b16 %v1808
    %v1994 = vunpack.c.l.b16 %v1809
    %v1995 = vunpack.c.h.b16 %v1809
    %v1996 = vunpack.c.l.b16 %v1810
    %v1997 = vunpack.c.h.b16 %v1810
    %v1998 = vunpack.c.l.b16 %v1811
    %v1999 = vunpack.c.h.b16 %v1811
    %v2000 = vunpack.c.l.b16 %v1812
    %v2001 = vunpack.c.h.b16 %v1812
    %v2002 = vunpack.c.l.b16 %v1813
    %v2003 = vunpack.c.h.b16 %v1813
    %v2004 = vunpack.c.l.b16 %v1814
    %v2005 = vunpack.c.h.b16 %v1814
    %v2006 = vunpack.c.l.b16 %v1815
    %v2007 = vunpack.c.h.b16 %v1815
    %v2008 = vunpack.c.l.b16 %v1816
    %v2009 = vunpack.c.h.b16 %v1816
    %v2010 = vunpack.c.l.b16 %v1817
    %v2011 = vunpack.c.h.b16 %v1817
    %v2012 = vunpack.c.l.b16 %v1818
    %v2013 = vunpack.c.h.b16 %v1818
    %v2014 = vunpack.c.l.b16 %v1819
    %v2015 = vunpack.c.h.b16 %v1819
    %v2016 = vunpack.c.l.b16 %v1820
    %v2017 = vunpack.c.h.b16 %v1820
    %v2018 = vunpack.c.l.b16 %v1821
    %v2019 = vunpack.c.h.b16 %v1821
    %v2020 = vunpack.c.l.b16 %v1822
    %v2021 = vunpack.c.h.b16 %v1822
    %v2022 = vunpack.c.l.b16 %v1823
    %v2023 = vunpack.c.h.b16 %v1823
    %v2024 = vunpack.c.l.b16 %v1824
    %v2025 = vunpack.c.h.b16 %v1824
    %v2026 = vunpack.c.l.b16 %v1825
    %v2027 = vunpack.c.h.b16 %v1825
    %v2028 = vunpack.c.l.b16 %v1826
    %v2029 = vunpack.c.h.b16 %v1826
    %v2030 = vunpack.c.l.b16 %v1827
    %v2031 = vunpack.c.h.b16 %v1827
    %v2032 = vunpack.c.l.b16 %v1828
    %v2033 = vunpack.c.h.b16 %v1828
    %v2034 = vunpack.c.l.b16 %v1829
    %v2035 = vunpack.c.h.b16 %v1829
    %v2036 = vunpack.c.l.b16 %v1830
    %v2037 = vunpack.c.h.b16 %v1830
    %v2038 = vunpack.c.l.b16 %v1831
    %v2039 = vunpack.c.h.b16 %v1831
    %v2040 = vunpack.c.l.b16 %v1832
    %v2041 = vunpack.c.h.b16 %v1832
    %v2042 = vunpack.c.l.b16 %v1833
    %v2043 = vunpack.c.h.b16 %v1833
    %v2044 = vunpack.c.l.b16 %v1834
    %v2045 = vunpack.c.h.b16 %v1834
    %v2046 = vunpack.c.l.b16 %v1835
    %v2047 = vunpack.c.h.b16 %v1835
    %v2048 = vunpack.c.l.b16 %v1836
    %v2049 = vunpack.c.h.b16 %v1836
    %v2050 = vunpack.c.l.b16 %v1837
    %v2051 = vunpack.c.h.b16 %v1837
    %v2052 = vunpack.c.l.b16 %v1838
    %v2053 = vunpack.c.h.b16 %v1838
    %v2054 = vunpack.c.l.b16 %v1839
    %v2055 = vunpack.c.h.b16 %v1839
    %v2056 = vunpack.c.l.b16 %v1840
    %v2057 = vunpack.c.h.b16 %v1840
    %v2058 = vunpack.c.l.b16 %v1841
    %v2059 = vunpack.c.h.b16 %v1841
    %v2060 = vunpack.c.l.b16 %v1842
    %v2061 = vunpack.c.h.b16 %v1842
    %v2062 = vunpack.c.l.b16 %v1843
    %v2063 = vunpack.c.h.b16 %v1843
    %v2064 = vunpack.c.l.b16 %v1844
    %v2065 = vunpack.c.h.b16 %v1844
    %v2066 = vunpack.c.l.b16 %v1845
    %v2067 = vunpack.c.h.b16 %v1845
    %v2068 = vunpack.c.l.b16 %v1846
    %v2069 = vunpack.c.h.b16 %v1846
    %v2070 = vunpack.c.l.b16 %v1847
    %v2071 = vunpack.c.h.b16 %v1847
    %v2072 = vunpack.c.l.b16 %v1848
    %v2073 = vunpack.c.h.b16 %v1848
    %v2074 = vunpack.c.l.b16 %v1849
    %v2075 = vunpack.c.h.b16 %v1849
    %v2076 = vunpack.c.l.b16 %v1850
    %v2077 = vunpack.c.h.b16 %v1850
    %v2078 = vunpack.c.l.b16 %v1851
    %v2079 = vunpack.c.h.b16 %v1851
    %v2080 = vunpack.c.l.b16 %v1852
    %v2081 = vunpack.c.h.b16 %v1852
    %v2082 = vunpack.c.l.b16 %v1853
    %v2083 = vunpack.c.h.b16 %v1853
    %v2084 = vunpack.c.l.b16 %v1854
    %v2085 = vunpack.c.h.b16 %v1854
    %2086 = vset.pattern.permute.xlu0 0
    %2087 = vperm.xlu0 %2086, %v1958
    %v2088 = vpop.permute.xlu0 %2087
    %2089 = vset.pattern.permute.xlu0 0
    %2090 = vperm.xlu0 %2089, %v1959
    %v2091 = vpop.permute.xlu0 %2090
    %2092 = vset.pattern.permute.xlu0 0
    %2093 = vperm.xlu0 %2092, %v1960
    %v2094 = vpop.permute.xlu0 %2093
    %2095 = vset.pattern.permute.xlu0 0
    %2096 = vperm.xlu0 %2095, %v1961
    %v2097 = vpop.permute.xlu0 %2096
    %2098 = vset.pattern.permute.xlu0 0
    %2099 = vperm.xlu0 %2098, %v1962
    %v2100 = vpop.permute.xlu0 %2099
    %2101 = vset.pattern.permute.xlu0 0
    %2102 = vperm.xlu0 %2101, %v1963
    %v2103 = vpop.permute.xlu0 %2102
    %2104 = vset.pattern.permute.xlu0 0
    %2105 = vperm.xlu0 %2104, %v1964
    %v2106 = vpop.permute.xlu0 %2105
    %2107 = vset.pattern.permute.xlu0 0
    %2108 = vperm.xlu0 %2107, %v1965
    %v2109 = vpop.permute.xlu0 %2108
    %2110 = vset.pattern.permute.xlu0 0
    %2111 = vperm.xlu0 %2110, %v1966
    %v2112 = vpop.permute.xlu0 %2111
    %2113 = vset.pattern.permute.xlu0 0
    %2114 = vperm.xlu0 %2113, %v1967
    %v2115 = vpop.permute.xlu0 %2114
    %2116 = vset.pattern.permute.xlu0 0
    %2117 = vperm.xlu0 %2116, %v1968
    %v2118 = vpop.permute.xlu0 %2117
    %2119 = vset.pattern.permute.xlu0 0
    %2120 = vperm.xlu0 %2119, %v1969
    %v2121 = vpop.permute.xlu0 %2120
    %2122 = vset.pattern.permute.xlu0 0
    %2123 = vperm.xlu0 %2122, %v1970
    %v2124 = vpop.permute.xlu0 %2123
    %2125 = vset.pattern.permute.xlu0 0
    %2126 = vperm.xlu0 %2125, %v1971
    %v2127 = vpop.permute.xlu0 %2126
    %2128 = vset.pattern.permute.xlu0 0
    %2129 = vperm.xlu0 %2128, %v1972
    %v2130 = vpop.permute.xlu0 %2129
    %2131 = vset.pattern.permute.xlu0 0
    %2132 = vperm.xlu0 %2131, %v1973
    %v2133 = vpop.permute.xlu0 %2132
    %2134 = vset.pattern.permute.xlu0 0
    %2135 = vperm.xlu0 %2134, %v1974
    %v2136 = vpop.permute.xlu0 %2135
    %2137 = vset.pattern.permute.xlu0 0
    %2138 = vperm.xlu0 %2137, %v1975
    %v2139 = vpop.permute.xlu0 %2138
    %2140 = vset.pattern.permute.xlu0 0
    %2141 = vperm.xlu0 %2140, %v1976
    %v2142 = vpop.permute.xlu0 %2141
    %2143 = vset.pattern.permute.xlu0 0
    %2144 = vperm.xlu0 %2143, %v1977
    %v2145 = vpop.permute.xlu0 %2144
    %2146 = vset.pattern.permute.xlu0 0
    %2147 = vperm.xlu0 %2146, %v1978
    %v2148 = vpop.permute.xlu0 %2147
    %2149 = vset.pattern.permute.xlu0 0
    %2150 = vperm.xlu0 %2149, %v1979
    %v2151 = vpop.permute.xlu0 %2150
    %2152 = vset.pattern.permute.xlu0 0
    %2153 = vperm.xlu0 %2152, %v1980
    %v2154 = vpop.permute.xlu0 %2153
    %2155 = vset.pattern.permute.xlu0 0
    %2156 = vperm.xlu0 %2155, %v1981
    %v2157 = vpop.permute.xlu0 %2156
    %2158 = vset.pattern.permute.xlu0 0
    %2159 = vperm.xlu0 %2158, %v1982
    %v2160 = vpop.permute.xlu0 %2159
    %2161 = vset.pattern.permute.xlu0 0
    %2162 = vperm.xlu0 %2161, %v1983
    %v2163 = vpop.permute.xlu0 %2162
    %2164 = vset.pattern.permute.xlu0 0
    %2165 = vperm.xlu0 %2164, %v1984
    %v2166 = vpop.permute.xlu0 %2165
    %2167 = vset.pattern.permute.xlu0 0
    %2168 = vperm.xlu0 %2167, %v1985
    %v2169 = vpop.permute.xlu0 %2168
    %2170 = vset.pattern.permute.xlu0 0
    %2171 = vperm.xlu0 %2170, %v1986
    %v2172 = vpop.permute.xlu0 %2171
    %2173 = vset.pattern.permute.xlu0 0
    %2174 = vperm.xlu0 %2173, %v1987
    %v2175 = vpop.permute.xlu0 %2174
    %2176 = vset.pattern.permute.xlu0 0
    %2177 = vperm.xlu0 %2176, %v1988
    %v2178 = vpop.permute.xlu0 %2177
    %2179 = vset.pattern.permute.xlu0 0
    %2180 = vperm.xlu0 %2179, %v1989
    %v2181 = vpop.permute.xlu0 %2180
    %2182 = vset.pattern.permute.xlu0 0
    %2183 = vperm.xlu0 %2182, %v1990
    %v2184 = vpop.permute.xlu0 %2183
    %2185 = vset.pattern.permute.xlu0 0
    %2186 = vperm.xlu0 %2185, %v1991
    %v2187 = vpop.permute.xlu0 %2186
    %2188 = vset.pattern.permute.xlu0 0
    %2189 = vperm.xlu0 %2188, %v1992
    %v2190 = vpop.permute.xlu0 %2189
    %2191 = vset.pattern.permute.xlu0 0
    %2192 = vperm.xlu0 %2191, %v1993
    %v2193 = vpop.permute.xlu0 %2192
    %2194 = vset.pattern.permute.xlu0 0
    %2195 = vperm.xlu0 %2194, %v1994
    %v2196 = vpop.permute.xlu0 %2195
    %2197 = vset.pattern.permute.xlu0 0
    %2198 = vperm.xlu0 %2197, %v1995
    %v2199 = vpop.permute.xlu0 %2198
    %2200 = vset.pattern.permute.xlu0 0
    %2201 = vperm.xlu0 %2200, %v1996
    %v2202 = vpop.permute.xlu0 %2201
    %2203 = vset.pattern.permute.xlu0 0
    %2204 = vperm.xlu0 %2203, %v1997
    %v2205 = vpop.permute.xlu0 %2204
    %2206 = vset.pattern.permute.xlu0 0
    %2207 = vperm.xlu0 %2206, %v1998
    %v2208 = vpop.permute.xlu0 %2207
    %2209 = vset.pattern.permute.xlu0 0
    %2210 = vperm.xlu0 %2209, %v1999
    %v2211 = vpop.permute.xlu0 %2210
    %2212 = vset.pattern.permute.xlu0 0
    %2213 = vperm.xlu0 %2212, %v2000
    %v2214 = vpop.permute.xlu0 %2213
    %2215 = vset.pattern.permute.xlu0 0
    %2216 = vperm.xlu0 %2215, %v2001
    %v2217 = vpop.permute.xlu0 %2216
    %2218 = vset.pattern.permute.xlu0 0
    %2219 = vperm.xlu0 %2218, %v2002
    %v2220 = vpop.permute.xlu0 %2219
    %2221 = vset.pattern.permute.xlu0 0
    %2222 = vperm.xlu0 %2221, %v2003
    %v2223 = vpop.permute.xlu0 %2222
    %2224 = vset.pattern.permute.xlu0 0
    %2225 = vperm.xlu0 %2224, %v2004
    %v2226 = vpop.permute.xlu0 %2225
    %2227 = vset.pattern.permute.xlu0 0
    %2228 = vperm.xlu0 %2227, %v2005
    %v2229 = vpop.permute.xlu0 %2228
    %2230 = vset.pattern.permute.xlu0 0
    %2231 = vperm.xlu0 %2230, %v2006
    %v2232 = vpop.permute.xlu0 %2231
    %2233 = vset.pattern.permute.xlu0 0
    %2234 = vperm.xlu0 %2233, %v2007
    %v2235 = vpop.permute.xlu0 %2234
    %2236 = vset.pattern.permute.xlu0 0
    %2237 = vperm.xlu0 %2236, %v2008
    %v2238 = vpop.permute.xlu0 %2237
    %2239 = vset.pattern.permute.xlu0 0
    %2240 = vperm.xlu0 %2239, %v2009
    %v2241 = vpop.permute.xlu0 %2240
    %2242 = vset.pattern.permute.xlu0 0
    %2243 = vperm.xlu0 %2242, %v2010
    %v2244 = vpop.permute.xlu0 %2243
    %2245 = vset.pattern.permute.xlu0 0
    %2246 = vperm.xlu0 %2245, %v2011
    %v2247 = vpop.permute.xlu0 %2246
    %2248 = vset.pattern.permute.xlu0 0
    %2249 = vperm.xlu0 %2248, %v2012
    %v2250 = vpop.permute.xlu0 %2249
    %2251 = vset.pattern.permute.xlu0 0
    %2252 = vperm.xlu0 %2251, %v2013
    %v2253 = vpop.permute.xlu0 %2252
    %2254 = vset.pattern.permute.xlu0 0
    %2255 = vperm.xlu0 %2254, %v2014
    %v2256 = vpop.permute.xlu0 %2255
    %2257 = vset.pattern.permute.xlu0 0
    %2258 = vperm.xlu0 %2257, %v2015
    %v2259 = vpop.permute.xlu0 %2258
    %2260 = vset.pattern.permute.xlu0 0
    %2261 = vperm.xlu0 %2260, %v2016
    %v2262 = vpop.permute.xlu0 %2261
    %2263 = vset.pattern.permute.xlu0 0
    %2264 = vperm.xlu0 %2263, %v2017
    %v2265 = vpop.permute.xlu0 %2264
    %2266 = vset.pattern.permute.xlu0 0
    %2267 = vperm.xlu0 %2266, %v2018
    %v2268 = vpop.permute.xlu0 %2267
    %2269 = vset.pattern.permute.xlu0 0
    %2270 = vperm.xlu0 %2269, %v2019
    %v2271 = vpop.permute.xlu0 %2270
    %2272 = vset.pattern.permute.xlu0 0
    %2273 = vperm.xlu0 %2272, %v2020
    %v2274 = vpop.permute.xlu0 %2273
    %2275 = vset.pattern.permute.xlu0 0
    %2276 = vperm.xlu0 %2275, %v2021
    %v2277 = vpop.permute.xlu0 %2276
    %2278 = vset.pattern.permute.xlu0 0
    %2279 = vperm.xlu0 %2278, %v2022
    %v2280 = vpop.permute.xlu0 %2279
    %2281 = vset.pattern.permute.xlu0 0
    %2282 = vperm.xlu0 %2281, %v2023
    %v2283 = vpop.permute.xlu0 %2282
    %2284 = vset.pattern.permute.xlu0 0
    %2285 = vperm.xlu0 %2284, %v2024
    %v2286 = vpop.permute.xlu0 %2285
    %2287 = vset.pattern.permute.xlu0 0
    %2288 = vperm.xlu0 %2287, %v2025
    %v2289 = vpop.permute.xlu0 %2288
    %2290 = vset.pattern.permute.xlu0 0
    %2291 = vperm.xlu0 %2290, %v2026
    %v2292 = vpop.permute.xlu0 %2291
    %2293 = vset.pattern.permute.xlu0 0
    %2294 = vperm.xlu0 %2293, %v2027
    %v2295 = vpop.permute.xlu0 %2294
    %2296 = vset.pattern.permute.xlu0 0
    %2297 = vperm.xlu0 %2296, %v2028
    %v2298 = vpop.permute.xlu0 %2297
    %2299 = vset.pattern.permute.xlu0 0
    %2300 = vperm.xlu0 %2299, %v2029
    %v2301 = vpop.permute.xlu0 %2300
    %2302 = vset.pattern.permute.xlu0 0
    %2303 = vperm.xlu0 %2302, %v2030
    %v2304 = vpop.permute.xlu0 %2303
    %2305 = vset.pattern.permute.xlu0 0
    %2306 = vperm.xlu0 %2305, %v2031
    %v2307 = vpop.permute.xlu0 %2306
    %2308 = vset.pattern.permute.xlu0 0
    %2309 = vperm.xlu0 %2308, %v2032
    %v2310 = vpop.permute.xlu0 %2309
    %2311 = vset.pattern.permute.xlu0 0
    %2312 = vperm.xlu0 %2311, %v2033
    %v2313 = vpop.permute.xlu0 %2312
    %2314 = vset.pattern.permute.xlu0 0
    %2315 = vperm.xlu0 %2314, %v2034
    %v2316 = vpop.permute.xlu0 %2315
    %2317 = vset.pattern.permute.xlu0 0
    %2318 = vperm.xlu0 %2317, %v2035
    %v2319 = vpop.permute.xlu0 %2318
    %2320 = vset.pattern.permute.xlu0 0
    %2321 = vperm.xlu0 %2320, %v2036
    %v2322 = vpop.permute.xlu0 %2321
    %2323 = vset.pattern.permute.xlu0 0
    %2324 = vperm.xlu0 %2323, %v2037
    %v2325 = vpop.permute.xlu0 %2324
    %2326 = vset.pattern.permute.xlu0 0
    %2327 = vperm.xlu0 %2326, %v2038
    %v2328 = vpop.permute.xlu0 %2327
    %2329 = vset.pattern.permute.xlu0 0
    %2330 = vperm.xlu0 %2329, %v2039
    %v2331 = vpop.permute.xlu0 %2330
    %2332 = vset.pattern.permute.xlu0 0
    %2333 = vperm.xlu0 %2332, %v2040
    %v2334 = vpop.permute.xlu0 %2333
    %2335 = vset.pattern.permute.xlu0 0
    %2336 = vperm.xlu0 %2335, %v2041
    %v2337 = vpop.permute.xlu0 %2336
    %2338 = vset.pattern.permute.xlu0 0
    %2339 = vperm.xlu0 %2338, %v2042
    %v2340 = vpop.permute.xlu0 %2339
    %2341 = vset.pattern.permute.xlu0 0
    %2342 = vperm.xlu0 %2341, %v2043
    %v2343 = vpop.permute.xlu0 %2342
    %2344 = vset.pattern.permute.xlu0 0
    %2345 = vperm.xlu0 %2344, %v2044
    %v2346 = vpop.permute.xlu0 %2345
    %2347 = vset.pattern.permute.xlu0 0
    %2348 = vperm.xlu0 %2347, %v2045
    %v2349 = vpop.permute.xlu0 %2348
    %2350 = vset.pattern.permute.xlu0 0
    %2351 = vperm.xlu0 %2350, %v2046
    %v2352 = vpop.permute.xlu0 %2351
    %2353 = vset.pattern.permute.xlu0 0
    %2354 = vperm.xlu0 %2353, %v2047
    %v2355 = vpop.permute.xlu0 %2354
    %2356 = vset.pattern.permute.xlu0 0
    %2357 = vperm.xlu0 %2356, %v2048
    %v2358 = vpop.permute.xlu0 %2357
    %2359 = vset.pattern.permute.xlu0 0
    %2360 = vperm.xlu0 %2359, %v2049
    %v2361 = vpop.permute.xlu0 %2360
    %2362 = vset.pattern.permute.xlu0 0
    %2363 = vperm.xlu0 %2362, %v2050
    %v2364 = vpop.permute.xlu0 %2363
    %2365 = vset.pattern.permute.xlu0 0
    %2366 = vperm.xlu0 %2365, %v2051
    %v2367 = vpop.permute.xlu0 %2366
    %2368 = vset.pattern.permute.xlu0 0
    %2369 = vperm.xlu0 %2368, %v2052
    %v2370 = vpop.permute.xlu0 %2369
    %2371 = vset.pattern.permute.xlu0 0
    %2372 = vperm.xlu0 %2371, %v2053
    %v2373 = vpop.permute.xlu0 %2372
    %2374 = vset.pattern.permute.xlu0 0
    %2375 = vperm.xlu0 %2374, %v2054
    %v2376 = vpop.permute.xlu0 %2375
    %2377 = vset.pattern.permute.xlu0 0
    %2378 = vperm.xlu0 %2377, %v2055
    %v2379 = vpop.permute.xlu0 %2378
    %2380 = vset.pattern.permute.xlu0 0
    %2381 = vperm.xlu0 %2380, %v2056
    %v2382 = vpop.permute.xlu0 %2381
    %2383 = vset.pattern.permute.xlu0 0
    %2384 = vperm.xlu0 %2383, %v2057
    %v2385 = vpop.permute.xlu0 %2384
    %2386 = vset.pattern.permute.xlu0 0
    %2387 = vperm.xlu0 %2386, %v2058
    %v2388 = vpop.permute.xlu0 %2387
    %2389 = vset.pattern.permute.xlu0 0
    %2390 = vperm.xlu0 %2389, %v2059
    %v2391 = vpop.permute.xlu0 %2390
    %2392 = vset.pattern.permute.xlu0 0
    %2393 = vperm.xlu0 %2392, %v2060
    %v2394 = vpop.permute.xlu0 %2393
    %2395 = vset.pattern.permute.xlu0 0
    %2396 = vperm.xlu0 %2395, %v2061
    %v2397 = vpop.permute.xlu0 %2396
    %2398 = vset.pattern.permute.xlu0 0
    %2399 = vperm.xlu0 %2398, %v2062
    %v2400 = vpop.permute.xlu0 %2399
    %2401 = vset.pattern.permute.xlu0 0
    %2402 = vperm.xlu0 %2401, %v2063
    %v2403 = vpop.permute.xlu0 %2402
    %2404 = vset.pattern.permute.xlu0 0
    %2405 = vperm.xlu0 %2404, %v2064
    %v2406 = vpop.permute.xlu0 %2405
    %2407 = vset.pattern.permute.xlu0 0
    %2408 = vperm.xlu0 %2407, %v2065
    %v2409 = vpop.permute.xlu0 %2408
    %2410 = vset.pattern.permute.xlu0 0
    %2411 = vperm.xlu0 %2410, %v2066
    %v2412 = vpop.permute.xlu0 %2411
    %2413 = vset.pattern.permute.xlu0 0
    %2414 = vperm.xlu0 %2413, %v2067
    %v2415 = vpop.permute.xlu0 %2414
    %2416 = vset.pattern.permute.xlu0 0
    %2417 = vperm.xlu0 %2416, %v2068
    %v2418 = vpop.permute.xlu0 %2417
    %2419 = vset.pattern.permute.xlu0 0
    %2420 = vperm.xlu0 %2419, %v2069
    %v2421 = vpop.permute.xlu0 %2420
    %2422 = vset.pattern.permute.xlu0 0
    %2423 = vperm.xlu0 %2422, %v2070
    %v2424 = vpop.permute.xlu0 %2423
    %2425 = vset.pattern.permute.xlu0 0
    %2426 = vperm.xlu0 %2425, %v2071
    %v2427 = vpop.permute.xlu0 %2426
    %2428 = vset.pattern.permute.xlu0 0
    %2429 = vperm.xlu0 %2428, %v2072
    %v2430 = vpop.permute.xlu0 %2429
    %2431 = vset.pattern.permute.xlu0 0
    %2432 = vperm.xlu0 %2431, %v2073
    %v2433 = vpop.permute.xlu0 %2432
    %2434 = vset.pattern.permute.xlu0 0
    %2435 = vperm.xlu0 %2434, %v2074
    %v2436 = vpop.permute.xlu0 %2435
    %2437 = vset.pattern.permute.xlu0 0
    %2438 = vperm.xlu0 %2437, %v2075
    %v2439 = vpop.permute.xlu0 %2438
    %2440 = vset.pattern.permute.xlu0 0
    %2441 = vperm.xlu0 %2440, %v2076
    %v2442 = vpop.permute.xlu0 %2441
    %2443 = vset.pattern.permute.xlu0 0
    %2444 = vperm.xlu0 %2443, %v2077
    %v2445 = vpop.permute.xlu0 %2444
    %2446 = vset.pattern.permute.xlu0 0
    %2447 = vperm.xlu0 %2446, %v2078
    %v2448 = vpop.permute.xlu0 %2447
    %2449 = vset.pattern.permute.xlu0 0
    %2450 = vperm.xlu0 %2449, %v2079
    %v2451 = vpop.permute.xlu0 %2450
    %2452 = vset.pattern.permute.xlu0 0
    %2453 = vperm.xlu0 %2452, %v2080
    %v2454 = vpop.permute.xlu0 %2453
    %2455 = vset.pattern.permute.xlu0 0
    %2456 = vperm.xlu0 %2455, %v2081
    %v2457 = vpop.permute.xlu0 %2456
    %2458 = vset.pattern.permute.xlu0 0
    %2459 = vperm.xlu0 %2458, %v2082
    %v2460 = vpop.permute.xlu0 %2459
    %2461 = vset.pattern.permute.xlu0 0
    %2462 = vperm.xlu0 %2461, %v2083
    %v2463 = vpop.permute.xlu0 %2462
    %2464 = vset.pattern.permute.xlu0 0
    %2465 = vperm.xlu0 %2464, %v2084
    %v2466 = vpop.permute.xlu0 %2465
    %2467 = vset.pattern.permute.xlu0 0
    %2468 = vperm.xlu0 %2467, %v2085
    %v2469 = vpop.permute.xlu0 %2468
    %v2470 = vlaneseq
    %v2471 = vand.u32 %v2470, 127
    %v2472 = vperm.slane %v2088, %v2471
    %v2473 = vadd.s32 %v2471, 4294967288
    %v2474 = vperm.slane %v2091, %v2473
    %vm2475 = vcmask 130112
    %v2476 = vsel %vm2475, %v2474, %v2472
    %v2477 = vadd.s32 %v2471, 4294967280
    %v2478 = vperm.slane %v2094, %v2477
    %vm2479 = vcmask 195712
    %v2480 = vsel %vm2479, %v2478, %v2476
    %v2481 = vadd.s32 %v2471, 4294967272
    %v2482 = vperm.slane %v2097, %v2481
    %vm2483 = vcmask 261312
    %v2484 = vsel %vm2483, %v2482, %v2480
    %v2485 = vadd.s32 %v2471, 4294967264
    %v2486 = vperm.slane %v2100, %v2485
    %vm2487 = vcmask 326912
    %v2488 = vsel %vm2487, %v2486, %v2484
    %v2489 = vadd.s32 %v2471, 4294967256
    %v2490 = vperm.slane %v2103, %v2489
    %vm2491 = vcmask 392512
    %v2492 = vsel %vm2491, %v2490, %v2488
    %v2493 = vadd.s32 %v2471, 4294967248
    %v2494 = vperm.slane %v2106, %v2493
    %vm2495 = vcmask 458112
    %v2496 = vsel %vm2495, %v2494, %v2492
    %v2497 = vadd.s32 %v2471, 4294967240
    %v2498 = vperm.slane %v2109, %v2497
    %vm2499 = vcmask 523712
    %v2500 = vsel %vm2499, %v2498, %v2496
    %v2501 = vadd.s32 %v2471, 4294967232
    %v2502 = vperm.slane %v2112, %v2501
    %vm2503 = vcmask 589312
    %v2504 = vsel %vm2503, %v2502, %v2500
    %v2505 = vadd.s32 %v2471, 4294967224
    %v2506 = vperm.slane %v2115, %v2505
    %vm2507 = vcmask 654912
    %v2508 = vsel %vm2507, %v2506, %v2504
    %v2509 = vadd.s32 %v2471, 4294967216
    %v2510 = vperm.slane %v2118, %v2509
    %vm2511 = vcmask 720512
    %v2512 = vsel %vm2511, %v2510, %v2508
    %v2513 = vadd.s32 %v2471, 4294967208
    %v2514 = vperm.slane %v2121, %v2513
    %vm2515 = vcmask 786112
    %v2516 = vsel %vm2515, %v2514, %v2512
    %v2517 = vadd.s32 %v2471, 4294967200
    %v2518 = vperm.slane %v2124, %v2517
    %vm2519 = vcmask 851712
    %v2520 = vsel %vm2519, %v2518, %v2516
    %v2521 = vadd.s32 %v2471, 4294967192
    %v2522 = vperm.slane %v2127, %v2521
    %vm2523 = vcmask 917312
    %v2524 = vsel %vm2523, %v2522, %v2520
    %v2525 = vadd.s32 %v2471, 4294967184
    %v2526 = vperm.slane %v2130, %v2525
    %vm2527 = vcmask 982912
    %v2528 = vsel %vm2527, %v2526, %v2524
    %v2529 = vadd.s32 %v2471, 4294967176
    %v2530 = vperm.slane %v2133, %v2529
    %vm2531 = vcmask 1048512
    %v2532 = vsel %vm2531, %v2530, %v2528
    %v2533 = vperm.slane %v2136, %v2471
    %v2534 = vperm.slane %v2139, %v2473
    %v2535 = vsel %vm2475, %v2534, %v2533
    %v2536 = vperm.slane %v2142, %v2477
    %v2537 = vsel %vm2479, %v2536, %v2535
    %v2538 = vperm.slane %v2145, %v2481
    %v2539 = vsel %vm2483, %v2538, %v2537
    %v2540 = vperm.slane %v2148, %v2485
    %v2541 = vsel %vm2487, %v2540, %v2539
    %v2542 = vperm.slane %v2151, %v2489
    %v2543 = vsel %vm2491, %v2542, %v2541
    %v2544 = vperm.slane %v2154, %v2493
    %v2545 = vsel %vm2495, %v2544, %v2543
    %v2546 = vperm.slane %v2157, %v2497
    %v2547 = vsel %vm2499, %v2546, %v2545
    %v2548 = vperm.slane %v2160, %v2501
    %v2549 = vsel %vm2503, %v2548, %v2547
    %v2550 = vperm.slane %v2163, %v2505
    %v2551 = vsel %vm2507, %v2550, %v2549
    %v2552 = vperm.slane %v2166, %v2509
    %v2553 = vsel %vm2511, %v2552, %v2551
    %v2554 = vperm.slane %v2169, %v2513
    %v2555 = vsel %vm2515, %v2554, %v2553
    %v2556 = vperm.slane %v2172, %v2517
    %v2557 = vsel %vm2519, %v2556, %v2555
    %v2558 = vperm.slane %v2175, %v2521
    %v2559 = vsel %vm2523, %v2558, %v2557
    %v2560 = vperm.slane %v2178, %v2525
    %v2561 = vsel %vm2527, %v2560, %v2559
    %v2562 = vperm.slane %v2181, %v2529
    %v2563 = vsel %vm2531, %v2562, %v2561
    %v2564 = vperm.slane %v2184, %v2471
    %v2565 = vperm.slane %v2187, %v2473
    %v2566 = vsel %vm2475, %v2565, %v2564
    %v2567 = vperm.slane %v2190, %v2477
    %v2568 = vsel %vm2479, %v2567, %v2566
    %v2569 = vperm.slane %v2193, %v2481
    %v2570 = vsel %vm2483, %v2569, %v2568
    %v2571 = vperm.slane %v2196, %v2485
    %v2572 = vsel %vm2487, %v2571, %v2570
    %v2573 = vperm.slane %v2199, %v2489
    %v2574 = vsel %vm2491, %v2573, %v2572
    %v2575 = vperm.slane %v2202, %v2493
    %v2576 = vsel %vm2495, %v2575, %v2574
    %v2577 = vperm.slane %v2205, %v2497
    %v2578 = vsel %vm2499, %v2577, %v2576
    %v2579 = vperm.slane %v2208, %v2501
    %v2580 = vsel %vm2503, %v2579, %v2578
    %v2581 = vperm.slane %v2211, %v2505
    %v2582 = vsel %vm2507, %v2581, %v2580
    %v2583 = vperm.slane %v2214, %v2509
    %v2584 = vsel %vm2511, %v2583, %v2582
    %v2585 = vperm.slane %v2217, %v2513
    %v2586 = vsel %vm2515, %v2585, %v2584
    %v2587 = vperm.slane %v2220, %v2517
    %v2588 = vsel %vm2519, %v2587, %v2586
    %v2589 = vperm.slane %v2223, %v2521
    %v2590 = vsel %vm2523, %v2589, %v2588
    %v2591 = vperm.slane %v2226, %v2525
    %v2592 = vsel %vm2527, %v2591, %v2590
    %v2593 = vperm.slane %v2229, %v2529
    %v2594 = vsel %vm2531, %v2593, %v2592
    %v2595 = vperm.slane %v2232, %v2471
    %v2596 = vperm.slane %v2235, %v2473
    %v2597 = vsel %vm2475, %v2596, %v2595
    %v2598 = vperm.slane %v2238, %v2477
    %v2599 = vsel %vm2479, %v2598, %v2597
    %v2600 = vperm.slane %v2241, %v2481
    %v2601 = vsel %vm2483, %v2600, %v2599
    %v2602 = vperm.slane %v2244, %v2485
    %v2603 = vsel %vm2487, %v2602, %v2601
    %v2604 = vperm.slane %v2247, %v2489
    %v2605 = vsel %vm2491, %v2604, %v2603
    %v2606 = vperm.slane %v2250, %v2493
    %v2607 = vsel %vm2495, %v2606, %v2605
    %v2608 = vperm.slane %v2253, %v2497
    %v2609 = vsel %vm2499, %v2608, %v2607
    %v2610 = vperm.slane %v2256, %v2501
    %v2611 = vsel %vm2503, %v2610, %v2609
    %v2612 = vperm.slane %v2259, %v2505
    %v2613 = vsel %vm2507, %v2612, %v2611
    %v2614 = vperm.slane %v2262, %v2509
    %v2615 = vsel %vm2511, %v2614, %v2613
    %v2616 = vperm.slane %v2265, %v2513
    %v2617 = vsel %vm2515, %v2616, %v2615
    %v2618 = vperm.slane %v2268, %v2517
    %v2619 = vsel %vm2519, %v2618, %v2617
    %v2620 = vperm.slane %v2271, %v2521
    %v2621 = vsel %vm2523, %v2620, %v2619
    %v2622 = vperm.slane %v2274, %v2525
    %v2623 = vsel %vm2527, %v2622, %v2621
    %v2624 = vperm.slane %v2277, %v2529
    %v2625 = vsel %vm2531, %v2624, %v2623
    %v2626 = vperm.slane %v2280, %v2471
    %v2627 = vperm.slane %v2283, %v2473
    %v2628 = vsel %vm2475, %v2627, %v2626
    %v2629 = vperm.slane %v2286, %v2477
    %v2630 = vsel %vm2479, %v2629, %v2628
    %v2631 = vperm.slane %v2289, %v2481
    %v2632 = vsel %vm2483, %v2631, %v2630
    %v2633 = vperm.slane %v2292, %v2485
    %v2634 = vsel %vm2487, %v2633, %v2632
    %v2635 = vperm.slane %v2295, %v2489
    %v2636 = vsel %vm2491, %v2635, %v2634
    %v2637 = vperm.slane %v2298, %v2493
    %v2638 = vsel %vm2495, %v2637, %v2636
    %v2639 = vperm.slane %v2301, %v2497
    %v2640 = vsel %vm2499, %v2639, %v2638
    %v2641 = vperm.slane %v2304, %v2501
    %v2642 = vsel %vm2503, %v2641, %v2640
    %v2643 = vperm.slane %v2307, %v2505
    %v2644 = vsel %vm2507, %v2643, %v2642
    %v2645 = vperm.slane %v2310, %v2509
    %v2646 = vsel %vm2511, %v2645, %v2644
    %v2647 = vperm.slane %v2313, %v2513
    %v2648 = vsel %vm2515, %v2647, %v2646
    %v2649 = vperm.slane %v2316, %v2517
    %v2650 = vsel %vm2519, %v2649, %v2648
    %v2651 = vperm.slane %v2319, %v2521
    %v2652 = vsel %vm2523, %v2651, %v2650
    %v2653 = vperm.slane %v2322, %v2525
    %v2654 = vsel %vm2527, %v2653, %v2652
    %v2655 = vperm.slane %v2325, %v2529
    %v2656 = vsel %vm2531, %v2655, %v2654
    %v2657 = vperm.slane %v2328, %v2471
    %v2658 = vperm.slane %v2331, %v2473
    %v2659 = vsel %vm2475, %v2658, %v2657
    %v2660 = vperm.slane %v2334, %v2477
    %v2661 = vsel %vm2479, %v2660, %v2659
    %v2662 = vperm.slane %v2337, %v2481
    %v2663 = vsel %vm2483, %v2662, %v2661
    %v2664 = vperm.slane %v2340, %v2485
    %v2665 = vsel %vm2487, %v2664, %v2663
    %v2666 = vperm.slane %v2343, %v2489
    %v2667 = vsel %vm2491, %v2666, %v2665
    %v2668 = vperm.slane %v2346, %v2493
    %v2669 = vsel %vm2495, %v2668, %v2667
    %v2670 = vperm.slane %v2349, %v2497
    %v2671 = vsel %vm2499, %v2670, %v2669
    %v2672 = vperm.slane %v2352, %v2501
    %v2673 = vsel %vm2503, %v2672, %v2671
    %v2674 = vperm.slane %v2355, %v2505
    %v2675 = vsel %vm2507, %v2674, %v2673
    %v2676 = vperm.slane %v2358, %v2509
    %v2677 = vsel %vm2511, %v2676, %v2675
    %v2678 = vperm.slane %v2361, %v2513
    %v2679 = vsel %vm2515, %v2678, %v2677
    %v2680 = vperm.slane %v2364, %v2517
    %v2681 = vsel %vm2519, %v2680, %v2679
    %v2682 = vperm.slane %v2367, %v2521
    %v2683 = vsel %vm2523, %v2682, %v2681
    %v2684 = vperm.slane %v2370, %v2525
    %v2685 = vsel %vm2527, %v2684, %v2683
    %v2686 = vperm.slane %v2373, %v2529
    %v2687 = vsel %vm2531, %v2686, %v2685
    %v2688 = vperm.slane %v2376, %v2471
    %v2689 = vperm.slane %v2379, %v2473
    %v2690 = vsel %vm2475, %v2689, %v2688
    %v2691 = vperm.slane %v2382, %v2477
    %v2692 = vsel %vm2479, %v2691, %v2690
    %v2693 = vperm.slane %v2385, %v2481
    %v2694 = vsel %vm2483, %v2693, %v2692
    %v2695 = vperm.slane %v2388, %v2485
    %v2696 = vsel %vm2487, %v2695, %v2694
    %v2697 = vperm.slane %v2391, %v2489
    %v2698 = vsel %vm2491, %v2697, %v2696
    %v2699 = vperm.slane %v2394, %v2493
    %v2700 = vsel %vm2495, %v2699, %v2698
    %v2701 = vperm.slane %v2397, %v2497
    %v2702 = vsel %vm2499, %v2701, %v2700
    %v2703 = vperm.slane %v2400, %v2501
    %v2704 = vsel %vm2503, %v2703, %v2702
    %v2705 = vperm.slane %v2403, %v2505
    %v2706 = vsel %vm2507, %v2705, %v2704
    %v2707 = vperm.slane %v2406, %v2509
    %v2708 = vsel %vm2511, %v2707, %v2706
    %v2709 = vperm.slane %v2409, %v2513
    %v2710 = vsel %vm2515, %v2709, %v2708
    %v2711 = vperm.slane %v2412, %v2517
    %v2712 = vsel %vm2519, %v2711, %v2710
    %v2713 = vperm.slane %v2415, %v2521
    %v2714 = vsel %vm2523, %v2713, %v2712
    %v2715 = vperm.slane %v2418, %v2525
    %v2716 = vsel %vm2527, %v2715, %v2714
    %v2717 = vperm.slane %v2421, %v2529
    %v2718 = vsel %vm2531, %v2717, %v2716
    %v2719 = vperm.slane %v2424, %v2471
    %v2720 = vperm.slane %v2427, %v2473
    %v2721 = vsel %vm2475, %v2720, %v2719
    %v2722 = vperm.slane %v2430, %v2477
    %v2723 = vsel %vm2479, %v2722, %v2721
    %v2724 = vperm.slane %v2433, %v2481
    %v2725 = vsel %vm2483, %v2724, %v2723
    %v2726 = vperm.slane %v2436, %v2485
    %v2727 = vsel %vm2487, %v2726, %v2725
    %v2728 = vperm.slane %v2439, %v2489
    %v2729 = vsel %vm2491, %v2728, %v2727
    %v2730 = vperm.slane %v2442, %v2493
    %v2731 = vsel %vm2495, %v2730, %v2729
    %v2732 = vperm.slane %v2445, %v2497
    %v2733 = vsel %vm2499, %v2732, %v2731
    %v2734 = vperm.slane %v2448, %v2501
    %v2735 = vsel %vm2503, %v2734, %v2733
    %v2736 = vperm.slane %v2451, %v2505
    %v2737 = vsel %vm2507, %v2736, %v2735
    %v2738 = vperm.slane %v2454, %v2509
    %v2739 = vsel %vm2511, %v2738, %v2737
    %v2740 = vperm.slane %v2457, %v2513
    %v2741 = vsel %vm2515, %v2740, %v2739
    %v2742 = vperm.slane %v2460, %v2517
    %v2743 = vsel %vm2519, %v2742, %v2741
    %v2744 = vperm.slane %v2463, %v2521
    %v2745 = vsel %vm2523, %v2744, %v2743
    %v2746 = vperm.slane %v2466, %v2525
    %v2747 = vsel %vm2527, %v2746, %v2745
    %v2748 = vperm.slane %v2469, %v2529
    %v2749 = vsel %vm2531, %v2748, %v2747
    %vm2750 = vcmask 1041409
    %v2751 = vsel %vm2750, %v2563, %v2532
    %vm2752 = vcmask 1042434
    %v2753 = vsel %vm2752, %v2594, %v2751
    %vm2754 = vcmask 1043459
    %v2755 = vsel %vm2754, %v2625, %v2753
    %vm2756 = vcmask 1044484
    %v2757 = vsel %vm2756, %v2656, %v2755
    %vm2758 = vcmask 1045509
    %v2759 = vsel %vm2758, %v2687, %v2757
    %vm2760 = vcmask 1046534
    %v2761 = vsel %vm2760, %v2718, %v2759
    %vm2762 = vcmask 1047559
    %v2763 = vsel %vm2762, %v2749, %v2761
    %v2764 = vpack.c.b16 %v2763, %v2763
    %v2798 = vunpack.c.l.b16 %v1855
    %v2799 = vunpack.c.h.b16 %v1855
    %v2800 = vunpack.c.l.b16 %v1856
    %v2801 = vunpack.c.l.b16 %v1857
    %v2802 = vunpack.c.h.b16 %v1857
    %v2803 = vunpack.c.l.b16 %v1858
    %v2804 = vunpack.c.l.b16 %v1859
    %v2805 = vunpack.c.h.b16 %v1859
    %v2806 = vunpack.c.l.b16 %v1860
    %v2807 = vunpack.c.l.b16 %v1861
    %v2808 = vunpack.c.h.b16 %v1861
    %v2809 = vunpack.c.l.b16 %v1862
    %v2810 = vunpack.c.l.b16 %v1863
    %v2811 = vunpack.c.h.b16 %v1863
    %v2812 = vunpack.c.l.b16 %v1864
    %v2813 = vunpack.c.l.b16 %v1865
    %v2814 = vunpack.c.h.b16 %v1865
    %v2815 = vunpack.c.l.b16 %v1866
    %v2816 = vunpack.c.l.b16 %v1867
    %v2817 = vunpack.c.h.b16 %v1867
    %v2818 = vunpack.c.l.b16 %v1868
    %v2819 = vunpack.c.l.b16 %v1869
    %v2820 = vunpack.c.h.b16 %v1869
    %v2821 = vunpack.c.l.b16 %v1870
    %v2822 = vunpack.c.l.b16 %v1871
    %v2823 = vunpack.c.h.b16 %v1871
    %v2824 = vunpack.c.l.b16 %v1872
    %v2825 = vunpack.c.l.b16 %v1873
    %v2826 = vunpack.c.h.b16 %v1873
    %v2827 = vunpack.c.l.b16 %v1874
    %v2828 = vunpack.c.l.b16 %v1875
    %v2829 = vunpack.c.h.b16 %v1875
    %v2830 = vunpack.c.l.b16 %v1876
    %v2831 = vunpack.c.l.b16 %v1877
    %v2832 = vunpack.c.h.b16 %v1877
    %v2833 = vunpack.c.l.b16 %v1878
    %v2834 = vunpack.c.l.b16 %v1879
    %v2835 = vunpack.c.h.b16 %v1879
    %v2836 = vunpack.c.l.b16 %v1880
    %v2837 = vunpack.c.l.b16 %v1881
    %v2838 = vunpack.c.h.b16 %v1881
    %v2839 = vunpack.c.l.b16 %v1882
    %v2840 = vunpack.c.l.b16 %v1883
    %v2841 = vunpack.c.h.b16 %v1883
    %v2842 = vunpack.c.l.b16 %v1884
    %v2843 = vunpack.c.l.b16 %v1885
    %v2844 = vunpack.c.h.b16 %v1885
    %v2845 = vunpack.c.l.b16 %v1886
    %v2846 = vpack.c.b16 %v2801, %v2798
    %v2847 = vpack.c.b16 %v2802, %v2799
    %v2848 = vpack.c.b16 %v2803, %v2800
    %v2849 = vpack.c.b16 %v2807, %v2804
    %v2850 = vpack.c.b16 %v2808, %v2805
    %v2851 = vpack.c.b16 %v2809, %v2806
    %v2852 = vpack.c.b16 %v2813, %v2810
    %v2853 = vpack.c.b16 %v2814, %v2811
    %v2854 = vpack.c.b16 %v2815, %v2812
    %v2855 = vpack.c.b16 %v2819, %v2816
    %v2856 = vpack.c.b16 %v2820, %v2817
    %v2857 = vpack.c.b16 %v2821, %v2818
    %v2858 = vpack.c.b16 %v2825, %v2822
    %v2859 = vpack.c.b16 %v2826, %v2823
    %v2860 = vpack.c.b16 %v2827, %v2824
    %v2861 = vpack.c.b16 %v2831, %v2828
    %v2862 = vpack.c.b16 %v2832, %v2829
    %v2863 = vpack.c.b16 %v2833, %v2830
    %v2864 = vpack.c.b16 %v2837, %v2834
    %v2865 = vpack.c.b16 %v2838, %v2835
    %v2866 = vpack.c.b16 %v2839, %v2836
    %v2867 = vpack.c.b16 %v2843, %v2840
    %v2868 = vpack.c.b16 %v2844, %v2841
    %v2869 = vpack.c.b16 %v2845, %v2842
    %2894 = vmatpush.bf16.msra.mxu0 %v2867
    %2895 = vmatpush.bf16.msra.mxu0 %v2864
    %2896 = vmatpush.bf16.msra.mxu0 %v2861
    %2897 = vmatpush.bf16.msra.mxu0 %v2858
    %2898 = vmatpush.bf16.msra.mxu0 %v2855
    %2899 = vmatpush.bf16.msra.mxu0 %v2852
    %2900 = vmatpush.bf16.msra.mxu0 %v2849
    %2901 = vmatpush.bf16.msra.mxu0 %v2846
    %2902 = vmatmul.bf16.gmra.mxu0 %v2764
    %v2903 = vpop.f32.mrf.mxu0
    %v2904 = vadd.f32 %v1888, %v2903
    %v2905 = vpop.f32.mrf.mxu0
    %2906 = vdwg.mxu0
    %2907 = vmatpush.bf16.msra.mxu0 %v2868
    %2908 = vmatpush.bf16.msra.mxu0 %v2865
    %2909 = vmatpush.bf16.msra.mxu0 %v2862
    %2910 = vmatpush.bf16.msra.mxu0 %v2859
    %2911 = vmatpush.bf16.msra.mxu0 %v2856
    %2912 = vmatpush.bf16.msra.mxu0 %v2853
    %2913 = vmatpush.bf16.msra.mxu0 %v2850
    %2914 = vmatpush.bf16.msra.mxu0 %v2847
    %2915 = vmatmul.bf16.gmra.mxu0 %v2764
    %v2916 = vpop.f32.mrf.mxu0
    %v2917 = vadd.f32 %v1889, %v2916
    %v2918 = vpop.f32.mrf.mxu0
    %2919 = vdwg.mxu0
    %2920 = vmatpush.bf16.msra.mxu0 %v2869
    %2921 = vmatpush.bf16.msra.mxu0 %v2866
    %2922 = vmatpush.bf16.msra.mxu0 %v2863
    %2923 = vmatpush.bf16.msra.mxu0 %v2860
    %2924 = vmatpush.bf16.msra.mxu0 %v2857
    %2925 = vmatpush.bf16.msra.mxu0 %v2854
    %2926 = vmatpush.bf16.msra.mxu0 %v2851
    %2927 = vmatpush.bf16.msra.mxu0 %v2848
    %2928 = vmatmul.bf16.gmra.mxu0 %v2764
    %v2929 = vpop.f32.mrf.mxu0
    %v2930 = vadd.f32 %v1890, %v2929
    %v2931 = vpop.f32.mrf.mxu0
    %2932 = vdwg.mxu0
    %vm2933 = vcmp.ge.f32.partialorder %v2917, 0.0
    %v2934 = vmul.f32 %v2917, 0.01
    %v2935 = vsel %vm2933, %v2917, %v2934
    %v2936 = vpack.c.bf16 %v2935, %v2935
    %v2937 = vld [vmem:[%s4] sm:$0xff]
    %v2938 = vld [vmem:[%s4 + $0x8] sm:$0xff]
    %v2939 = vld [vmem:[%s4 + $0x10] sm:$0xff]
    %v2940 = vld [vmem:[%s4 + $0x18] sm:$0xff]
    %v2941 = vld [vmem:[%s4 + $0x20] sm:$0xff]
    %v2942 = vld [vmem:[%s4 + $0x28] sm:$0xff]
    %v2943 = vld [vmem:[%s4 + $0x30] sm:$0xff]
    %v2944 = vld [vmem:[%s4 + $0x38] sm:$0xff]
    %v2953 = vunpack.c.l.b16 %v2937
    %v2954 = vunpack.c.h.b16 %v2937
    %v2955 = vunpack.c.l.b16 %v2938
    %v2956 = vunpack.c.h.b16 %v2938
    %v2957 = vunpack.c.l.b16 %v2939
    %v2958 = vunpack.c.h.b16 %v2939
    %v2959 = vunpack.c.l.b16 %v2940
    %v2960 = vunpack.c.h.b16 %v2940
    %v2961 = vunpack.c.l.b16 %v2941
    %v2962 = vunpack.c.h.b16 %v2941
    %v2963 = vunpack.c.l.b16 %v2942
    %v2964 = vunpack.c.h.b16 %v2942
    %v2965 = vunpack.c.l.b16 %v2943
    %v2966 = vunpack.c.h.b16 %v2943
    %v2967 = vunpack.c.l.b16 %v2944
    %v2968 = vunpack.c.h.b16 %v2944
    %v2969 = vpack.c.b16 %v2955, %v2953
    %v2970 = vpack.c.b16 %v2956, %v2954
    %v2971 = vpack.c.b16 %v2959, %v2957
    %v2972 = vpack.c.b16 %v2960, %v2958
    %v2973 = vpack.c.b16 %v2963, %v2961
    %v2974 = vpack.c.b16 %v2964, %v2962
    %v2975 = vpack.c.b16 %v2967, %v2965
    %v2976 = vpack.c.b16 %v2968, %v2966
    %vm2985 = vcmask 523264
    %v2987 = vsel %vm2985, %v2936, 0
    %2989 = vmatpush.bf16.msra.mxu0 0
    %2990 = vmatpush.bf16.msra.mxu0 0
    %2991 = vmatpush.bf16.msra.mxu0 0
    %2992 = vmatpush.bf16.msra.mxu0 0
    %2993 = vmatpush.bf16.msra.mxu0 %v2975
    %2994 = vmatpush.bf16.msra.mxu0 %v2973
    %2995 = vmatpush.bf16.msra.mxu0 %v2971
    %2996 = vmatpush.bf16.msra.mxu0 %v2969
    %2997 = vmatmul.bf16.gmra.mxu0 %v2987
    %v2998 = vpop.f32.mrf.mxu0
    %v2999 = vadd.f32 0.0, %v2998
    %v3000 = vpop.f32.mrf.mxu0
    %3001 = vdwg.mxu0
    %3002 = vmatpush.bf16.msra.mxu0 0
    %3003 = vmatpush.bf16.msra.mxu0 0
    %3004 = vmatpush.bf16.msra.mxu0 0
    %3005 = vmatpush.bf16.msra.mxu0 0
    %3006 = vmatpush.bf16.msra.mxu0 %v2976
    %3007 = vmatpush.bf16.msra.mxu0 %v2974
    %3008 = vmatpush.bf16.msra.mxu0 %v2972
    %3009 = vmatpush.bf16.msra.mxu0 %v2970
    %3010 = vmatmul.bf16.gmra.mxu0 %v2987
    %v3011 = vpop.f32.mrf.mxu0
    %v3012 = vadd.f32 0.0, %v3011
    %v3013 = vpop.f32.mrf.mxu0
    %3014 = vdwg.mxu0
    %3016 = vrot.lane.b32.xlu0 %v3012, 64
    %v3017 = vpop.permute.xlu0 %3016
    %v3019 = vadd.f32 %v2917, %v3017
    %vm3020 = vcmp.ge.f32.partialorder %v3019, 0.0
    %v3021 = vmul.f32 %v3019, 0.01
    %v3022 = vsel %vm3020, %v3019, %v3021
    %v3023 = vpack.c.bf16 %v3022, %v3022
    %v3024 = vld [vmem:[%s5] sm:$0xff]
    %v3025 = vld [vmem:[%s5 + $0x8] sm:$0xff]
    %v3026 = vld [vmem:[%s5 + $0x10] sm:$0xff]
    %v3027 = vld [vmem:[%s5 + $0x18] sm:$0xff]
    %v3028 = vld [vmem:[%s5 + $0x20] sm:$0xff]
    %v3029 = vld [vmem:[%s5 + $0x28] sm:$0xff]
    %v3030 = vld [vmem:[%s5 + $0x30] sm:$0xff]
    %v3031 = vld [vmem:[%s5 + $0x38] sm:$0xff]
    %3033 = vrot.lane.b32.xlu0 %v3023, 64
    %v3034 = vpop.permute.xlu0 %3033
    %v3043 = vunpack.c.l.b16 %v3024
    %v3044 = vunpack.c.h.b16 %v3024
    %v3045 = vunpack.c.l.b16 %v3025
    %v3046 = vunpack.c.h.b16 %v3025
    %v3047 = vunpack.c.l.b16 %v3026
    %v3048 = vunpack.c.h.b16 %v3026
    %v3049 = vunpack.c.l.b16 %v3027
    %v3050 = vunpack.c.h.b16 %v3027
    %v3051 = vunpack.c.l.b16 %v3028
    %v3052 = vunpack.c.h.b16 %v3028
    %v3053 = vunpack.c.l.b16 %v3029
    %v3054 = vunpack.c.h.b16 %v3029
    %v3055 = vunpack.c.l.b16 %v3030
    %v3056 = vunpack.c.h.b16 %v3030
    %v3057 = vunpack.c.l.b16 %v3031
    %v3058 = vunpack.c.h.b16 %v3031
    %v3059 = vpack.c.b16 %v3045, %v3043
    %v3060 = vpack.c.b16 %v3046, %v3044
    %v3061 = vpack.c.b16 %v3049, %v3047
    %v3062 = vpack.c.b16 %v3050, %v3048
    %v3063 = vpack.c.b16 %v3053, %v3051
    %v3064 = vpack.c.b16 %v3054, %v3052
    %v3065 = vpack.c.b16 %v3057, %v3055
    %v3066 = vpack.c.b16 %v3058, %v3056
    %v3076 = vsel %vm2985, %v3034, 0
    %3078 = vmatpush.bf16.msra.mxu0 0
    %3079 = vmatpush.bf16.msra.mxu0 0
    %3080 = vmatpush.bf16.msra.mxu0 0
    %3081 = vmatpush.bf16.msra.mxu0 0
    %3082 = vmatpush.bf16.msra.mxu0 %v3065
    %3083 = vmatpush.bf16.msra.mxu0 %v3063
    %3084 = vmatpush.bf16.msra.mxu0 %v3061
    %3085 = vmatpush.bf16.msra.mxu0 %v3059
    %3086 = vmatmul.bf16.gmra.mxu0 %v3076
    %v3087 = vpop.f32.mrf.mxu0
    %v3088 = vadd.f32 0.0, %v3087
    %v3089 = vpop.f32.mrf.mxu0
    %3090 = vdwg.mxu0
    %3091 = vmatpush.bf16.msra.mxu0 0
    %3092 = vmatpush.bf16.msra.mxu0 0
    %3093 = vmatpush.bf16.msra.mxu0 0
    %3094 = vmatpush.bf16.msra.mxu0 0
    %3095 = vmatpush.bf16.msra.mxu0 %v3066
    %3096 = vmatpush.bf16.msra.mxu0 %v3064
    %3097 = vmatpush.bf16.msra.mxu0 %v3062
    %3098 = vmatpush.bf16.msra.mxu0 %v3060
    %3099 = vmatmul.bf16.gmra.mxu0 %v3076
    %v3100 = vpop.f32.mrf.mxu0
    %v3101 = vadd.f32 0.0, %v3100
    %v3102 = vpop.f32.mrf.mxu0
    %3103 = vdwg.mxu0
    %v3104 = vadd.f32 %v2930, %v3017
    %v3105 = vadd.f32 %v3104, %v3101
    %vm3106 = vcmp.ge.f32.partialorder %v3105, 0.0
    %v3107 = vmul.f32 %v3105, 0.01
    %v3108 = vsel %vm3106, %v3105, %v3107
    %v3109 = vpack.c.bf16 %v3108, %v3108
    %v3110 = vld [vmem:[%s6] sm:$0xf]
    %v3111 = vld [vmem:[%s6 + $0x4] sm:$0xf]
    %v3112 = vld [vmem:[%s6 + $0x8] sm:$0xf]
    %v3113 = vld [vmem:[%s6 + $0xc] sm:$0xf]
    %v3114 = vld [vmem:[%s6 + $0x10] sm:$0xf]
    %v3115 = vld [vmem:[%s6 + $0x14] sm:$0xf]
    %v3116 = vld [vmem:[%s6 + $0x18] sm:$0xf]
    %v3117 = vld [vmem:[%s6 + $0x1c] sm:$0xf]
    %v3126 = vunpack.c.l.b16 %v3110
    %v3127 = vunpack.c.l.b16 %v3111
    %v3128 = vunpack.c.l.b16 %v3112
    %v3129 = vunpack.c.l.b16 %v3113
    %v3130 = vunpack.c.l.b16 %v3114
    %v3131 = vunpack.c.l.b16 %v3115
    %v3132 = vunpack.c.l.b16 %v3116
    %v3133 = vunpack.c.l.b16 %v3117
    %v3134 = vpack.c.b16 %v3127, %v3126
    %v3135 = vpack.c.b16 %v3129, %v3128
    %v3136 = vpack.c.b16 %v3131, %v3130
    %v3137 = vpack.c.b16 %v3133, %v3132
    %v3143 = vsel %vm2985, %v3109, 0
    %3145 = vmatpush.bf16.msra.mxu0 0
    %3146 = vmatpush.bf16.msra.mxu0 0
    %3147 = vmatpush.bf16.msra.mxu0 0
    %3148 = vmatpush.bf16.msra.mxu0 0
    %3149 = vmatpush.bf16.msra.mxu0 %v3137
    %3150 = vmatpush.bf16.msra.mxu0 %v3136
    %3151 = vmatpush.bf16.msra.mxu0 %v3135
    %3152 = vmatpush.bf16.msra.mxu0 %v3134
    %3153 = vmatmul.bf16.gmra.mxu0 %v3143
    %v3154 = vpop.f32.mrf.mxu0
    %v3155 = vadd.f32 0.0, %v3154
    %v3156 = vpop.f32.mrf.mxu0
    %3157 = vdwg.mxu0
    %v3158 = vadd.f32 %v2904, %v2999
    %v3159 = vadd.f32 %v3158, %v3088
    %v3160 = vadd.f32 %v3159, %v3155
    %3161 = vmax.xlane.f32.xlu0 %v3160
    %v3162 = vpop.xlane.xlu0 %3161
    %v3163 = vsub.f32 %v3160, %v3162
    %v3164 = vmul.f32 %v3163, 1.442695
    %v3165 = vpow.pop %v3164
    %3166 = vadd.xlane.f32.xlu0 %v3165
    %v3167 = vpop.xlane.xlu0 %3166
    %v3168 = vrcp.pop %v3167
    %v3169 = vmul.f32 %v3165, %v3168
    %3170 = vst [vmem:[#allocation2] sm:$0xff] %v3169
    // Predicated region
    $region34: #{tpu_custom_call.1} parent=1 // pred_check
      _
    $region35: #{tpu_custom_call.1} parent=1 // pred_check_branch
      %3172 = sbr.rel (0) target = $region37
    $region36: #{tpu_custom_call.1} parent=1 // pred_region
      %3174 = vsyncadd [#allocation3], 0
      %s3176 = sshll.u32 [#allocation2], 4
      %s3177 = int_to_ptr.vmem [resolvable:$true] %s3176
      %s3178 = sshll.u32 %s8, 4
      %s3179 = int_to_ptr.hbm [resolvable:$true] %s3178
      %3181 = dma.vmem_to_hbm [thread:$0]  %s3177, 128, %s3179, [#allocation3]
    $region37: #{tpu_custom_call.1} parent=1 // pred_fallthru
      _
    // Predicated region
    $region38: #{tpu_custom_call.1} parent=1 // pred_check
      _
    $region39: #{tpu_custom_call.1} parent=1 // pred_check_branch
      %3183 = sbr.rel (0) target = $region41
    $region40: #{tpu_custom_call.1} parent=1 // pred_region
      %3185 = dma.done [#allocation3], 128
    $region41: #{tpu_custom_call.1} parent=1 // pred_fallthru
      _
    %3186 = vsyncpa [#allocation3], 1

</llo_original>
